<compile_context>
chip_gen: v6e
topology: v6e:2x2x1
jax: 0.10.0
libtpu: 0.0.40
codegen_flags: <defaults>
</compile_context>

<pallas_src>
import jax
import jax.numpy as jnp
import numpy as np
from jax import lax
from jax.experimental import pallas as pl
from jax.experimental.pallas import tpu as pltpu


# Aligned (multiple-of-8 sublane) left offset of the conv1 result inside the
# conv2 zero-padding scratch: keeps the interior store tile-aligned while still
# leaving >= 1 zero column on each side for the 3x3 padding=1 window.
_HPAD_LEFT = 8


def _deconv_mm_kernel(x_ref, w_ref, b_ref, o_ref):
    """ConvTranspose2d(k=2, s=2) hot path: one MXU matmul per image.

    x_ref: (1, Hin*Win, Cin)   w_ref: (Cin, 4*Cd)   b_ref: (1, 4*Cd)
    o_ref: (1, Hin*Win, 4*Cd)  column block kh*2+kw holds the (kh, kw) sub-pixel tap
    """
    o_ref[0] = (
        jnp.dot(x_ref[0], w_ref[...], preferred_element_type=jnp.float32)
        + b_ref[...]
    ).astype(o_ref.dtype)


def _dual_conv_kernel(ypad_ref, w1_ref, b1_ref, w2_ref, b2_ref, o_ref,
                      p1_ref, hpad_ref, p2_ref):
    """Fused seq: conv1(3x3,s1,p1) -> conv2(3x3,s1,p1); intermediate stays in VMEM.

    Per grid step (one batch image, channels-last, channels on the lane axis):
      ypad_ref : (1, H+2, W+2, Ct)    zero-padded conv1 input
      w1_ref   : (9*Ct, Cm)           taps packed along K (kh*3+kw major, channel minor)
      w2_ref   : (9*Cm, Co)           b*_ref: (1, C)
      o_ref    : (1, H*W, Co)
      p1_ref   : (H*W, 9*Ct)  VMEM    im2col patches for conv1 (built in-kernel)
      hpad_ref : (H+2, W+16, Cm) VMEM conv1 output with zero border (conv2 input)
      p2_ref   : (H*W, 9*Cm)  VMEM    im2col patches for conv2
    """
    H = ypad_ref.shape[1] - 2
    W = ypad_ref.shape[2] - 2
    Ct = ypad_ref.shape[3]
    Cm = w1_ref.shape[1]
    M = H * W
    L = _HPAD_LEFT

    # conv1: 9 shifted static-sliced views of the VMEM-resident padded input,
    # packed on the lane axis -> ONE K=9*Ct MXU matmul (no HBM im2col, no
    # per-tap accumulate adds).
    for k in range(9):                                       # static unroll (3x3 taps)
        kh, kw = k // 3, k % 3
        v = ypad_ref[0, kh:kh + H, kw:kw + W, :]             # (H, W, Ct)
        p1_ref[:, k * Ct:(k + 1) * Ct] = v.reshape(M, Ct)    # aligned sublane collapse
    h = jnp.dot(p1_ref[...], w1_ref[...], preferred_element_type=jnp.float32)
    h = h + b1_ref[...]
    # act_func_name defaults to None in DecoderBlock -> no activation / norm here.

    # Keep the intermediate entirely in VMEM (no HBM round trip between convs).
    # Zero the scratch every step so grid steps stay independent ("parallel"-safe),
    # then drop the conv1 result into the tile-aligned interior window.
    hpad_ref[...] = jnp.zeros_like(hpad_ref)
    hpad_ref[1:1 + H, L:L + W, :] = h.reshape(H, W, Cm)

    # conv2: same single-matmul scheme, reading its 9 views from the scratch.
    for k in range(9):
        kh, kw = k // 3, k % 3
        v = hpad_ref[kh:kh + H, (L - 1) + kw:(L - 1) + kw + W, :]   # (H, W, Cm)
        p2_ref[:, k * Cm:(k + 1) * Cm] = v.reshape(M, Cm)
    out = jnp.dot(p2_ref[...], w2_ref[...], preferred_element_type=jnp.float32)
    out = out + b2_ref[...]
    # NOTE: with Co=8 the (M, Co) store is lane-masked; a transposed lane-dense
    # (Co, M) store would need an in-kernel relayout that costs about what it
    # saves at this size -- worth revisiting only at real channel counts.
    o_ref[0] = out.astype(o_ref.dtype)


def decoder_block_forward(x_nchw, params, skip_cat=None, skip_add=None):
    """DecoderBlock.forward (act/norm = None): deconv -> [cat] -> [add] -> conv1 -> conv2."""
    N, Ci, Hin, Win = x_nchw.shape
    wd, bd = params["wd"], params["bd"]                    # (Ci, Cd, 2, 2), (Cd,)
    assert wd.shape[0] == Ci
    Cd = wd.shape[1]
    Hup, Wup = 2 * Hin, 2 * Win

    # ---------------- deconv: ConvTranspose2d(Ci, Cd, k=2, s=2) ----------------
    x_flat = jnp.transpose(x_nchw, (0, 2, 3, 1)).reshape(N, Hin * Win, Ci)
    wd_flat = jnp.transpose(wd, (0, 2, 3, 1)).reshape(Ci, 4 * Cd)   # tap-major columns
    bd_flat = jnp.tile(bd, 4).reshape(1, 4 * Cd)

    d_flat = pl.pallas_call(
        _deconv_mm_kernel,
        out_shape=jax.ShapeDtypeStruct((N, Hin * Win, 4 * Cd), jnp.float32),
        grid=(N,),
        in_specs=[
            pl.BlockSpec((1, Hin * Win, Ci), lambda n: (n, 0, 0)),
            pl.BlockSpec((Ci, 4 * Cd), lambda n: (0, 0)),
            pl.BlockSpec((1, 4 * Cd), lambda n: (0, 0)),
        ],
        out_specs=pl.BlockSpec((1, Hin * Win, 4 * Cd), lambda n: (n, 0, 0)),
        compiler_params=pltpu.CompilerParams(dimension_semantics=("parallel",)),
    )(x_flat, wd_flat, bd_flat)

    # Sub-pixel interleave (pure layout): (N,Hin,Win,2,2,Cd) -> (N, 2Hin, 2Win, Cd).
    y = d_flat.reshape(N, Hin, Win, 2, 2, Cd)
    y = jnp.transpose(y, (0, 1, 3, 2, 4, 5)).reshape(N, Hup, Wup, Cd)

    # Skip connections: cheap elementwise glue, fuses with the pad below in XLA.
    if skip_cat is not None:
        y = jnp.concatenate([y, jnp.transpose(skip_cat, (0, 2, 3, 1))], axis=-1)
    if skip_add is not None:
        y = y + jnp.transpose(skip_add, (0, 2, 3, 1))

    Ct = y.shape[-1]
    w1, b1, w2, b2 = params["w1"], params["b1"], params["w2"], params["b2"]
    Cm, Co = w1.shape[0], w2.shape[0]
    assert w1.shape[1] == Ct and w2.shape[1] == Cm

    ypad = jnp.pad(y, ((0, 0), (1, 1), (1, 1), (0, 0)))    # conv1 zero padding
    # PyTorch (Cout, Cin, 3, 3) -> (9*Cin, Cout): single K=9*Cin contraction per conv.
    w1_flat = jnp.transpose(w1, (2, 3, 1, 0)).reshape(9 * Ct, Cm)
    w2_flat = jnp.transpose(w2, (2, 3, 1, 0)).reshape(9 * Cm, Co)

    M = Hup * Wup
    out = pl.pallas_call(
        _dual_conv_kernel,
        out_shape=jax.ShapeDtypeStruct((N, M, Co), jnp.float32),
        grid=(N,),
        in_specs=[
            pl.BlockSpec((1, Hup + 2, Wup + 2, Ct), lambda n: (n, 0, 0, 0)),
            # Constant index_map: the tiny weight/bias blocks stay resident in
            # VMEM across grid steps instead of being re-DMAed.
            pl.BlockSpec((9 * Ct, Cm), lambda n: (0, 0)),
            pl.BlockSpec((1, Cm), lambda n: (0, 0)),
            pl.BlockSpec((9 * Cm, Co), lambda n: (0, 0)),
            pl.BlockSpec((1, Co), lambda n: (0, 0)),
        ],
        out_specs=pl.BlockSpec((1, M, Co), lambda n: (n, 0, 0)),
        scratch_shapes=[
            pltpu.VMEM((M, 9 * Ct), jnp.float32),               # conv1 patches
            pltpu.VMEM((Hup + 2, Wup + 16, Cm), jnp.float32),   # padded intermediate
            pltpu.VMEM((M, 9 * Cm), jnp.float32),               # conv2 patches
        ],
        compiler_params=pltpu.CompilerParams(dimension_semantics=("parallel",)),
    )(ypad, w1_flat, b1.reshape(1, Cm), w2_flat, b2.reshape(1, Co))

    out = out.reshape(N, Hup, Wup, Co)
    return jnp.transpose(out, (0, 3, 1, 2))                 # NHWC -> NCHW


def reference_forward(x_nchw, params, skip_cat=None, skip_add=None):
    """Pure-JAX (lax.conv) reference matching PyTorch semantics."""
    dn = ("NCHW", "OIHW", "NCHW")
    wd, bd = params["wd"], params["bd"]
    # ConvTranspose2d(k=2, s=2, p=0) == lhs-dilated conv with flipped, transposed kernel.
    wdf = jnp.transpose(jnp.flip(wd, axis=(2, 3)), (1, 0, 2, 3))
    y = lax.conv_general_dilated(
        x_nchw, wdf, window_strides=(1, 1), padding=((1, 1), (1, 1)),
        lhs_dilation=(2, 2), dimension_numbers=dn,
    ) + bd[None, :, None, None]
    if skip_cat is not None:
        y = jnp.concatenate([y, skip_cat], axis=1)
    if skip_add is not None:
        y = y + skip_add
    h = lax.conv_general_dilated(
        y, params["w1"], window_strides=(1, 1), padding=((1, 1), (1, 1)),
        dimension_numbers=dn,
    ) + params["b1"][None, :, None, None]
    o = lax.conv_general_dilated(
        h, params["w2"], window_strides=(1, 1), padding=((1, 1), (1, 1)),
        dimension_numbers=dn,
    ) + params["b2"][None, :, None, None]
    return o


def init_params(key, in_channel, concat_channel, mid_channel, out_channel):
    ks = jax.random.split(key, 6)
    ci = in_channel + concat_channel
    return {
        # deconv: ConvTranspose2d(mid_channel, out_channel, 2, 2); weight (in, out, kh, kw)
        "wd": 0.1 * jax.random.normal(ks[0], (mid_channel, out_channel, 2, 2), jnp.float32),
        "bd": 0.1 * jax.random.normal(ks[1], (out_channel,), jnp.float32),
        # seq.conv1: Conv2d(in_channel + concat_channel, mid_channel, 3, 1, 1)
        "w1": 0.1 * jax.random.normal(ks[2], (mid_channel, ci, 3, 3), jnp.float32),
        "b1": 0.1 * jax.random.normal(ks[3], (mid_channel,), jnp.float32),
        # seq.conv2: Conv2d(mid_channel, mid_channel, 3, 1, 1)
        "w2": 0.1 * jax.random.normal(ks[4], (mid_channel, mid_channel, 3, 3), jnp.float32),
        "b2": 0.1 * jax.random.normal(ks[5], (mid_channel,), jnp.float32),
    }


if __name__ == "__main__":
    key = jax.random.PRNGKey(0)
    kx, kc, ka, kp = jax.random.split(key, 4)

    # DecoderBlock(in_channel=8, concat_channel=4, mid_channel=8, out_channel=8)
    in_channel, concat_channel, mid_channel, out_channel = 8, 4, 8, 8
    N, Hin, Win = 2, 8, 8
    Hup, Wup = 2 * Hin, 2 * Win

    # forward(input_layer, skip_cat, skip_add): input_layer feeds the deconv, so it
    # carries mid_channel channels; deconv output (out_channel) + skip_cat
    # (concat_channel) == in_channel + concat_channel expected by seq.conv1.
    x = jax.random.normal(kx, (N, mid_channel, Hin, Win), jnp.float32)
    skip_cat = jax.random.normal(kc, (N, concat_channel, Hup, Wup), jnp.float32)
    skip_add = jax.random.normal(
        ka, (N, in_channel + concat_channel, Hup, Wup), jnp.float32)
    params = init_params(kp, in_channel, concat_channel, mid_channel, out_channel)

    fwd = jax.jit(decoder_block_forward)
    out = jax.block_until_ready(fwd(x, params, skip_cat, skip_add))

    ref = jax.block_until_ready(reference_forward(x, params, skip_cat, skip_add))
    np.testing.assert_allclose(np.asarray(out), np.asarray(ref), rtol=2e-4, atol=2e-4)
    assert out.shape == (N, mid_channel, Hup, Wup)
    print("KERNEL_OK")
</pallas_src>

<mosaic_0001>
module attributes {stable_mosaic.version = 11 : i64} {
  func.func @_deconv_mm_kernel(%arg0: i32, %arg1: memref<1x64x8xf32, #tpu.memory_space<vmem>>, %arg2: memref<8x32xf32, #tpu.memory_space<vmem>>, %arg3: memref<1x32xf32, #tpu.memory_space<vmem>>, %arg4: memref<1x64x32xf32, #tpu.memory_space<vmem>>) attributes {dimension_semantics = [#tpu.dimension_semantics<parallel>], iteration_bounds = array<i64: 2>, scalar_prefetch = 0 : i64, scratch_operands = 0 : i64, tpu.core_type = #tpu.core_type<tc>, window_params = [{transform_indices = @transform_0, window_bounds = array<i64: 1, 64, 8>}, {pipeline_mode = #tpu.pipeline_mode<synchronous>, transform_indices = @transform_1, window_bounds = array<i64: 8, 32>}, {pipeline_mode = #tpu.pipeline_mode<synchronous>, transform_indices = @transform_2, window_bounds = array<i64: 1, 32>}, {transform_indices = @transform_3, window_bounds = array<i64: 1, 64, 32>}]} {
    %c0 = arith.constant 0 : index
    %c0_0 = arith.constant 0 : index
    %c0_1 = arith.constant 0 : index
    %0 = vector.load %arg1[%c0, %c0_0, %c0_1] : memref<1x64x8xf32, #tpu.memory_space<vmem>>, vector<1x64x8xf32>
    %1 = vector.shape_cast %0 : vector<1x64x8xf32> to vector<64x8xf32>
    %c0_2 = arith.constant 0 : index
    %c0_3 = arith.constant 0 : index
    %2 = vector.load %arg2[%c0_2, %c0_3] : memref<8x32xf32, #tpu.memory_space<vmem>>, vector<8x32xf32>
    %cst = arith.constant dense<0.000000e+00> : vector<64x32xf32>
    %3 = tpu.matmul %1, %2, %cst {dimension_numbers = #tpu.dot_dimension_numbers<[1], [0], [0], [1], [0, 0, 1, 1], [], []>} : vector<64x8xf32>, vector<8x32xf32>, vector<64x32xf32> -> vector<64x32xf32>
    %c0_4 = arith.constant 0 : index
    %c0_5 = arith.constant 0 : index
    %4 = vector.load %arg3[%c0_4, %c0_5] : memref<1x32xf32, #tpu.memory_space<vmem>>, vector<1x32xf32>
    %5 = vector.broadcast %4 : vector<1x32xf32> to vector<64x32xf32>
    %6 = arith.addf %3, %5 : vector<64x32xf32>
    %c0_6 = arith.constant 0 : index
    %c0_7 = arith.constant 0 : index
    %c0_8 = arith.constant 0 : index
    %7 = vector.load %arg4[%c0_6, %c0_7, %c0_8] : memref<1x64x32xf32, #tpu.memory_space<vmem>>, vector<1x64x32xf32>
    %8 = vector.shape_cast %7 : vector<1x64x32xf32> to vector<64x32xf32>
    %9 = vector.shape_cast %6 : vector<64x32xf32> to vector<1x64x32xf32>
    tpu.vector_store %arg4[%c0_6, %c0_7, %c0_8], %9 {strides = array<i32>} : memref<1x64x32xf32, #tpu.memory_space<vmem>>, vector<1x64x32xf32>,
    return
  }
  func.func @transform_0(%arg0: i32) -> (i32, i32, i32) {
    %c0_i32 = arith.constant 0 : i32
    %c0_i32_0 = arith.constant 0 : i32
    %c0_i32_1 = arith.constant 0 : i32
    return %arg0, %c0_i32, %c0_i32_0 : i32, i32, i32
  }
  func.func @transform_1(%arg0: i32) -> (i32, i32) {
    %c0_i32 = arith.constant 0 : i32
    %c0_i32_0 = arith.constant 0 : i32
    %c0_i32_1 = arith.constant 0 : i32
    return %c0_i32, %c0_i32_0 : i32, i32
  }
  func.func @transform_2(%arg0: i32) -> (i32, i32) {
    %c0_i32 = arith.constant 0 : i32
    %c0_i32_0 = arith.constant 0 : i32
    %c0_i32_1 = arith.constant 0 : i32
    return %c0_i32, %c0_i32_0 : i32, i32
  }
  func.func @transform_3(%arg0: i32) -> (i32, i32, i32) {
    %c0_i32 = arith.constant 0 : i32
    %c0_i32_0 = arith.constant 0 : i32
    %c0_i32_1 = arith.constant 0 : i32
    return %arg0, %c0_i32, %c0_i32_0 : i32, i32, i32
  }
}

module attributes {stable_mosaic.version = 11 : i64} {
  func.func @_dual_conv_kernel(%arg0: i32, %arg1: memref<1x18x18x12xf32, #tpu.memory_space<vmem>>, %arg2: memref<108x8xf32, #tpu.memory_space<vmem>>, %arg3: memref<1x8xf32, #tpu.memory_space<vmem>>, %arg4: memref<72x8xf32, #tpu.memory_space<vmem>>, %arg5: memref<1x8xf32, #tpu.memory_space<vmem>>, %arg6: memref<1x256x8xf32, #tpu.memory_space<vmem>>, %arg7: memref<256x108xf32, #tpu.memory_space<vmem>>, %arg8: memref<18x32x8xf32, #tpu.memory_space<vmem>>, %arg9: memref<256x72xf32, #tpu.memory_space<vmem>>) attributes {dimension_semantics = [#tpu.dimension_semantics<parallel>], iteration_bounds = array<i64: 2>, scalar_prefetch = 0 : i64, scratch_operands = 3 : i64, tpu.core_type = #tpu.core_type<tc>, window_params = [{transform_indices = @transform_0, window_bounds = array<i64: 1, 18, 18, 12>}, {pipeline_mode = #tpu.pipeline_mode<synchronous>, transform_indices = @transform_1, window_bounds = array<i64: 108, 8>}, {pipeline_mode = #tpu.pipeline_mode<synchronous>, transform_indices = @transform_2, window_bounds = array<i64: 1, 8>}, {pipeline_mode = #tpu.pipeline_mode<synchronous>, transform_indices = @transform_3, window_bounds = array<i64: 72, 8>}, {pipeline_mode = #tpu.pipeline_mode<synchronous>, transform_indices = @transform_4, window_bounds = array<i64: 1, 8>}, {transform_indices = @transform_5, window_bounds = array<i64: 1, 256, 8>}]} {
    %c0 = arith.constant 0 : index
    %c0_0 = arith.constant 0 : index
    %c0_1 = arith.constant 0 : index
    %c0_2 = arith.constant 0 : index
    %0 = vector.load %arg1[%c0, %c0_0, %c0_1, %c0_2] : memref<1x18x18x12xf32, #tpu.memory_space<vmem>>, vector<1x16x16x12xf32>
    %1 = vector.shape_cast %0 : vector<1x16x16x12xf32> to vector<16x16x12xf32>
    %2 = vector.shape_cast %1 : vector<16x16x12xf32> to vector<256x12xf32>
    %c0_3 = arith.constant 0 : index
    %c0_4 = arith.constant 0 : index
    %3 = vector.load %arg7[%c0_3, %c0_4] : memref<256x108xf32, #tpu.memory_space<vmem>>, vector<256x12xf32>
    tpu.vector_store %arg7[%c0_3, %c0_4], %2 {strides = array<i32>} : memref<256x108xf32, #tpu.memory_space<vmem>>, vector<256x12xf32>,
    %c0_5 = arith.constant 0 : index
    %c0_6 = arith.constant 0 : index
    %c1 = arith.constant 1 : index
    %c0_7 = arith.constant 0 : index
    %4 = vector.load %arg1[%c0_5, %c0_6, %c1, %c0_7] : memref<1x18x18x12xf32, #tpu.memory_space<vmem>>, vector<1x16x16x12xf32>
    %5 = vector.shape_cast %4 : vector<1x16x16x12xf32> to vector<16x16x12xf32>
    %6 = vector.shape_cast %5 : vector<16x16x12xf32> to vector<256x12xf32>
    %c0_8 = arith.constant 0 : index
    %c12 = arith.constant 12 : index
    %7 = vector.load %arg7[%c0_8, %c12] : memref<256x108xf32, #tpu.memory_space<vmem>>, vector<256x12xf32>
    tpu.vector_store %arg7[%c0_8, %c12], %6 {strides = array<i32>} : memref<256x108xf32, #tpu.memory_space<vmem>>, vector<256x12xf32>,
    %c0_9 = arith.constant 0 : index
    %c0_10 = arith.constant 0 : index
    %c2 = arith.constant 2 : index
    %c0_11 = arith.constant 0 : index
    %8 = vector.load %arg1[%c0_9, %c0_10, %c2, %c0_11] : memref<1x18x18x12xf32, #tpu.memory_space<vmem>>, vector<1x16x16x12xf32>
    %9 = vector.shape_cast %8 : vector<1x16x16x12xf32> to vector<16x16x12xf32>
    %10 = vector.shape_cast %9 : vector<16x16x12xf32> to vector<256x12xf32>
    %c0_12 = arith.constant 0 : index
    %c24 = arith.constant 24 : index
    %11 = vector.load %arg7[%c0_12, %c24] : memref<256x108xf32, #tpu.memory_space<vmem>>, vector<256x12xf32>
    tpu.vector_store %arg7[%c0_12, %c24], %10 {strides = array<i32>} : memref<256x108xf32, #tpu.memory_space<vmem>>, vector<256x12xf32>,
    %c0_13 = arith.constant 0 : index
    %c1_14 = arith.constant 1 : index
    %c0_15 = arith.constant 0 : index
    %c0_16 = arith.constant 0 : index
    %12 = vector.load %arg1[%c0_13, %c1_14, %c0_15, %c0_16] : memref<1x18x18x12xf32, #tpu.memory_space<vmem>>, vector<1x16x16x12xf32>
    %13 = vector.shape_cast %12 : vector<1x16x16x12xf32> to vector<16x16x12xf32>
    %14 = vector.shape_cast %13 : vector<16x16x12xf32> to vector<256x12xf32>
    %c0_17 = arith.constant 0 : index
    %c36 = arith.constant 36 : index
    %15 = vector.load %arg7[%c0_17, %c36] : memref<256x108xf32, #tpu.memory_space<vmem>>, vector<256x12xf32>
    tpu.vector_store %arg7[%c0_17, %c36], %14 {strides = array<i32>} : memref<256x108xf32, #tpu.memory_space<vmem>>, vector<256x12xf32>,
    %c0_18 = arith.constant 0 : index
    %c1_19 = arith.constant 1 : index
    %c1_20 = arith.constant 1 : index
    %c0_21 = arith.constant 0 : index
    %16 = vector.load %arg1[%c0_18, %c1_19, %c1_20, %c0_21] : memref<1x18x18x12xf32, #tpu.memory_space<vmem>>, vector<1x16x16x12xf32>
    %17 = vector.shape_cast %16 : vector<1x16x16x12xf32> to vector<16x16x12xf32>
    %18 = vector.shape_cast %17 : vector<16x16x12xf32> to vector<256x12xf32>
    %c0_22 = arith.constant 0 : index
    %c48 = arith.constant 48 : index
    %19 = vector.load %arg7[%c0_22, %c48] : memref<256x108xf32, #tpu.memory_space<vmem>>, vector<256x12xf32>
    tpu.vector_store %arg7[%c0_22, %c48], %18 {strides = array<i32>} : memref<256x108xf32, #tpu.memory_space<vmem>>, vector<256x12xf32>,
    %c0_23 = arith.constant 0 : index
    %c1_24 = arith.constant 1 : index
    %c2_25 = arith.constant 2 : index
    %c0_26 = arith.constant 0 : index
    %20 = vector.load %arg1[%c0_23, %c1_24, %c2_25, %c0_26] : memref<1x18x18x12xf32, #tpu.memory_space<vmem>>, vector<1x16x16x12xf32>
    %21 = vector.shape_cast %20 : vector<1x16x16x12xf32> to vector<16x16x12xf32>
    %22 = vector.shape_cast %21 : vector<16x16x12xf32> to vector<256x12xf32>
    %c0_27 = arith.constant 0 : index
    %c60 = arith.constant 60 : index
    %23 = vector.load %arg7[%c0_27, %c60] : memref<256x108xf32, #tpu.memory_space<vmem>>, vector<256x12xf32>
    tpu.vector_store %arg7[%c0_27, %c60], %22 {strides = array<i32>} : memref<256x108xf32, #tpu.memory_space<vmem>>, vector<256x12xf32>,
    %c0_28 = arith.constant 0 : index
    %c2_29 = arith.constant 2 : index
    %c0_30 = arith.constant 0 : index
    %c0_31 = arith.constant 0 : index
    %24 = vector.load %arg1[%c0_28, %c2_29, %c0_30, %c0_31] : memref<1x18x18x12xf32, #tpu.memory_space<vmem>>, vector<1x16x16x12xf32>
    %25 = vector.shape_cast %24 : vector<1x16x16x12xf32> to vector<16x16x12xf32>
    %26 = vector.shape_cast %25 : vector<16x16x12xf32> to vector<256x12xf32>
    %c0_32 = arith.constant 0 : index
    %c72 = arith.constant 72 : index
    %27 = vector.load %arg7[%c0_32, %c72] : memref<256x108xf32, #tpu.memory_space<vmem>>, vector<256x12xf32>
    tpu.vector_store %arg7[%c0_32, %c72], %26 {strides = array<i32>} : memref<256x108xf32, #tpu.memory_space<vmem>>, vector<256x12xf32>,
    %c0_33 = arith.constant 0 : index
    %c2_34 = arith.constant 2 : index
    %c1_35 = arith.constant 1 : index
    %c0_36 = arith.constant 0 : index
    %28 = vector.load %arg1[%c0_33, %c2_34, %c1_35, %c0_36] : memref<1x18x18x12xf32, #tpu.memory_space<vmem>>, vector<1x16x16x12xf32>
    %29 = vector.shape_cast %28 : vector<1x16x16x12xf32> to vector<16x16x12xf32>
    %30 = vector.shape_cast %29 : vector<16x16x12xf32> to vector<256x12xf32>
    %c0_37 = arith.constant 0 : index
    %c84 = arith.constant 84 : index
    %31 = vector.load %arg7[%c0_37, %c84] : memref<256x108xf32, #tpu.memory_space<vmem>>, vector<256x12xf32>
    tpu.vector_store %arg7[%c0_37, %c84], %30 {strides = array<i32>} : memref<256x108xf32, #tpu.memory_space<vmem>>, vector<256x12xf32>,
    %c0_38 = arith.constant 0 : index
    %c2_39 = arith.constant 2 : index
    %c2_40 = arith.constant 2 : index
    %c0_41 = arith.constant 0 : index
    %32 = vector.load %arg1[%c0_38, %c2_39, %c2_40, %c0_41] : memref<1x18x18x12xf32, #tpu.memory_space<vmem>>, vector<1x16x16x12xf32>
    %33 = vector.shape_cast %32 : vector<1x16x16x12xf32> to vector<16x16x12xf32>
    %34 = vector.shape_cast %33 : vector<16x16x12xf32> to vector<256x12xf32>
    %c0_42 = arith.constant 0 : index
    %c96 = arith.constant 96 : index
    %35 = vector.load %arg7[%c0_42, %c96] : memref<256x108xf32, #tpu.memory_space<vmem>>, vector<256x12xf32>
    tpu.vector_store %arg7[%c0_42, %c96], %34 {strides = array<i32>} : memref<256x108xf32, #tpu.memory_space<vmem>>, vector<256x12xf32>,
    %c0_43 = arith.constant 0 : index
    %c0_44 = arith.constant 0 : index
    %36 = vector.load %arg7[%c0_43, %c0_44] : memref<256x108xf32, #tpu.memory_space<vmem>>, vector<256x108xf32>
    %c0_45 = arith.constant 0 : index
    %c0_46 = arith.constant 0 : index
    %37 = vector.load %arg2[%c0_45, %c0_46] : memref<108x8xf32, #tpu.memory_space<vmem>>, vector<108x8xf32>
    %cst = arith.constant dense<0.000000e+00> : vector<256x8xf32>
    %38 = tpu.matmul %36, %37, %cst {dimension_numbers = #tpu.dot_dimension_numbers<[1], [0], [0], [1], [0, 0, 1, 1], [], []>} : vector<256x108xf32>, vector<108x8xf32>, vector<256x8xf32> -> vector<256x8xf32>
    %c0_47 = arith.constant 0 : index
    %c0_48 = arith.constant 0 : index
    %39 = vector.load %arg3[%c0_47, %c0_48] : memref<1x8xf32, #tpu.memory_space<vmem>>, vector<1x8xf32>
    %40 = vector.broadcast %39 : vector<1x8xf32> to vector<256x8xf32>
    %41 = arith.addf %38, %40 : vector<256x8xf32>
    %cst_49 = arith.constant 0.000000e+00 : f32
    %42 = vector.broadcast %cst_49 : f32 to vector<18x32x8xf32>
    %c0_50 = arith.constant 0 : index
    %c0_51 = arith.constant 0 : index
    %c0_52 = arith.constant 0 : index
    %43 = vector.load %arg8[%c0_50, %c0_51, %c0_52] : memref<18x32x8xf32, #tpu.memory_space<vmem>>, vector<18x32x8xf32>
    tpu.vector_store %arg8[%c0_50, %c0_51, %c0_52], %42 {strides = array<i32>} : memref<18x32x8xf32, #tpu.memory_space<vmem>>, vector<18x32x8xf32>,
    %44 = vector.shape_cast %41 : vector<256x8xf32> to vector<16x16x8xf32>
    %c1_53 = arith.constant 1 : index
    %c8 = arith.constant 8 : index
    %c0_54 = arith.constant 0 : index
    %45 = vector.load %arg8[%c1_53, %c8, %c0_54] : memref<18x32x8xf32, #tpu.memory_space<vmem>>, vector<16x16x8xf32>
    tpu.vector_store %arg8[%c1_53, %c8, %c0_54], %44 {strides = array<i32>} : memref<18x32x8xf32, #tpu.memory_space<vmem>>, vector<16x16x8xf32>,
    %c0_55 = arith.constant 0 : index
    %c7 = arith.constant 7 : index
    %c0_56 = arith.constant 0 : index
    %46 = vector.load %arg8[%c0_55, %c7, %c0_56] : memref<18x32x8xf32, #tpu.memory_space<vmem>>, vector<16x16x8xf32>
    %47 = vector.shape_cast %46 : vector<16x16x8xf32> to vector<256x8xf32>
    %c0_57 = arith.constant 0 : index
    %c0_58 = arith.constant 0 : index
    %48 = vector.load %arg9[%c0_57, %c0_58] : memref<256x72xf32, #tpu.memory_space<vmem>>, vector<256x8xf32>
    tpu.vector_store %arg9[%c0_57, %c0_58], %47 {strides = array<i32>} : memref<256x72xf32, #tpu.memory_space<vmem>>, vector<256x8xf32>,
    %c0_59 = arith.constant 0 : index
    %c8_60 = arith.constant 8 : index
    %c0_61 = arith.constant 0 : index
    %49 = vector.load %arg8[%c0_59, %c8_60, %c0_61] : memref<18x32x8xf32, #tpu.memory_space<vmem>>, vector<16x16x8xf32>
    %50 = vector.shape_cast %49 : vector<16x16x8xf32> to vector<256x8xf32>
    %c0_62 = arith.constant 0 : index
    %c8_63 = arith.constant 8 : index
    %51 = vector.load %arg9[%c0_62, %c8_63] : memref<256x72xf32, #tpu.memory_space<vmem>>, vector<256x8xf32>
    tpu.vector_store %arg9[%c0_62, %c8_63], %50 {strides = array<i32>} : memref<256x72xf32, #tpu.memory_space<vmem>>, vector<256x8xf32>,
    %c0_64 = arith.constant 0 : index
    %c9 = arith.constant 9 : index
    %c0_65 = arith.constant 0 : index
    %52 = vector.load %arg8[%c0_64, %c9, %c0_65] : memref<18x32x8xf32, #tpu.memory_space<vmem>>, vector<16x16x8xf32>
    %53 = vector.shape_cast %52 : vector<16x16x8xf32> to vector<256x8xf32>
    %c0_66 = arith.constant 0 : index
    %c16 = arith.constant 16 : index
    %54 = vector.load %arg9[%c0_66, %c16] : memref<256x72xf32, #tpu.memory_space<vmem>>, vector<256x8xf32>
    tpu.vector_store %arg9[%c0_66, %c16], %53 {strides = array<i32>} : memref<256x72xf32, #tpu.memory_space<vmem>>, vector<256x8xf32>,
    %c1_67 = arith.constant 1 : index
    %c7_68 = arith.constant 7 : index
    %c0_69 = arith.constant 0 : index
    %55 = vector.load %arg8[%c1_67, %c7_68, %c0_69] : memref<18x32x8xf32, #tpu.memory_space<vmem>>, vector<16x16x8xf32>
    %56 = vector.shape_cast %55 : vector<16x16x8xf32> to vector<256x8xf32>
    %c0_70 = arith.constant 0 : index
    %c24_71 = arith.constant 24 : index
    %57 = vector.load %arg9[%c0_70, %c24_71] : memref<256x72xf32, #tpu.memory_space<vmem>>, vector<256x8xf32>
    tpu.vector_store %arg9[%c0_70, %c24_71], %56 {strides = array<i32>} : memref<256x72xf32, #tpu.memory_space<vmem>>, vector<256x8xf32>,
    %c1_72 = arith.constant 1 : index
    %c8_73 = arith.constant 8 : index
    %c0_74 = arith.constant 0 : index
    %58 = vector.load %arg8[%c1_72, %c8_73, %c0_74] : memref<18x32x8xf32, #tpu.memory_space<vmem>>, vector<16x16x8xf32>
    %59 = vector.shape_cast %58 : vector<16x16x8xf32> to vector<256x8xf32>
    %c0_75 = arith.constant 0 : index
    %c32 = arith.constant 32 : index
    %60 = vector.load %arg9[%c0_75, %c32] : memref<256x72xf32, #tpu.memory_space<vmem>>, vector<256x8xf32>
    tpu.vector_store %arg9[%c0_75, %c32], %59 {strides = array<i32>} : memref<256x72xf32, #tpu.memory_space<vmem>>, vector<256x8xf32>,
    %c1_76 = arith.constant 1 : index
    %c9_77 = arith.constant 9 : index
    %c0_78 = arith.constant 0 : index
    %61 = vector.load %arg8[%c1_76, %c9_77, %c0_78] : memref<18x32x8xf32, #tpu.memory_space<vmem>>, vector<16x16x8xf32>
    %62 = vector.shape_cast %61 : vector<16x16x8xf32> to vector<256x8xf32>
    %c0_79 = arith.constant 0 : index
    %c40 = arith.constant 40 : index
    %63 = vector.load %arg9[%c0_79, %c40] : memref<256x72xf32, #tpu.memory_space<vmem>>, vector<256x8xf32>
    tpu.vector_store %arg9[%c0_79, %c40], %62 {strides = array<i32>} : memref<256x72xf32, #tpu.memory_space<vmem>>, vector<256x8xf32>,
    %c2_80 = arith.constant 2 : index
    %c7_81 = arith.constant 7 : index
    %c0_82 = arith.constant 0 : index
    %64 = vector.load %arg8[%c2_80, %c7_81, %c0_82] : memref<18x32x8xf32, #tpu.memory_space<vmem>>, vector<16x16x8xf32>
    %65 = vector.shape_cast %64 : vector<16x16x8xf32> to vector<256x8xf32>
    %c0_83 = arith.constant 0 : index
    %c48_84 = arith.constant 48 : index
    %66 = vector.load %arg9[%c0_83, %c48_84] : memref<256x72xf32, #tpu.memory_space<vmem>>, vector<256x8xf32>
    tpu.vector_store %arg9[%c0_83, %c48_84], %65 {strides = array<i32>} : memref<256x72xf32, #tpu.memory_space<vmem>>, vector<256x8xf32>,
    %c2_85 = arith.constant 2 : index
    %c8_86 = arith.constant 8 : index
    %c0_87 = arith.constant 0 : index
    %67 = vector.load %arg8[%c2_85, %c8_86, %c0_87] : memref<18x32x8xf32, #tpu.memory_space<vmem>>, vector<16x16x8xf32>
    %68 = vector.shape_cast %67 : vector<16x16x8xf32> to vector<256x8xf32>
    %c0_88 = arith.constant 0 : index
    %c56 = arith.constant 56 : index
    %69 = vector.load %arg9[%c0_88, %c56] : memref<256x72xf32, #tpu.memory_space<vmem>>, vector<256x8xf32>
    tpu.vector_store %arg9[%c0_88, %c56], %68 {strides = array<i32>} : memref<256x72xf32, #tpu.memory_space<vmem>>, vector<256x8xf32>,
    %c2_89 = arith.constant 2 : index
    %c9_90 = arith.constant 9 : index
    %c0_91 = arith.constant 0 : index
    %70 = vector.load %arg8[%c2_89, %c9_90, %c0_91] : memref<18x32x8xf32, #tpu.memory_space<vmem>>, vector<16x16x8xf32>
    %71 = vector.shape_cast %70 : vector<16x16x8xf32> to vector<256x8xf32>
    %c0_92 = arith.constant 0 : index
    %c64 = arith.constant 64 : index
    %72 = vector.load %arg9[%c0_92, %c64] : memref<256x72xf32, #tpu.memory_space<vmem>>, vector<256x8xf32>
    tpu.vector_store %arg9[%c0_92, %c64], %71 {strides = array<i32>} : memref<256x72xf32, #tpu.memory_space<vmem>>, vector<256x8xf32>,
    %c0_93 = arith.constant 0 : index
    %c0_94 = arith.constant 0 : index
    %73 = vector.load %arg9[%c0_93, %c0_94] : memref<256x72xf32, #tpu.memory_space<vmem>>, vector<256x72xf32>
    %c0_95 = arith.constant 0 : index
    %c0_96 = arith.constant 0 : index
    %74 = vector.load %arg4[%c0_95, %c0_96] : memref<72x8xf32, #tpu.memory_space<vmem>>, vector<72x8xf32>
    %cst_97 = arith.constant dense<0.000000e+00> : vector<256x8xf32>
    %75 = tpu.matmul %73, %74, %cst_97 {dimension_numbers = #tpu.dot_dimension_numbers<[1], [0], [0], [1], [0, 0, 1, 1], [], []>} : vector<256x72xf32>, vector<72x8xf32>, vector<256x8xf32> -> vector<256x8xf32>
    %c0_98 = arith.constant 0 : index
    %c0_99 = arith.constant 0 : index
    %76 = vector.load %arg5[%c0_98, %c0_99] : memref<1x8xf32, #tpu.memory_space<vmem>>, vector<1x8xf32>
    %77 = vector.broadcast %76 : vector<1x8xf32> to vector<256x8xf32>
    %78 = arith.addf %75, %77 : vector<256x8xf32>
    %c0_100 = arith.constant 0 : index
    %c0_101 = arith.constant 0 : index
    %c0_102 = arith.constant 0 : index
    %79 = vector.load %arg6[%c0_100, %c0_101, %c0_102] : memref<1x256x8xf32, #tpu.memory_space<vmem>>, vector<1x256x8xf32>
    %80 = vector.shape_cast %79 : vector<1x256x8xf32> to vector<256x8xf32>
    %81 = vector.shape_cast %78 : vector<256x8xf32> to vector<1x256x8xf32>
    tpu.vector_store %arg6[%c0_100, %c0_101, %c0_102], %81 {strides = array<i32>} : memref<1x256x8xf32, #tpu.memory_space<vmem>>, vector<1x256x8xf32>,
    return
  }
  func.func @transform_0(%arg0: i32) -> (i32, i32, i32, i32) {
    %c0_i32 = arith.constant 0 : i32
    %c0_i32_0 = arith.constant 0 : i32
    %c0_i32_1 = arith.constant 0 : i32
    %c0_i32_2 = arith.constant 0 : i32
    return %arg0, %c0_i32, %c0_i32_0, %c0_i32_1 : i32, i32, i32, i32
  }
  func.func @transform_1(%arg0: i32) -> (i32, i32) {
    %c0_i32 = arith.constant 0 : i32
    %c0_i32_0 = arith.constant 0 : i32
    %c0_i32_1 = arith.constant 0 : i32
    return %c0_i32, %c0_i32_0 : i32, i32
  }
  func.func @transform_2(%arg0: i32) -> (i32, i32) {
    %c0_i32 = arith.constant 0 : i32
    %c0_i32_0 = arith.constant 0 : i32
    %c0_i32_1 = arith.constant 0 : i32
    return %c0_i32, %c0_i32_0 : i32, i32
  }
  func.func @transform_3(%arg0: i32) -> (i32, i32) {
    %c0_i32 = arith.constant 0 : i32
    %c0_i32_0 = arith.constant 0 : i32
    %c0_i32_1 = arith.constant 0 : i32
    return %c0_i32, %c0_i32_0 : i32, i32
  }
  func.func @transform_4(%arg0: i32) -> (i32, i32) {
    %c0_i32 = arith.constant 0 : i32
    %c0_i32_0 = arith.constant 0 : i32
    %c0_i32_1 = arith.constant 0 : i32
    return %c0_i32, %c0_i32_0 : i32, i32
  }
  func.func @transform_5(%arg0: i32) -> (i32, i32, i32) {
    %c0_i32 = arith.constant 0 : i32
    %c0_i32_0 = arith.constant 0 : i32
    %c0_i32_1 = arith.constant 0 : i32
    return %arg0, %c0_i32, %c0_i32_0 : i32, i32, i32
  }
}

</mosaic_0001>

<llo_original>
// kernel: tile.9
$region0: #{tile.9}
  %s0 = inlined_call_operand.vmem [shape: f32[4,8], index: 0, kind: input, shape index: {}]
  %s1 = inlined_call_operand.vmem [shape: f32[1,32], index: 1, kind: output, shape index: {}]
  $region1: #{tile.9} parent=0
    #allocation0 [shape = 'u8[4096]{0}', space=vmem, size = 0x1000, scoped, tag = 'scoped mem for output reshape']
    #allocation1 [shape = 'u8[4096]{0}', space=vmem, size = 0x1000, scoped, tag = 'scoped mem for input reshape']
    %s3 = sshll.u32 1, 4
    %s4 = ssub.s32 %s3, 1
    %v5 = vld [vmem:[%s0] sm:%s4]
    %6 = vst [vmem:[#allocation1] sm:%s4] %v5
    %v7 = vld [vmem:[#allocation1] sm:$0x1]
    %vm8 = vcmask 64512
    %9 = vst.msk [vmem:[#allocation0] sm:$0x1] %vm8, %v7
    %s10 = scalar_lea.vmem [#allocation1], 3
    %v11 = vld [vmem:[%s10] sm:$0x1]
    %12 = vrot.lane.b32.xlu0 %v11, 24
    %v13 = vpop.permute.xlu0 %12
    %vm14 = vcmask 261312
    %15 = vst.msk [vmem:[#allocation0] sm:$0x1] %vm14, %v13
    %s16 = scalar_lea.vmem [#allocation1], 2
    %v17 = vld [vmem:[%s16] sm:$0x1]
    %18 = vrot.lane.b32.xlu0 %v17, 16
    %v19 = vpop.permute.xlu0 %18
    %vm20 = vcmask 195712
    %21 = vst.msk [vmem:[#allocation0] sm:$0x1] %vm20, %v19
    %s22 = scalar_lea.vmem [#allocation1], 1
    %v23 = vld [vmem:[%s22] sm:$0x1]
    %24 = vrot.lane.b32.xlu0 %v23, 8
    %v25 = vpop.permute.xlu0 %24
    %vm26 = vcmask 130112
    %27 = vst.msk [vmem:[#allocation0] sm:$0x1] %vm26, %v25
    %s29 = sshll.u32 1, 1
    %s30 = ssub.s32 %s29, 1
    %v32 = vld [vmem:[#allocation0] sm:%s30]
    %s33 = sshll.u32 1, 1
    %s34 = ssub.s32 %s33, 1
    %35 = vst [vmem:[%s1] sm:%s34] %v32

// kernel: tile.8
$region0: #{tile.8}
  #allocation0 [shape = 's32[1]{0}', space=sflag, size = 0x4, scoped, tag = 'scoped memory for tile.8']
  %s0 = inlined_call_operand.vmem [shape: f32[8], index: 0, kind: input, shape index: {}]
  %s1 = inlined_call_operand.vmem [shape: f32[4,8], index: 1, kind: output, shape index: {}]
  // Predicated region
  $region2: #{tile.8} parent=0 // pred_check
    _
  $region3: #{tile.8} parent=0 // pred_check_branch
    %3 = sbr.rel (0) target = $region5
  $region4: #{tile.8} parent=0 // pred_region
    _
  $region5: #{tile.8} parent=0 // pred_fallthru
    _
  %v4 = vld [vmem:[%s0] ss:$0 sm:$0xff]
  %5 = vst [vmem:[%s1] sm:$0xf] %v4

// kernel: decoder_block_forward.2
$region0: #{decoder_block_forward.2}
  #allocation0 [shape = 'u32[]', space=smem, size = 0x4, offset = 0x4, fixed_abs, tag = 'smem constant byte address 0x4 - core index']
  #allocation1 [shape = 'u32[144,128]{1,0:T(1,128)}', space=vmem, size = 0x12000, scoped, tag = 'internal scratch']
  %s0 = inlined_call_operand.vmem [shape: f32[2,64,8], index: 0, kind: input, shape index: {}]
  %s1 = inlined_call_operand.vmem [shape: f32[8,32], index: 1, kind: input, shape index: {}]
  %s2 = inlined_call_operand.vmem [shape: f32[1,32], index: 2, kind: input, shape index: {}]
  %s3 = inlined_call_operand.vmem [shape: f32[2,64,32], index: 3, kind: output, shape index: {}]
  %s4 = sld [smem:[#allocation0]]
  $region45: #{decoder_block_forward.2} parent=0
    _
  %s6 = ssub.s32 1, %s4
  %s7 = scalar_select 0, %s6, %s4
  loop: start=0, step=1, limit=4
  $region2: #{decoder_block_forward.2} parent=0 // loop_pre_header
    _
  $region3: #{decoder_block_forward.2} parent=0 // loop_header
    %s9 = sphi 0, %s13
    %p10 = scmp.ge.s32.totalorder %s9, 4
    %s19 = sphi 0, %s21
    %s22 = sphi 0, %s19
    %s23 = sphi 0, %s22
    %s39 = sphi 0, %s23
    %s43 = sphi 0, %s43
    %s45 = sphi 0, %s43
    %s46 = sphi 0, %s45
    %s60 = sphi 0, %s46
    %s64 = sphi 0, %s64
    %s66 = sphi 0, %s64
    %s67 = sphi 0, %s66
    %s81 = sphi 0, %s67
    %s87 = sphi 0, %s89
    %s90 = sphi 0, %s87
    %s91 = sphi 0, %s90
    %s107 = sphi 0, %s91
  $region4: #{decoder_block_forward.2} parent=0 // loop_header_branch
    %12 = sbr.rel (%p10) target = $region8
  $region5: #{decoder_block_forward.2} parent=0 // loop_body
    %s14 = ssub.s32 %s9, 1
    %s15 = ssub.s32 %s9, 2
    %s16 = sadd.s32 %s9, 1
    %s17 = ssub.s32 %s9, %s16
    %p18 = scmp.eq.s32.totalorder %s17, 0
    %s20 = sadd.s32 %s19, 1
    %s21 = scalar_select %p18, %s19, %s20
    %p24 = pneg %p18
    %p25 = scmp.eq.s32.totalorder %s9, 1
    %p26 = por %p24, %p25
    %p27 = scmp.ne.s32.totalorder %s19, %s22
    %p28 = scmp.eq.s32.totalorder %s9, 0
    %p29 = por %p27, %p28
    %p30 = scmp.ne.s32.totalorder %s19, %s22
    %p31 = scmp.eq.s32.totalorder %s14, 1
    %p32 = por %p30, %p31
    %p33 = scmp.ne.s32.totalorder %s22, %s23
    %p34 = scmp.eq.s32.totalorder %s14, 0
    %p35 = por %p33, %p34
    %p36 = scmp.ne.s32.totalorder %s22, %s23
    %p37 = scmp.eq.s32.totalorder %s15, 1
    %p38 = por %p36, %p37
    %p40 = scmp.ne.s32.totalorder %s23, %s39
    %p41 = scmp.eq.s32.totalorder %s15, 0
    %p42 = por %p40, %p41
    %s44 = sadd.s32 %s43, 1
    %p47 = scmp.eq.s32.totalorder %s9, 1
    %p48 = scmp.ne.s32.totalorder %s43, %s45
    %p49 = scmp.eq.s32.totalorder %s9, 0
    %p50 = por %p48, %p49
    %p51 = scmp.ne.s32.totalorder %s43, %s45
    %p52 = scmp.eq.s32.totalorder %s14, 1
    %p53 = por %p51, %p52
    %p54 = scmp.ne.s32.totalorder %s45, %s46
    %p55 = scmp.eq.s32.totalorder %s14, 0
    %p56 = por %p54, %p55
    %p57 = scmp.ne.s32.totalorder %s45, %s46
    %p58 = scmp.eq.s32.totalorder %s15, 1
    %p59 = por %p57, %p58
    %p61 = scmp.ne.s32.totalorder %s46, %s60
    %p62 = scmp.eq.s32.totalorder %s15, 0
    %p63 = por %p61, %p62
    %s65 = sadd.s32 %s64, 1
    %p68 = scmp.eq.s32.totalorder %s9, 1
    %p69 = scmp.ne.s32.totalorder %s64, %s66
    %p70 = scmp.eq.s32.totalorder %s9, 0
    %p71 = por %p69, %p70
    %p72 = scmp.ne.s32.totalorder %s64, %s66
    %p73 = scmp.eq.s32.totalorder %s14, 1
    %p74 = por %p72, %p73
    %p75 = scmp.ne.s32.totalorder %s66, %s67
    %p76 = scmp.eq.s32.totalorder %s14, 0
    %p77 = por %p75, %p76
    %p78 = scmp.ne.s32.totalorder %s66, %s67
    %p79 = scmp.eq.s32.totalorder %s15, 1
    %p80 = por %p78, %p79
    %p82 = scmp.ne.s32.totalorder %s67, %s81
    %p83 = scmp.eq.s32.totalorder %s15, 0
    %p84 = por %p82, %p83
    %s85 = ssub.s32 %s9, %s16
    %p86 = scmp.eq.s32.totalorder %s85, 0
    %s88 = sadd.s32 %s87, 1
    %s89 = scalar_select %p86, %s87, %s88
    %p92 = pneg %p86
    %p93 = scmp.eq.s32.totalorder %s9, 1
    %p94 = por %p92, %p93
    %p95 = scmp.ne.s32.totalorder %s87, %s90
    %p96 = scmp.eq.s32.totalorder %s9, 0
    %p97 = por %p95, %p96
    %p98 = scmp.ne.s32.totalorder %s87, %s90
    %p99 = scmp.eq.s32.totalorder %s14, 1
    %p100 = por %p98, %p99
    %p101 = scmp.ne.s32.totalorder %s90, %s91
    %p102 = scmp.eq.s32.totalorder %s14, 0
    %p103 = por %p101, %p102
    %p104 = scmp.ne.s32.totalorder %s90, %s91
    %p105 = scmp.eq.s32.totalorder %s15, 1
    %p106 = por %p104, %p105
    %p108 = scmp.ne.s32.totalorder %s91, %s107
    %p109 = scmp.eq.s32.totalorder %s15, 0
    %p110 = por %p108, %p109
    %p111 = scmp.le.s32.totalorder 1, %s9
    %p112 = scmp.lt.s32.totalorder %s9, 3
    %p113 = pnand %p111, %p112
    %p114 = pneg %p113
    // Predicated region
    $region9: #{decoder_block_forward.2} parent=5 // pred_check
      _
    $region10: #{decoder_block_forward.2} parent=5 // pred_check_branch
      %116 = sbr.rel (%p113) target = $region12
    $region11: #{decoder_block_forward.2} parent=5 // pred_region
      %s117 = ssub.s32 %s9, 1
      // Predicated region
      $region13: #{decoder_block_forward.2} parent=11 // pred_check
        %p118 = pneg %p56
      $region14: #{decoder_block_forward.2} parent=11 // pred_check_branch
        %120 = sbr.rel (%p118) target = $region16
      $region15: #{decoder_block_forward.2} parent=11 // pred_region
        _
      $region16: #{decoder_block_forward.2} parent=11 // pred_fallthru
        _
      // Predicated region
      $region17: #{decoder_block_forward.2} parent=11 // pred_check
        %p121 = pneg %p77
      $region18: #{decoder_block_forward.2} parent=11 // pred_check_branch
        %123 = sbr.rel (%p121) target = $region20
      $region19: #{decoder_block_forward.2} parent=11 // pred_region
        _
      $region20: #{decoder_block_forward.2} parent=11 // pred_fallthru
        _
    $region12: #{decoder_block_forward.2} parent=5 // pred_fallthru
      _
    %p124 = scmp.lt.s32.totalorder %s9, 2
    // Predicated region
    $region21: #{decoder_block_forward.2} parent=5 // pred_check
      %p125 = pneg %p124
    $region22: #{decoder_block_forward.2} parent=5 // pred_check_branch
      %127 = sbr.rel (%p125) target = $region24
    $region23: #{decoder_block_forward.2} parent=5 // pred_region
      // Predicated region
      $region25: #{decoder_block_forward.2} parent=23 // pred_check
        %p128 = pneg %p29
      $region26: #{decoder_block_forward.2} parent=23 // pred_check_branch
        %130 = sbr.rel (%p128) target = $region28
      $region27: #{decoder_block_forward.2} parent=23 // pred_region
        %p131 = scmp.lt.s32.totalorder %s9, 1
        %s132 = scalar_select %p131, %s9, 1
        %s133 = smul.addr %s132, 8
        %s134 = smul.addr %s133, 8
        %s135 = scalar_lea.vmem %s0, %s134
      $region28: #{decoder_block_forward.2} parent=23 // pred_fallthru
        _
    $region24: #{decoder_block_forward.2} parent=5 // pred_fallthru
      _
    %p136 = scmp.le.s32.totalorder 1, %s9
    %p137 = scmp.lt.s32.totalorder %s9, 3
    %p138 = pnand %p136, %p137
    %p139 = pneg %p138
    // Predicated region
    $region29: #{decoder_block_forward.2} parent=5 // pred_check
      _
    $region30: #{decoder_block_forward.2} parent=5 // pred_check_branch
      %141 = sbr.rel (%p138) target = $region32
    $region31: #{decoder_block_forward.2} parent=5 // pred_region
      %s142 = ssub.s32 %s9, 1
      %p143 = scmp.lt.s32.totalorder %s14, 1
      %s144 = scalar_select %p143, %s14, 1
      %s145 = smul.addr %s144, 8
      %s146 = smul.addr %s145, 8
      %s147 = scalar_lea.vmem %s0, %s146
      %p148 = pneg %p35
      %p149 = pneg %p32
      %p150 = pneg %p56
      %p151 = pneg %p53
      %p152 = pneg %p77
      %p153 = pneg %p74
      %p154 = pneg %p103
      %p155 = pneg %p100
      %p156 = scmp.lt.s32.totalorder %s14, 1
      %s157 = scalar_select %p156, %s14, 1
      %s158 = smul.addr %s157, 8
      %s159 = smul.addr %s158, 8
      %s160 = scalar_lea.vmem %s3, %s159
      %p161 = scmp.lt.s32.totalorder %s14, 1
      %s162 = scalar_select %p161, %s14, 1
      %s163 = smul.addr %s162, 8
      %s164 = smul.addr %s163, 8
      %s165 = scalar_lea.vmem %s0, %s164
      %p166 = scmp.lt.s32.totalorder %s14, 1
      %s167 = scalar_select %p166, %s14, 1
      %s168 = smul.addr %s167, 8
      %s169 = smul.addr %s168, 8
      %s170 = scalar_lea.vmem %s3, %s169
      %v171 = vld [vmem:[%s165] sm:$0xff]
      %v172 = vld [vmem:[%s165 + $0x8] sm:$0xff]
      %v173 = vld [vmem:[%s165 + $0x10] sm:$0xff]
      %v174 = vld [vmem:[%s165 + $0x18] sm:$0xff]
      %v175 = vld [vmem:[%s165 + $0x20] sm:$0xff]
      %v176 = vld [vmem:[%s165 + $0x28] sm:$0xff]
      %v177 = vld [vmem:[%s165 + $0x30] sm:$0xff]
      %v178 = vld [vmem:[%s165 + $0x38] sm:$0xff]
      %v179 = vld [vmem:[%s1] sm:$0xff]
      %v180 = vld [vmem:[%s2] sm:$0x1]
      %v182 = vlaneseq
      %v183 = vshrl.u32 %v182, 7
      %v184 = vsub.s32 0, %v183
      %v185 = vrot.slane %v180, %v184
      %vm187 = vcmask 64512
      %v189 = vsel %vm187, %v171, 0
      %v192 = vsel %vm187, %v172, 0
      %v195 = vsel %vm187, %v173, 0
      %v198 = vsel %vm187, %v174, 0
      %v201 = vsel %vm187, %v175, 0
      %v204 = vsel %vm187, %v176, 0
      %v207 = vsel %vm187, %v177, 0
      %v210 = vsel %vm187, %v178, 0
      %212 = vmatprep.subr.mxu0 0.0
      %213 = vmatpush1.msra.mxu0 0.0
      %214 = vmatprep.subr.mxu0 0.0
      %215 = vmatpush1.msra.mxu0 0.0
      %216 = vmatprep.subr.mxu0 0.0
      %217 = vmatpush1.msra.mxu0 0.0
      %218 = vmatprep.subr.mxu0 0.0
      %219 = vmatpush1.msra.mxu0 0.0
      %220 = vmatprep.subr.mxu0 0.0
      %221 = vmatpush1.msra.mxu0 0.0
      %222 = vmatprep.subr.mxu0 0.0
      %223 = vmatpush1.msra.mxu0 0.0
      %224 = vmatprep.subr.mxu0 0.0
      %225 = vmatpush1.msra.mxu0 0.0
      %226 = vmatprep.subr.mxu0 0.0
      %227 = vmatpush1.msra.mxu0 0.0
      %228 = vmatprep.subr.mxu0 0.0
      %229 = vmatpush1.msra.mxu0 0.0
      %230 = vmatprep.subr.mxu0 0.0
      %231 = vmatpush1.msra.mxu0 0.0
      %232 = vmatprep.subr.mxu0 0.0
      %233 = vmatpush1.msra.mxu0 0.0
      %234 = vmatprep.subr.mxu0 0.0
      %235 = vmatpush1.msra.mxu0 0.0
      %236 = vmatprep.subr.mxu0 0.0
      %237 = vmatpush1.msra.mxu0 0.0
      %238 = vmatprep.subr.mxu0 0.0
      %239 = vmatpush1.msra.mxu0 0.0
      %240 = vmatprep.subr.mxu0 0.0
      %241 = vmatpush1.msra.mxu0 0.0
      %242 = vmatprep.subr.mxu0 0.0
      %243 = vmatpush1.msra.mxu0 %v179
      %244 = vmatprep.subr.mxu0 0.0
      %245 = vmatpush2.msra.mxu0 0.0
      %246 = vmatprep.subr.mxu0 0.0
      %247 = vmatpush2.msra.mxu0 0.0
      %248 = vmatprep.subr.mxu0 0.0
      %249 = vmatpush2.msra.mxu0 0.0
      %250 = vmatprep.subr.mxu0 0.0
      %251 = vmatpush2.msra.mxu0 0.0
      %252 = vmatprep.subr.mxu0 0.0
      %253 = vmatpush2.msra.mxu0 0.0
      %254 = vmatprep.subr.mxu0 0.0
      %255 = vmatpush2.msra.mxu0 0.0
      %256 = vmatprep.subr.mxu0 0.0
      %257 = vmatpush2.msra.mxu0 0.0
      %258 = vmatprep.subr.mxu0 0.0
      %259 = vmatpush2.msra.mxu0 0.0
      %260 = vmatprep.subr.mxu0 0.0
      %261 = vmatpush2.msra.mxu0 0.0
      %262 = vmatprep.subr.mxu0 0.0
      %263 = vmatpush2.msra.mxu0 0.0
      %264 = vmatprep.subr.mxu0 0.0
      %265 = vmatpush2.msra.mxu0 0.0
      %266 = vmatprep.subr.mxu0 0.0
      %267 = vmatpush2.msra.mxu0 0.0
      %268 = vmatprep.subr.mxu0 0.0
      %269 = vmatpush2.msra.mxu0 0.0
      %270 = vmatprep.subr.mxu0 0.0
      %271 = vmatpush2.msra.mxu0 0.0
      %272 = vmatprep.subr.mxu0 0.0
      %273 = vmatpush2.msra.mxu0 0.0
      %274 = vmatprep.subr.mxu0 0.0
      %275 = vmatpush2.msra.mxu0 0.0
      %276 = vmatprep.mubr.f32.mxu0 0.0
      %277 = vmatmul.mubr.f32.gmra.mxu0 %v189
      %v278 = vpop.f32.mrf.mxu0
      %v279 = vadd.f32 %v185, %v278
      %v280 = vpop.f32.mrf.mxu0
      %281 = vmatprep.mubr.f32.mxu0 0.0
      %282 = vmatmul.mubr.f32.gmra.mxu0 %v192
      %v283 = vpop.f32.mrf.mxu0
      %v284 = vadd.f32 %v185, %v283
      %v285 = vpop.f32.mrf.mxu0
      %286 = vmatprep.mubr.f32.mxu0 0.0
      %287 = vmatmul.mubr.f32.gmra.mxu0 %v195
      %v288 = vpop.f32.mrf.mxu0
      %v289 = vadd.f32 %v185, %v288
      %v290 = vpop.f32.mrf.mxu0
      %291 = vmatprep.mubr.f32.mxu0 0.0
      %292 = vmatmul.mubr.f32.gmra.mxu0 %v198
      %v293 = vpop.f32.mrf.mxu0
      %v294 = vadd.f32 %v185, %v293
      %v295 = vpop.f32.mrf.mxu0
      %296 = vmatprep.mubr.f32.mxu0 0.0
      %297 = vmatmul.mubr.f32.gmra.mxu0 %v201
      %v298 = vpop.f32.mrf.mxu0
      %v299 = vadd.f32 %v185, %v298
      %v300 = vpop.f32.mrf.mxu0
      %301 = vmatprep.mubr.f32.mxu0 0.0
      %302 = vmatmul.mubr.f32.gmra.mxu0 %v204
      %v303 = vpop.f32.mrf.mxu0
      %v304 = vadd.f32 %v185, %v303
      %v305 = vpop.f32.mrf.mxu0
      %306 = vmatprep.mubr.f32.mxu0 0.0
      %307 = vmatmul.mubr.f32.gmra.mxu0 %v207
      %v308 = vpop.f32.mrf.mxu0
      %v309 = vadd.f32 %v185, %v308
      %v310 = vpop.f32.mrf.mxu0
      %311 = vmatprep.mubr.f32.mxu0 0.0
      %312 = vmatmul.mubr.f32.gmra.mxu0 %v210
      %v313 = vpop.f32.mrf.mxu0
      %v314 = vadd.f32 %v185, %v313
      %v315 = vpop.f32.mrf.mxu0
      %316 = vdwg.mxu0
      %vm317 = vcmask 261120
      %318 = vst.msk [vmem:[%s170] sm:$0xff] %vm317, %v279
      %319 = vst.msk [vmem:[%s170 + $0x8] sm:$0xff] %vm317, %v284
      %320 = vst.msk [vmem:[%s170 + $0x10] sm:$0xff] %vm317, %v289
      %321 = vst.msk [vmem:[%s170 + $0x18] sm:$0xff] %vm317, %v294
      %322 = vst.msk [vmem:[%s170 + $0x20] sm:$0xff] %vm317, %v299
      %323 = vst.msk [vmem:[%s170 + $0x28] sm:$0xff] %vm317, %v304
      %324 = vst.msk [vmem:[%s170 + $0x30] sm:$0xff] %vm317, %v309
      %325 = vst.msk [vmem:[%s170 + $0x38] sm:$0xff] %vm317, %v314
      %p326 = scmp.lt.s32.totalorder %s14, 1
      %s327 = scalar_select %p326, %s14, 1
      %s328 = smul.addr %s327, 8
      %s329 = smul.addr %s328, 8
      %s330 = scalar_lea.vmem %s3, %s329
      // Predicated region
      $region33: #{decoder_block_forward.2} parent=31 // pred_check
        %p331 = pneg %p100
      $region34: #{decoder_block_forward.2} parent=31 // pred_check_branch
        %333 = sbr.rel (%p331) target = $region36
      $region35: #{decoder_block_forward.2} parent=31 // pred_region
        _
      $region36: #{decoder_block_forward.2} parent=31 // pred_fallthru
        _
    $region32: #{decoder_block_forward.2} parent=5 // pred_fallthru
      _
    %p334 = scmp.le.s32.totalorder 2, %s9
    // Predicated region
    $region37: #{decoder_block_forward.2} parent=5 // pred_check
      %p335 = pneg %p334
    $region38: #{decoder_block_forward.2} parent=5 // pred_check_branch
      %337 = sbr.rel (%p335) target = $region40
    $region39: #{decoder_block_forward.2} parent=5 // pred_region
      %s338 = ssub.s32 %s9, 2
      // Predicated region
      $region41: #{decoder_block_forward.2} parent=39 // pred_check
        %p339 = pneg %p106
      $region42: #{decoder_block_forward.2} parent=39 // pred_check_branch
        %341 = sbr.rel (%p339) target = $region44
      $region43: #{decoder_block_forward.2} parent=39 // pred_region
        %p342 = scmp.lt.s32.totalorder %s15, 1
        %s343 = scalar_select %p342, %s15, 1
        %s344 = smul.addr %s343, 8
        %s345 = smul.addr %s344, 8
        %s346 = scalar_lea.vmem %s3, %s345
      $region44: #{decoder_block_forward.2} parent=39 // pred_fallthru
        _
    $region40: #{decoder_block_forward.2} parent=5 // pred_fallthru
      _
  $region6: #{decoder_block_forward.2} parent=0 // loop_footer
    %s13 = sadd.s32 1, %s9
  $region7: #{decoder_block_forward.2} parent=0 // loop_footer_branch
    %8 = sbr.rel target = $region3
  $region8: #{decoder_block_forward.2} parent=0 // loop_exit
    _

// kernel: decoder_block_forward.3
$region0: #{decoder_block_forward.3}
  #allocation0 [shape = 'u32[]', space=smem, size = 0x4, offset = 0x4, fixed_abs, tag = 'smem constant byte address 0x4 - core index']
  #allocation1 [shape = 'u32[144,128]{1,0:T(1,128)}', space=vmem, size = 0x12000, scoped, tag = 'internal scratch']
  #allocation2 [shape = 'f32[256,108]{1,0:T(8,128)}', space=vmem, size = 0x20000, scoped, tag = 'scratch operand']
  #allocation3 [shape = 'f32[18,32,8]{2,1,0:T(8,128)}', space=vmem, size = 0x48000, scoped, tag = 'scratch operand']
  #allocation4 [shape = 'f32[256,72]{1,0:T(8,128)}', space=vmem, size = 0x20000, scoped, tag = 'scratch operand']
  %s0 = inlined_call_operand.vmem [shape: f32[2,18,18,12], index: 0, kind: input, shape index: {}]
  %s1 = inlined_call_operand.vmem [shape: f32[108,8], index: 1, kind: input, shape index: {}]
  %s2 = inlined_call_operand.vmem [shape: f32[1,8], index: 2, kind: input, shape index: {}]
  %s3 = inlined_call_operand.vmem [shape: f32[72,8], index: 3, kind: input, shape index: {}]
  %s4 = inlined_call_operand.vmem [shape: f32[1,8], index: 4, kind: input, shape index: {}]
  %s5 = inlined_call_operand.vmem [shape: f32[2,256,8], index: 5, kind: output, shape index: {}]
  %s6 = sld [smem:[#allocation0]]
  $region53: #{decoder_block_forward.3} parent=0
    _
  %s8 = ssub.s32 1, %s6
  %s9 = scalar_select 0, %s8, %s6
  loop: start=0, step=1, limit=4
  $region2: #{decoder_block_forward.3} parent=0 // loop_pre_header
    _
  $region3: #{decoder_block_forward.3} parent=0 // loop_header
    %s11 = sphi 0, %s15
    %p12 = scmp.ge.s32.totalorder %s11, 4
    %s21 = sphi 0, %s23
    %s24 = sphi 0, %s21
    %s25 = sphi 0, %s24
    %s41 = sphi 0, %s25
    %s45 = sphi 0, %s45
    %s47 = sphi 0, %s45
    %s48 = sphi 0, %s47
    %s62 = sphi 0, %s48
    %s66 = sphi 0, %s66
    %s68 = sphi 0, %s66
    %s69 = sphi 0, %s68
    %s83 = sphi 0, %s69
    %s87 = sphi 0, %s87
    %s89 = sphi 0, %s87
    %s90 = sphi 0, %s89
    %s104 = sphi 0, %s90
    %s108 = sphi 0, %s108
    %s110 = sphi 0, %s108
    %s111 = sphi 0, %s110
    %s125 = sphi 0, %s111
    %s131 = sphi 0, %s133
    %s134 = sphi 0, %s131
    %s135 = sphi 0, %s134
    %s151 = sphi 0, %s135
  $region4: #{decoder_block_forward.3} parent=0 // loop_header_branch
    %14 = sbr.rel (%p12) target = $region8
  $region5: #{decoder_block_forward.3} parent=0 // loop_body
    %s16 = ssub.s32 %s11, 1
    %s17 = ssub.s32 %s11, 2
    %s18 = sadd.s32 %s11, 1
    %s19 = ssub.s32 %s11, %s18
    %p20 = scmp.eq.s32.totalorder %s19, 0
    %s22 = sadd.s32 %s21, 1
    %s23 = scalar_select %p20, %s21, %s22
    %p26 = pneg %p20
    %p27 = scmp.eq.s32.totalorder %s11, 1
    %p28 = por %p26, %p27
    %p29 = scmp.ne.s32.totalorder %s21, %s24
    %p30 = scmp.eq.s32.totalorder %s11, 0
    %p31 = por %p29, %p30
    %p32 = scmp.ne.s32.totalorder %s21, %s24
    %p33 = scmp.eq.s32.totalorder %s16, 1
    %p34 = por %p32, %p33
    %p35 = scmp.ne.s32.totalorder %s24, %s25
    %p36 = scmp.eq.s32.totalorder %s16, 0
    %p37 = por %p35, %p36
    %p38 = scmp.ne.s32.totalorder %s24, %s25
    %p39 = scmp.eq.s32.totalorder %s17, 1
    %p40 = por %p38, %p39
    %p42 = scmp.ne.s32.totalorder %s25, %s41
    %p43 = scmp.eq.s32.totalorder %s17, 0
    %p44 = por %p42, %p43
    %s46 = sadd.s32 %s45, 1
    %p49 = scmp.eq.s32.totalorder %s11, 1
    %p50 = scmp.ne.s32.totalorder %s45, %s47
    %p51 = scmp.eq.s32.totalorder %s11, 0
    %p52 = por %p50, %p51
    %p53 = scmp.ne.s32.totalorder %s45, %s47
    %p54 = scmp.eq.s32.totalorder %s16, 1
    %p55 = por %p53, %p54
    %p56 = scmp.ne.s32.totalorder %s47, %s48
    %p57 = scmp.eq.s32.totalorder %s16, 0
    %p58 = por %p56, %p57
    %p59 = scmp.ne.s32.totalorder %s47, %s48
    %p60 = scmp.eq.s32.totalorder %s17, 1
    %p61 = por %p59, %p60
    %p63 = scmp.ne.s32.totalorder %s48, %s62
    %p64 = scmp.eq.s32.totalorder %s17, 0
    %p65 = por %p63, %p64
    %s67 = sadd.s32 %s66, 1
    %p70 = scmp.eq.s32.totalorder %s11, 1
    %p71 = scmp.ne.s32.totalorder %s66, %s68
    %p72 = scmp.eq.s32.totalorder %s11, 0
    %p73 = por %p71, %p72
    %p74 = scmp.ne.s32.totalorder %s66, %s68
    %p75 = scmp.eq.s32.totalorder %s16, 1
    %p76 = por %p74, %p75
    %p77 = scmp.ne.s32.totalorder %s68, %s69
    %p78 = scmp.eq.s32.totalorder %s16, 0
    %p79 = por %p77, %p78
    %p80 = scmp.ne.s32.totalorder %s68, %s69
    %p81 = scmp.eq.s32.totalorder %s17, 1
    %p82 = por %p80, %p81
    %p84 = scmp.ne.s32.totalorder %s69, %s83
    %p85 = scmp.eq.s32.totalorder %s17, 0
    %p86 = por %p84, %p85
    %s88 = sadd.s32 %s87, 1
    %p91 = scmp.eq.s32.totalorder %s11, 1
    %p92 = scmp.ne.s32.totalorder %s87, %s89
    %p93 = scmp.eq.s32.totalorder %s11, 0
    %p94 = por %p92, %p93
    %p95 = scmp.ne.s32.totalorder %s87, %s89
    %p96 = scmp.eq.s32.totalorder %s16, 1
    %p97 = por %p95, %p96
    %p98 = scmp.ne.s32.totalorder %s89, %s90
    %p99 = scmp.eq.s32.totalorder %s16, 0
    %p100 = por %p98, %p99
    %p101 = scmp.ne.s32.totalorder %s89, %s90
    %p102 = scmp.eq.s32.totalorder %s17, 1
    %p103 = por %p101, %p102
    %p105 = scmp.ne.s32.totalorder %s90, %s104
    %p106 = scmp.eq.s32.totalorder %s17, 0
    %p107 = por %p105, %p106
    %s109 = sadd.s32 %s108, 1
    %p112 = scmp.eq.s32.totalorder %s11, 1
    %p113 = scmp.ne.s32.totalorder %s108, %s110
    %p114 = scmp.eq.s32.totalorder %s11, 0
    %p115 = por %p113, %p114
    %p116 = scmp.ne.s32.totalorder %s108, %s110
    %p117 = scmp.eq.s32.totalorder %s16, 1
    %p118 = por %p116, %p117
    %p119 = scmp.ne.s32.totalorder %s110, %s111
    %p120 = scmp.eq.s32.totalorder %s16, 0
    %p121 = por %p119, %p120
    %p122 = scmp.ne.s32.totalorder %s110, %s111
    %p123 = scmp.eq.s32.totalorder %s17, 1
    %p124 = por %p122, %p123
    %p126 = scmp.ne.s32.totalorder %s111, %s125
    %p127 = scmp.eq.s32.totalorder %s17, 0
    %p128 = por %p126, %p127
    %s129 = ssub.s32 %s11, %s18
    %p130 = scmp.eq.s32.totalorder %s129, 0
    %s132 = sadd.s32 %s131, 1
    %s133 = scalar_select %p130, %s131, %s132
    %p136 = pneg %p130
    %p137 = scmp.eq.s32.totalorder %s11, 1
    %p138 = por %p136, %p137
    %p139 = scmp.ne.s32.totalorder %s131, %s134
    %p140 = scmp.eq.s32.totalorder %s11, 0
    %p141 = por %p139, %p140
    %p142 = scmp.ne.s32.totalorder %s131, %s134
    %p143 = scmp.eq.s32.totalorder %s16, 1
    %p144 = por %p142, %p143
    %p145 = scmp.ne.s32.totalorder %s134, %s135
    %p146 = scmp.eq.s32.totalorder %s16, 0
    %p147 = por %p145, %p146
    %p148 = scmp.ne.s32.totalorder %s134, %s135
    %p149 = scmp.eq.s32.totalorder %s17, 1
    %p150 = por %p148, %p149
    %p152 = scmp.ne.s32.totalorder %s135, %s151
    %p153 = scmp.eq.s32.totalorder %s17, 0
    %p154 = por %p152, %p153
    %p155 = scmp.le.s32.totalorder 1, %s11
    %p156 = scmp.lt.s32.totalorder %s11, 3
    %p157 = pnand %p155, %p156
    %p158 = pneg %p157
    // Predicated region
    $region9: #{decoder_block_forward.3} parent=5 // pred_check
      _
    $region10: #{decoder_block_forward.3} parent=5 // pred_check_branch
      %160 = sbr.rel (%p157) target = $region12
    $region11: #{decoder_block_forward.3} parent=5 // pred_region
      %s161 = ssub.s32 %s11, 1
      // Predicated region
      $region13: #{decoder_block_forward.3} parent=11 // pred_check
        %p162 = pneg %p58
      $region14: #{decoder_block_forward.3} parent=11 // pred_check_branch
        %164 = sbr.rel (%p162) target = $region16
      $region15: #{decoder_block_forward.3} parent=11 // pred_region
        _
      $region16: #{decoder_block_forward.3} parent=11 // pred_fallthru
        _
      // Predicated region
      $region17: #{decoder_block_forward.3} parent=11 // pred_check
        %p165 = pneg %p79
      $region18: #{decoder_block_forward.3} parent=11 // pred_check_branch
        %167 = sbr.rel (%p165) target = $region20
      $region19: #{decoder_block_forward.3} parent=11 // pred_region
        _
      $region20: #{decoder_block_forward.3} parent=11 // pred_fallthru
        _
      // Predicated region
      $region21: #{decoder_block_forward.3} parent=11 // pred_check
        %p168 = pneg %p100
      $region22: #{decoder_block_forward.3} parent=11 // pred_check_branch
        %170 = sbr.rel (%p168) target = $region24
      $region23: #{decoder_block_forward.3} parent=11 // pred_region
        _
      $region24: #{decoder_block_forward.3} parent=11 // pred_fallthru
        _
      // Predicated region
      $region25: #{decoder_block_forward.3} parent=11 // pred_check
        %p171 = pneg %p121
      $region26: #{decoder_block_forward.3} parent=11 // pred_check_branch
        %173 = sbr.rel (%p171) target = $region28
      $region27: #{decoder_block_forward.3} parent=11 // pred_region
        _
      $region28: #{decoder_block_forward.3} parent=11 // pred_fallthru
        _
    $region12: #{decoder_block_forward.3} parent=5 // pred_fallthru
      _
    %p174 = scmp.lt.s32.totalorder %s11, 2
    // Predicated region
    $region29: #{decoder_block_forward.3} parent=5 // pred_check
      %p175 = pneg %p174
    $region30: #{decoder_block_forward.3} parent=5 // pred_check_branch
      %177 = sbr.rel (%p175) target = $region32
    $region31: #{decoder_block_forward.3} parent=5 // pred_region
      // Predicated region
      $region33: #{decoder_block_forward.3} parent=31 // pred_check
        %p178 = pneg %p31
      $region34: #{decoder_block_forward.3} parent=31 // pred_check_branch
        %180 = sbr.rel (%p178) target = $region36
      $region35: #{decoder_block_forward.3} parent=31 // pred_region
        %p181 = scmp.lt.s32.totalorder %s11, 1
        %s182 = scalar_select %p181, %s11, 1
        %s183 = smul.addr %s182, 54
        %s184 = smul.addr %s183, 8
        %s185 = scalar_lea.vmem %s0, %s184
      $region36: #{decoder_block_forward.3} parent=31 // pred_fallthru
        _
    $region32: #{decoder_block_forward.3} parent=5 // pred_fallthru
      _
    %p186 = scmp.le.s32.totalorder 1, %s11
    %p187 = scmp.lt.s32.totalorder %s11, 3
    %p188 = pnand %p186, %p187
    %p189 = pneg %p188
    // Predicated region
    $region37: #{decoder_block_forward.3} parent=5 // pred_check
      _
    $region38: #{decoder_block_forward.3} parent=5 // pred_check_branch
      %191 = sbr.rel (%p188) target = $region40
    $region39: #{decoder_block_forward.3} parent=5 // pred_region
      %s192 = ssub.s32 %s11, 1
      %p193 = scmp.lt.s32.totalorder %s16, 1
      %s194 = scalar_select %p193, %s16, 1
      %s195 = smul.addr %s194, 54
      %s196 = smul.addr %s195, 8
      %s197 = scalar_lea.vmem %s0, %s196
      %p198 = pneg %p37
      %p199 = pneg %p34
      %p200 = pneg %p58
      %p201 = pneg %p55
      %p202 = pneg %p79
      %p203 = pneg %p76
      %p204 = pneg %p100
      %p205 = pneg %p97
      %p206 = pneg %p121
      %p207 = pneg %p118
      %p208 = pneg %p147
      %p209 = pneg %p144
      %p210 = scmp.lt.s32.totalorder %s16, 1
      %s211 = scalar_select %p210, %s16, 1
      %s212 = smul.addr %s211, 32
      %s213 = smul.addr %s212, 8
      %s214 = scalar_lea.vmem %s5, %s213
      %p215 = scmp.lt.s32.totalorder %s16, 1
      %s216 = scalar_select %p215, %s16, 1
      %s217 = smul.addr %s216, 54
      %s218 = smul.addr %s217, 8
      %s219 = scalar_lea.vmem %s0, %s218
      %p220 = scmp.lt.s32.totalorder %s16, 1
      %s221 = scalar_select %p220, %s16, 1
      %s222 = smul.addr %s221, 32
      %s223 = smul.addr %s222, 8
      %s224 = scalar_lea.vmem %s5, %s223
      %v225 = vld [vmem:[%s219] sm:$0xff]
      %v226 = vld [vmem:[%s219 + $0x8] sm:$0xff]
      %v227 = vld [vmem:[%s219 + $0x18] sm:$0xff]
      %v228 = vld [vmem:[%s219 + $0x20] sm:$0xff]
      %v229 = vld [vmem:[%s219 + $0x30] sm:$0xff]
      %v230 = vld [vmem:[%s219 + $0x38] sm:$0xff]
      %v231 = vld [vmem:[%s219 + $0x48] sm:$0xff]
      %v232 = vld [vmem:[%s219 + $0x50] sm:$0xff]
      %v233 = vld [vmem:[%s219 + $0x60] sm:$0xff]
      %v234 = vld [vmem:[%s219 + $0x68] sm:$0xff]
      %v235 = vld [vmem:[%s219 + $0x78] sm:$0xff]
      %v236 = vld [vmem:[%s219 + $0x80] sm:$0xff]
      %v237 = vld [vmem:[%s219 + $0x90] sm:$0xff]
      %v238 = vld [vmem:[%s219 + $0x98] sm:$0xff]
      %v239 = vld [vmem:[%s219 + $0xa8] sm:$0xff]
      %v240 = vld [vmem:[%s219 + $0xb0] sm:$0xff]
      %v241 = vld [vmem:[%s219 + $0xc0] sm:$0xff]
      %v242 = vld [vmem:[%s219 + $0xc8] sm:$0xff]
      %v243 = vld [vmem:[%s219 + $0xd8] sm:$0xff]
      %v244 = vld [vmem:[%s219 + $0xe0] sm:$0xff]
      %v245 = vld [vmem:[%s219 + $0xf0] sm:$0xff]
      %v246 = vld [vmem:[%s219 + $0xf8] sm:$0xff]
      %v247 = vld [vmem:[%s219 + $0x108] sm:$0xff]
      %v248 = vld [vmem:[%s219 + $0x110] sm:$0xff]
      %v249 = vld [vmem:[%s219 + $0x120] sm:$0xff]
      %v250 = vld [vmem:[%s219 + $0x128] sm:$0xff]
      %v251 = vld [vmem:[%s219 + $0x138] sm:$0xff]
      %v252 = vld [vmem:[%s219 + $0x140] sm:$0xff]
      %v253 = vld [vmem:[%s219 + $0x150] sm:$0xff]
      %v254 = vld [vmem:[%s219 + $0x158] sm:$0xff]
      %v255 = vld [vmem:[%s219 + $0x168] sm:$0xff]
      %v256 = vld [vmem:[%s219 + $0x170] sm:$0xff]
      %vm257 = vcmask 97280
      %258 = vst.msk [vmem:[#allocation2] sm:$0xff] %vm257, %v225
      %259 = vst.msk [vmem:[#allocation2 + $0x8] sm:$0xff] %vm257, %v226
      %260 = vst.msk [vmem:[#allocation2 + $0x10] sm:$0xff] %vm257, %v227
      %261 = vst.msk [vmem:[#allocation2 + $0x18] sm:$0xff] %vm257, %v228
      %262 = vst.msk [vmem:[#allocation2 + $0x20] sm:$0xff] %vm257, %v229
      %263 = vst.msk [vmem:[#allocation2 + $0x28] sm:$0xff] %vm257, %v230
      %264 = vst.msk [vmem:[#allocation2 + $0x30] sm:$0xff] %vm257, %v231
      %265 = vst.msk [vmem:[#allocation2 + $0x38] sm:$0xff] %vm257, %v232
      %266 = vst.msk [vmem:[#allocation2 + $0x40] sm:$0xff] %vm257, %v233
      %267 = vst.msk [vmem:[#allocation2 + $0x48] sm:$0xff] %vm257, %v234
      %268 = vst.msk [vmem:[#allocation2 + $0x50] sm:$0xff] %vm257, %v235
      %269 = vst.msk [vmem:[#allocation2 + $0x58] sm:$0xff] %vm257, %v236
      %270 = vst.msk [vmem:[#allocation2 + $0x60] sm:$0xff] %vm257, %v237
      %271 = vst.msk [vmem:[#allocation2 + $0x68] sm:$0xff] %vm257, %v238
      %272 = vst.msk [vmem:[#allocation2 + $0x70] sm:$0xff] %vm257, %v239
      %273 = vst.msk [vmem:[#allocation2 + $0x78] sm:$0xff] %vm257, %v240
      %274 = vst.msk [vmem:[#allocation2 + $0x80] sm:$0xff] %vm257, %v241
      %275 = vst.msk [vmem:[#allocation2 + $0x88] sm:$0xff] %vm257, %v242
      %276 = vst.msk [vmem:[#allocation2 + $0x90] sm:$0xff] %vm257, %v243
      %277 = vst.msk [vmem:[#allocation2 + $0x98] sm:$0xff] %vm257, %v244
      %278 = vst.msk [vmem:[#allocation2 + $0xa0] sm:$0xff] %vm257, %v245
      %279 = vst.msk [vmem:[#allocation2 + $0xa8] sm:$0xff] %vm257, %v246
      %280 = vst.msk [vmem:[#allocation2 + $0xb0] sm:$0xff] %vm257, %v247
      %281 = vst.msk [vmem:[#allocation2 + $0xb8] sm:$0xff] %vm257, %v248
      %282 = vst.msk [vmem:[#allocation2 + $0xc0] sm:$0xff] %vm257, %v249
      %283 = vst.msk [vmem:[#allocation2 + $0xc8] sm:$0xff] %vm257, %v250
      %284 = vst.msk [vmem:[#allocation2 + $0xd0] sm:$0xff] %vm257, %v251
      %285 = vst.msk [vmem:[#allocation2 + $0xd8] sm:$0xff] %vm257, %v252
      %286 = vst.msk [vmem:[#allocation2 + $0xe0] sm:$0xff] %vm257, %v253
      %287 = vst.msk [vmem:[#allocation2 + $0xe8] sm:$0xff] %vm257, %v254
      %288 = vst.msk [vmem:[#allocation2 + $0xf0] sm:$0xff] %vm257, %v255
      %289 = vst.msk [vmem:[#allocation2 + $0xf8] sm:$0xff] %vm257, %v256
      %v290 = vld [vmem:[%s219 + $0x1] sm:$0xff]
      %v291 = vld [vmem:[%s219 + $0x9] sm:$0xff]
      %v292 = vld [vmem:[%s219 + $0x19] sm:$0xff]
      %v293 = vld [vmem:[%s219 + $0x21] sm:$0xff]
      %v294 = vld [vmem:[%s219 + $0x31] sm:$0xff]
      %v295 = vld [vmem:[%s219 + $0x39] sm:$0xff]
      %v296 = vld [vmem:[%s219 + $0x49] sm:$0xff]
      %v297 = vld [vmem:[%s219 + $0x51] sm:$0xff]
      %v298 = vld [vmem:[%s219 + $0x61] sm:$0xff]
      %v299 = vld [vmem:[%s219 + $0x69] sm:$0xff]
      %v300 = vld [vmem:[%s219 + $0x79] sm:$0xff]
      %v301 = vld [vmem:[%s219 + $0x81] sm:$0xff]
      %v302 = vld [vmem:[%s219 + $0x91] sm:$0xff]
      %v303 = vld [vmem:[%s219 + $0x99] sm:$0xff]
      %v304 = vld [vmem:[%s219 + $0xa9] sm:$0xff]
      %v305 = vld [vmem:[%s219 + $0xb1] sm:$0xff]
      %v306 = vld [vmem:[%s219 + $0xc1] sm:$0xff]
      %v307 = vld [vmem:[%s219 + $0xc9] sm:$0xff]
      %v308 = vld [vmem:[%s219 + $0xd9] sm:$0xff]
      %v309 = vld [vmem:[%s219 + $0xe1] sm:$0xff]
      %v310 = vld [vmem:[%s219 + $0xf1] sm:$0xff]
      %v311 = vld [vmem:[%s219 + $0xf9] sm:$0xff]
      %v312 = vld [vmem:[%s219 + $0x109] sm:$0xff]
      %v313 = vld [vmem:[%s219 + $0x111] sm:$0xff]
      %v314 = vld [vmem:[%s219 + $0x121] sm:$0xff]
      %v315 = vld [vmem:[%s219 + $0x129] sm:$0xff]
      %v316 = vld [vmem:[%s219 + $0x139] sm:$0xff]
      %v317 = vld [vmem:[%s219 + $0x141] sm:$0xff]
      %v318 = vld [vmem:[%s219 + $0x151] sm:$0xff]
      %v319 = vld [vmem:[%s219 + $0x159] sm:$0xff]
      %v320 = vld [vmem:[%s219 + $0x169] sm:$0xff]
      %v321 = vld [vmem:[%s219 + $0x171] sm:$0xff]
      %354 = vrot.lane.b32.xlu0 %v290, 12
      %v355 = vpop.permute.xlu0 %354
      %356 = vrot.lane.b32.xlu0 %v291, 12
      %v357 = vpop.permute.xlu0 %356
      %358 = vrot.lane.b32.xlu0 %v292, 12
      %v359 = vpop.permute.xlu0 %358
      %360 = vrot.lane.b32.xlu0 %v293, 12
      %v361 = vpop.permute.xlu0 %360
      %362 = vrot.lane.b32.xlu0 %v294, 12
      %v363 = vpop.permute.xlu0 %362
      %364 = vrot.lane.b32.xlu0 %v295, 12
      %v365 = vpop.permute.xlu0 %364
      %366 = vrot.lane.b32.xlu0 %v296, 12
      %v367 = vpop.permute.xlu0 %366
      %368 = vrot.lane.b32.xlu0 %v297, 12
      %v369 = vpop.permute.xlu0 %368
      %370 = vrot.lane.b32.xlu0 %v298, 12
      %v371 = vpop.permute.xlu0 %370
      %372 = vrot.lane.b32.xlu0 %v299, 12
      %v373 = vpop.permute.xlu0 %372
      %374 = vrot.lane.b32.xlu0 %v300, 12
      %v375 = vpop.permute.xlu0 %374
      %376 = vrot.lane.b32.xlu0 %v301, 12
      %v377 = vpop.permute.xlu0 %376
      %378 = vrot.lane.b32.xlu0 %v302, 12
      %v379 = vpop.permute.xlu0 %378
      %380 = vrot.lane.b32.xlu0 %v303, 12
      %v381 = vpop.permute.xlu0 %380
      %382 = vrot.lane.b32.xlu0 %v304, 12
      %v383 = vpop.permute.xlu0 %382
      %384 = vrot.lane.b32.xlu0 %v305, 12
      %v385 = vpop.permute.xlu0 %384
      %386 = vrot.lane.b32.xlu0 %v306, 12
      %v387 = vpop.permute.xlu0 %386
      %388 = vrot.lane.b32.xlu0 %v307, 12
      %v389 = vpop.permute.xlu0 %388
      %390 = vrot.lane.b32.xlu0 %v308, 12
      %v391 = vpop.permute.xlu0 %390
      %392 = vrot.lane.b32.xlu0 %v309, 12
      %v393 = vpop.permute.xlu0 %392
      %394 = vrot.lane.b32.xlu0 %v310, 12
      %v395 = vpop.permute.xlu0 %394
      %396 = vrot.lane.b32.xlu0 %v311, 12
      %v397 = vpop.permute.xlu0 %396
      %398 = vrot.lane.b32.xlu0 %v312, 12
      %v399 = vpop.permute.xlu0 %398
      %400 = vrot.lane.b32.xlu0 %v313, 12
      %v401 = vpop.permute.xlu0 %400
      %402 = vrot.lane.b32.xlu0 %v314, 12
      %v403 = vpop.permute.xlu0 %402
      %404 = vrot.lane.b32.xlu0 %v315, 12
      %v405 = vpop.permute.xlu0 %404
      %406 = vrot.lane.b32.xlu0 %v316, 12
      %v407 = vpop.permute.xlu0 %406
      %408 = vrot.lane.b32.xlu0 %v317, 12
      %v409 = vpop.permute.xlu0 %408
      %410 = vrot.lane.b32.xlu0 %v318, 12
      %v411 = vpop.permute.xlu0 %410
      %412 = vrot.lane.b32.xlu0 %v319, 12
      %v413 = vpop.permute.xlu0 %412
      %414 = vrot.lane.b32.xlu0 %v320, 12
      %v415 = vpop.permute.xlu0 %414
      %416 = vrot.lane.b32.xlu0 %v321, 12
      %v417 = vpop.permute.xlu0 %416
      %vm450 = vcmask 195680
      %451 = vst.msk [vmem:[#allocation2] sm:$0xff] %vm450, %v355
      %452 = vst.msk [vmem:[#allocation2 + $0x8] sm:$0xff] %vm450, %v357
      %453 = vst.msk [vmem:[#allocation2 + $0x10] sm:$0xff] %vm450, %v359
      %454 = vst.msk [vmem:[#allocation2 + $0x18] sm:$0xff] %vm450, %v361
      %455 = vst.msk [vmem:[#allocation2 + $0x20] sm:$0xff] %vm450, %v363
      %456 = vst.msk [vmem:[#allocation2 + $0x28] sm:$0xff] %vm450, %v365
      %457 = vst.msk [vmem:[#allocation2 + $0x30] sm:$0xff] %vm450, %v367
      %458 = vst.msk [vmem:[#allocation2 + $0x38] sm:$0xff] %vm450, %v369
      %459 = vst.msk [vmem:[#allocation2 + $0x40] sm:$0xff] %vm450, %v371
      %460 = vst.msk [vmem:[#allocation2 + $0x48] sm:$0xff] %vm450, %v373
      %461 = vst.msk [vmem:[#allocation2 + $0x50] sm:$0xff] %vm450, %v375
      %462 = vst.msk [vmem:[#allocation2 + $0x58] sm:$0xff] %vm450, %v377
      %463 = vst.msk [vmem:[#allocation2 + $0x60] sm:$0xff] %vm450, %v379
      %464 = vst.msk [vmem:[#allocation2 + $0x68] sm:$0xff] %vm450, %v381
      %465 = vst.msk [vmem:[#allocation2 + $0x70] sm:$0xff] %vm450, %v383
      %466 = vst.msk [vmem:[#allocation2 + $0x78] sm:$0xff] %vm450, %v385
      %467 = vst.msk [vmem:[#allocation2 + $0x80] sm:$0xff] %vm450, %v387
      %468 = vst.msk [vmem:[#allocation2 + $0x88] sm:$0xff] %vm450, %v389
      %469 = vst.msk [vmem:[#allocation2 + $0x90] sm:$0xff] %vm450, %v391
      %470 = vst.msk [vmem:[#allocation2 + $0x98] sm:$0xff] %vm450, %v393
      %471 = vst.msk [vmem:[#allocation2 + $0xa0] sm:$0xff] %vm450, %v395
      %472 = vst.msk [vmem:[#allocation2 + $0xa8] sm:$0xff] %vm450, %v397
      %473 = vst.msk [vmem:[#allocation2 + $0xb0] sm:$0xff] %vm450, %v399
      %474 = vst.msk [vmem:[#allocation2 + $0xb8] sm:$0xff] %vm450, %v401
      %475 = vst.msk [vmem:[#allocation2 + $0xc0] sm:$0xff] %vm450, %v403
      %476 = vst.msk [vmem:[#allocation2 + $0xc8] sm:$0xff] %vm450, %v405
      %477 = vst.msk [vmem:[#allocation2 + $0xd0] sm:$0xff] %vm450, %v407
      %478 = vst.msk [vmem:[#allocation2 + $0xd8] sm:$0xff] %vm450, %v409
      %479 = vst.msk [vmem:[#allocation2 + $0xe0] sm:$0xff] %vm450, %v411
      %480 = vst.msk [vmem:[#allocation2 + $0xe8] sm:$0xff] %vm450, %v413
      %481 = vst.msk [vmem:[#allocation2 + $0xf0] sm:$0xff] %vm450, %v415
      %482 = vst.msk [vmem:[#allocation2 + $0xf8] sm:$0xff] %vm450, %v417
      %v483 = vld [vmem:[%s219 + $0x2] sm:$0xff]
      %v484 = vld [vmem:[%s219 + $0xa] sm:$0xff]
      %v485 = vld [vmem:[%s219 + $0x1a] sm:$0xff]
      %v486 = vld [vmem:[%s219 + $0x22] sm:$0xff]
      %v487 = vld [vmem:[%s219 + $0x32] sm:$0xff]
      %v488 = vld [vmem:[%s219 + $0x3a] sm:$0xff]
      %v489 = vld [vmem:[%s219 + $0x4a] sm:$0xff]
      %v490 = vld [vmem:[%s219 + $0x52] sm:$0xff]
      %v491 = vld [vmem:[%s219 + $0x62] sm:$0xff]
      %v492 = vld [vmem:[%s219 + $0x6a] sm:$0xff]
      %v493 = vld [vmem:[%s219 + $0x7a] sm:$0xff]
      %v494 = vld [vmem:[%s219 + $0x82] sm:$0xff]
      %v495 = vld [vmem:[%s219 + $0x92] sm:$0xff]
      %v496 = vld [vmem:[%s219 + $0x9a] sm:$0xff]
      %v497 = vld [vmem:[%s219 + $0xaa] sm:$0xff]
      %v498 = vld [vmem:[%s219 + $0xb2] sm:$0xff]
      %v499 = vld [vmem:[%s219 + $0xc2] sm:$0xff]
      %v500 = vld [vmem:[%s219 + $0xca] sm:$0xff]
      %v501 = vld [vmem:[%s219 + $0xda] sm:$0xff]
      %v502 = vld [vmem:[%s219 + $0xe2] sm:$0xff]
      %v503 = vld [vmem:[%s219 + $0xf2] sm:$0xff]
      %v504 = vld [vmem:[%s219 + $0xfa] sm:$0xff]
      %v505 = vld [vmem:[%s219 + $0x10a] sm:$0xff]
      %v506 = vld [vmem:[%s219 + $0x112] sm:$0xff]
      %v507 = vld [vmem:[%s219 + $0x122] sm:$0xff]
      %v508 = vld [vmem:[%s219 + $0x12a] sm:$0xff]
      %v509 = vld [vmem:[%s219 + $0x13a] sm:$0xff]
      %v510 = vld [vmem:[%s219 + $0x142] sm:$0xff]
      %v511 = vld [vmem:[%s219 + $0x152] sm:$0xff]
      %v512 = vld [vmem:[%s219 + $0x15a] sm:$0xff]
      %v513 = vld [vmem:[%s219 + $0x16a] sm:$0xff]
      %v514 = vld [vmem:[%s219 + $0x172] sm:$0xff]
      %547 = vrot.lane.b32.xlu0 %v483, 24
      %v548 = vpop.permute.xlu0 %547
      %549 = vrot.lane.b32.xlu0 %v484, 24
      %v550 = vpop.permute.xlu0 %549
      %551 = vrot.lane.b32.xlu0 %v485, 24
      %v552 = vpop.permute.xlu0 %551
      %553 = vrot.lane.b32.xlu0 %v486, 24
      %v554 = vpop.permute.xlu0 %553
      %555 = vrot.lane.b32.xlu0 %v487, 24
      %v556 = vpop.permute.xlu0 %555
      %557 = vrot.lane.b32.xlu0 %v488, 24
      %v558 = vpop.permute.xlu0 %557
      %559 = vrot.lane.b32.xlu0 %v489, 24
      %v560 = vpop.permute.xlu0 %559
      %561 = vrot.lane.b32.xlu0 %v490, 24
      %v562 = vpop.permute.xlu0 %561
      %563 = vrot.lane.b32.xlu0 %v491, 24
      %v564 = vpop.permute.xlu0 %563
      %565 = vrot.lane.b32.xlu0 %v492, 24
      %v566 = vpop.permute.xlu0 %565
      %567 = vrot.lane.b32.xlu0 %v493, 24
      %v568 = vpop.permute.xlu0 %567
      %569 = vrot.lane.b32.xlu0 %v494, 24
      %v570 = vpop.permute.xlu0 %569
      %571 = vrot.lane.b32.xlu0 %v495, 24
      %v572 = vpop.permute.xlu0 %571
      %573 = vrot.lane.b32.xlu0 %v496, 24
      %v574 = vpop.permute.xlu0 %573
      %575 = vrot.lane.b32.xlu0 %v497, 24
      %v576 = vpop.permute.xlu0 %575
      %577 = vrot.lane.b32.xlu0 %v498, 24
      %v578 = vpop.permute.xlu0 %577
      %579 = vrot.lane.b32.xlu0 %v499, 24
      %v580 = vpop.permute.xlu0 %579
      %581 = vrot.lane.b32.xlu0 %v500, 24
      %v582 = vpop.permute.xlu0 %581
      %583 = vrot.lane.b32.xlu0 %v501, 24
      %v584 = vpop.permute.xlu0 %583
      %585 = vrot.lane.b32.xlu0 %v502, 24
      %v586 = vpop.permute.xlu0 %585
      %587 = vrot.lane.b32.xlu0 %v503, 24
      %v588 = vpop.permute.xlu0 %587
      %589 = vrot.lane.b32.xlu0 %v504, 24
      %v590 = vpop.permute.xlu0 %589
      %591 = vrot.lane.b32.xlu0 %v505, 24
      %v592 = vpop.permute.xlu0 %591
      %593 = vrot.lane.b32.xlu0 %v506, 24
      %v594 = vpop.permute.xlu0 %593
      %595 = vrot.lane.b32.xlu0 %v507, 24
      %v596 = vpop.permute.xlu0 %595
      %597 = vrot.lane.b32.xlu0 %v508, 24
      %v598 = vpop.permute.xlu0 %597
      %599 = vrot.lane.b32.xlu0 %v509, 24
      %v600 = vpop.permute.xlu0 %599
      %601 = vrot.lane.b32.xlu0 %v510, 24
      %v602 = vpop.permute.xlu0 %601
      %603 = vrot.lane.b32.xlu0 %v511, 24
      %v604 = vpop.permute.xlu0 %603
      %605 = vrot.lane.b32.xlu0 %v512, 24
      %v606 = vpop.permute.xlu0 %605
      %607 = vrot.lane.b32.xlu0 %v513, 24
      %v608 = vpop.permute.xlu0 %607
      %609 = vrot.lane.b32.xlu0 %v514, 24
      %v610 = vpop.permute.xlu0 %609
      %vm643 = vcmask 294080
      %644 = vst.msk [vmem:[#allocation2] sm:$0xff] %vm643, %v548
      %645 = vst.msk [vmem:[#allocation2 + $0x8] sm:$0xff] %vm643, %v550
      %646 = vst.msk [vmem:[#allocation2 + $0x10] sm:$0xff] %vm643, %v552
      %647 = vst.msk [vmem:[#allocation2 + $0x18] sm:$0xff] %vm643, %v554
      %648 = vst.msk [vmem:[#allocation2 + $0x20] sm:$0xff] %vm643, %v556
      %649 = vst.msk [vmem:[#allocation2 + $0x28] sm:$0xff] %vm643, %v558
      %650 = vst.msk [vmem:[#allocation2 + $0x30] sm:$0xff] %vm643, %v560
      %651 = vst.msk [vmem:[#allocation2 + $0x38] sm:$0xff] %vm643, %v562
      %652 = vst.msk [vmem:[#allocation2 + $0x40] sm:$0xff] %vm643, %v564
      %653 = vst.msk [vmem:[#allocation2 + $0x48] sm:$0xff] %vm643, %v566
      %654 = vst.msk [vmem:[#allocation2 + $0x50] sm:$0xff] %vm643, %v568
      %655 = vst.msk [vmem:[#allocation2 + $0x58] sm:$0xff] %vm643, %v570
      %656 = vst.msk [vmem:[#allocation2 + $0x60] sm:$0xff] %vm643, %v572
      %657 = vst.msk [vmem:[#allocation2 + $0x68] sm:$0xff] %vm643, %v574
      %658 = vst.msk [vmem:[#allocation2 + $0x70] sm:$0xff] %vm643, %v576
      %659 = vst.msk [vmem:[#allocation2 + $0x78] sm:$0xff] %vm643, %v578
      %660 = vst.msk [vmem:[#allocation2 + $0x80] sm:$0xff] %vm643, %v580
      %661 = vst.msk [vmem:[#allocation2 + $0x88] sm:$0xff] %vm643, %v582
      %662 = vst.msk [vmem:[#allocation2 + $0x90] sm:$0xff] %vm643, %v584
      %663 = vst.msk [vmem:[#allocation2 + $0x98] sm:$0xff] %vm643, %v586
      %664 = vst.msk [vmem:[#allocation2 + $0xa0] sm:$0xff] %vm643, %v588
      %665 = vst.msk [vmem:[#allocation2 + $0xa8] sm:$0xff] %vm643, %v590
      %666 = vst.msk [vmem:[#allocation2 + $0xb0] sm:$0xff] %vm643, %v592
      %667 = vst.msk [vmem:[#allocation2 + $0xb8] sm:$0xff] %vm643, %v594
      %668 = vst.msk [vmem:[#allocation2 + $0xc0] sm:$0xff] %vm643, %v596
      %669 = vst.msk [vmem:[#allocation2 + $0xc8] sm:$0xff] %vm643, %v598
      %670 = vst.msk [vmem:[#allocation2 + $0xd0] sm:$0xff] %vm643, %v600
      %671 = vst.msk [vmem:[#allocation2 + $0xd8] sm:$0xff] %vm643, %v602
      %672 = vst.msk [vmem:[#allocation2 + $0xe0] sm:$0xff] %vm643, %v604
      %673 = vst.msk [vmem:[#allocation2 + $0xe8] sm:$0xff] %vm643, %v606
      %674 = vst.msk [vmem:[#allocation2 + $0xf0] sm:$0xff] %vm643, %v608
      %675 = vst.msk [vmem:[#allocation2 + $0xf8] sm:$0xff] %vm643, %v610
      %s676 = scalar_lea.vmem %s219, 24
      %v677 = vld [vmem:[%s676] sm:$0xff]
      %v678 = vld [vmem:[%s676 + $0x8] sm:$0xff]
      %v679 = vld [vmem:[%s676 + $0x18] sm:$0xff]
      %v680 = vld [vmem:[%s676 + $0x20] sm:$0xff]
      %v681 = vld [vmem:[%s676 + $0x30] sm:$0xff]
      %v682 = vld [vmem:[%s676 + $0x38] sm:$0xff]
      %v683 = vld [vmem:[%s676 + $0x48] sm:$0xff]
      %v684 = vld [vmem:[%s676 + $0x50] sm:$0xff]
      %v685 = vld [vmem:[%s676 + $0x60] sm:$0xff]
      %v686 = vld [vmem:[%s676 + $0x68] sm:$0xff]
      %v687 = vld [vmem:[%s676 + $0x78] sm:$0xff]
      %v688 = vld [vmem:[%s676 + $0x80] sm:$0xff]
      %v689 = vld [vmem:[%s676 + $0x90] sm:$0xff]
      %v690 = vld [vmem:[%s676 + $0x98] sm:$0xff]
      %v691 = vld [vmem:[%s676 + $0xa8] sm:$0xff]
      %v692 = vld [vmem:[%s676 + $0xb0] sm:$0xff]
      %v693 = vld [vmem:[%s676 + $0xc0] sm:$0xff]
      %v694 = vld [vmem:[%s676 + $0xc8] sm:$0xff]
      %v695 = vld [vmem:[%s676 + $0xd8] sm:$0xff]
      %v696 = vld [vmem:[%s676 + $0xe0] sm:$0xff]
      %v697 = vld [vmem:[%s676 + $0xf0] sm:$0xff]
      %v698 = vld [vmem:[%s676 + $0xf8] sm:$0xff]
      %v699 = vld [vmem:[%s676 + $0x108] sm:$0xff]
      %v700 = vld [vmem:[%s676 + $0x110] sm:$0xff]
      %v701 = vld [vmem:[%s676 + $0x120] sm:$0xff]
      %v702 = vld [vmem:[%s676 + $0x128] sm:$0xff]
      %v703 = vld [vmem:[%s676 + $0x138] sm:$0xff]
      %v704 = vld [vmem:[%s676 + $0x140] sm:$0xff]
      %v705 = vld [vmem:[%s676 + $0x150] sm:$0xff]
      %v706 = vld [vmem:[%s676 + $0x158] sm:$0xff]
      %v707 = vld [vmem:[%s676 + $0x168] sm:$0xff]
      %v708 = vld [vmem:[%s676 + $0x170] sm:$0xff]
      %741 = vrot.lane.b32.xlu0 %v677, 36
      %v742 = vpop.permute.xlu0 %741
      %743 = vrot.lane.b32.xlu0 %v678, 36
      %v744 = vpop.permute.xlu0 %743
      %745 = vrot.lane.b32.xlu0 %v679, 36
      %v746 = vpop.permute.xlu0 %745
      %747 = vrot.lane.b32.xlu0 %v680, 36
      %v748 = vpop.permute.xlu0 %747
      %749 = vrot.lane.b32.xlu0 %v681, 36
      %v750 = vpop.permute.xlu0 %749
      %751 = vrot.lane.b32.xlu0 %v682, 36
      %v752 = vpop.permute.xlu0 %751
      %753 = vrot.lane.b32.xlu0 %v683, 36
      %v754 = vpop.permute.xlu0 %753
      %755 = vrot.lane.b32.xlu0 %v684, 36
      %v756 = vpop.permute.xlu0 %755
      %757 = vrot.lane.b32.xlu0 %v685, 36
      %v758 = vpop.permute.xlu0 %757
      %759 = vrot.lane.b32.xlu0 %v686, 36
      %v760 = vpop.permute.xlu0 %759
      %761 = vrot.lane.b32.xlu0 %v687, 36
      %v762 = vpop.permute.xlu0 %761
      %763 = vrot.lane.b32.xlu0 %v688, 36
      %v764 = vpop.permute.xlu0 %763
      %765 = vrot.lane.b32.xlu0 %v689, 36
      %v766 = vpop.permute.xlu0 %765
      %767 = vrot.lane.b32.xlu0 %v690, 36
      %v768 = vpop.permute.xlu0 %767
      %769 = vrot.lane.b32.xlu0 %v691, 36
      %v770 = vpop.permute.xlu0 %769
      %771 = vrot.lane.b32.xlu0 %v692, 36
      %v772 = vpop.permute.xlu0 %771
      %773 = vrot.lane.b32.xlu0 %v693, 36
      %v774 = vpop.permute.xlu0 %773
      %775 = vrot.lane.b32.xlu0 %v694, 36
      %v776 = vpop.permute.xlu0 %775
      %777 = vrot.lane.b32.xlu0 %v695, 36
      %v778 = vpop.permute.xlu0 %777
      %779 = vrot.lane.b32.xlu0 %v696, 36
      %v780 = vpop.permute.xlu0 %779
      %781 = vrot.lane.b32.xlu0 %v697, 36
      %v782 = vpop.permute.xlu0 %781
      %783 = vrot.lane.b32.xlu0 %v698, 36
      %v784 = vpop.permute.xlu0 %783
      %785 = vrot.lane.b32.xlu0 %v699, 36
      %v786 = vpop.permute.xlu0 %785
      %787 = vrot.lane.b32.xlu0 %v700, 36
      %v788 = vpop.permute.xlu0 %787
      %789 = vrot.lane.b32.xlu0 %v701, 36
      %v790 = vpop.permute.xlu0 %789
      %791 = vrot.lane.b32.xlu0 %v702, 36
      %v792 = vpop.permute.xlu0 %791
      %793 = vrot.lane.b32.xlu0 %v703, 36
      %v794 = vpop.permute.xlu0 %793
      %795 = vrot.lane.b32.xlu0 %v704, 36
      %v796 = vpop.permute.xlu0 %795
      %797 = vrot.lane.b32.xlu0 %v705, 36
      %v798 = vpop.permute.xlu0 %797
      %799 = vrot.lane.b32.xlu0 %v706, 36
      %v800 = vpop.permute.xlu0 %799
      %801 = vrot.lane.b32.xlu0 %v707, 36
      %v802 = vpop.permute.xlu0 %801
      %803 = vrot.lane.b32.xlu0 %v708, 36
      %v804 = vpop.permute.xlu0 %803
      %vm837 = vcmask 392480
      %838 = vst.msk [vmem:[#allocation2] sm:$0xff] %vm837, %v742
      %839 = vst.msk [vmem:[#allocation2 + $0x8] sm:$0xff] %vm837, %v744
      %840 = vst.msk [vmem:[#allocation2 + $0x10] sm:$0xff] %vm837, %v746
      %841 = vst.msk [vmem:[#allocation2 + $0x18] sm:$0xff] %vm837, %v748
      %842 = vst.msk [vmem:[#allocation2 + $0x20] sm:$0xff] %vm837, %v750
      %843 = vst.msk [vmem:[#allocation2 + $0x28] sm:$0xff] %vm837, %v752
      %844 = vst.msk [vmem:[#allocation2 + $0x30] sm:$0xff] %vm837, %v754
      %845 = vst.msk [vmem:[#allocation2 + $0x38] sm:$0xff] %vm837, %v756
      %846 = vst.msk [vmem:[#allocation2 + $0x40] sm:$0xff] %vm837, %v758
      %847 = vst.msk [vmem:[#allocation2 + $0x48] sm:$0xff] %vm837, %v760
      %848 = vst.msk [vmem:[#allocation2 + $0x50] sm:$0xff] %vm837, %v762
      %849 = vst.msk [vmem:[#allocation2 + $0x58] sm:$0xff] %vm837, %v764
      %850 = vst.msk [vmem:[#allocation2 + $0x60] sm:$0xff] %vm837, %v766
      %851 = vst.msk [vmem:[#allocation2 + $0x68] sm:$0xff] %vm837, %v768
      %852 = vst.msk [vmem:[#allocation2 + $0x70] sm:$0xff] %vm837, %v770
      %853 = vst.msk [vmem:[#allocation2 + $0x78] sm:$0xff] %vm837, %v772
      %854 = vst.msk [vmem:[#allocation2 + $0x80] sm:$0xff] %vm837, %v774
      %855 = vst.msk [vmem:[#allocation2 + $0x88] sm:$0xff] %vm837, %v776
      %856 = vst.msk [vmem:[#allocation2 + $0x90] sm:$0xff] %vm837, %v778
      %857 = vst.msk [vmem:[#allocation2 + $0x98] sm:$0xff] %vm837, %v780
      %858 = vst.msk [vmem:[#allocation2 + $0xa0] sm:$0xff] %vm837, %v782
      %859 = vst.msk [vmem:[#allocation2 + $0xa8] sm:$0xff] %vm837, %v784
      %860 = vst.msk [vmem:[#allocation2 + $0xb0] sm:$0xff] %vm837, %v786
      %861 = vst.msk [vmem:[#allocation2 + $0xb8] sm:$0xff] %vm837, %v788
      %862 = vst.msk [vmem:[#allocation2 + $0xc0] sm:$0xff] %vm837, %v790
      %863 = vst.msk [vmem:[#allocation2 + $0xc8] sm:$0xff] %vm837, %v792
      %864 = vst.msk [vmem:[#allocation2 + $0xd0] sm:$0xff] %vm837, %v794
      %865 = vst.msk [vmem:[#allocation2 + $0xd8] sm:$0xff] %vm837, %v796
      %866 = vst.msk [vmem:[#allocation2 + $0xe0] sm:$0xff] %vm837, %v798
      %867 = vst.msk [vmem:[#allocation2 + $0xe8] sm:$0xff] %vm837, %v800
      %868 = vst.msk [vmem:[#allocation2 + $0xf0] sm:$0xff] %vm837, %v802
      %869 = vst.msk [vmem:[#allocation2 + $0xf8] sm:$0xff] %vm837, %v804
      %v870 = vld [vmem:[%s676 + $0x1] sm:$0xff]
      %v871 = vld [vmem:[%s676 + $0x9] sm:$0xff]
      %v872 = vld [vmem:[%s676 + $0x19] sm:$0xff]
      %v873 = vld [vmem:[%s676 + $0x21] sm:$0xff]
      %v874 = vld [vmem:[%s676 + $0x31] sm:$0xff]
      %v875 = vld [vmem:[%s676 + $0x39] sm:$0xff]
      %v876 = vld [vmem:[%s676 + $0x49] sm:$0xff]
      %v877 = vld [vmem:[%s676 + $0x51] sm:$0xff]
      %v878 = vld [vmem:[%s676 + $0x61] sm:$0xff]
      %v879 = vld [vmem:[%s676 + $0x69] sm:$0xff]
      %v880 = vld [vmem:[%s676 + $0x79] sm:$0xff]
      %v881 = vld [vmem:[%s676 + $0x81] sm:$0xff]
      %v882 = vld [vmem:[%s676 + $0x91] sm:$0xff]
      %v883 = vld [vmem:[%s676 + $0x99] sm:$0xff]
      %v884 = vld [vmem:[%s676 + $0xa9] sm:$0xff]
      %v885 = vld [vmem:[%s676 + $0xb1] sm:$0xff]
      %v886 = vld [vmem:[%s676 + $0xc1] sm:$0xff]
      %v887 = vld [vmem:[%s676 + $0xc9] sm:$0xff]
      %v888 = vld [vmem:[%s676 + $0xd9] sm:$0xff]
      %v889 = vld [vmem:[%s676 + $0xe1] sm:$0xff]
      %v890 = vld [vmem:[%s676 + $0xf1] sm:$0xff]
      %v891 = vld [vmem:[%s676 + $0xf9] sm:$0xff]
      %v892 = vld [vmem:[%s676 + $0x109] sm:$0xff]
      %v893 = vld [vmem:[%s676 + $0x111] sm:$0xff]
      %v894 = vld [vmem:[%s676 + $0x121] sm:$0xff]
      %v895 = vld [vmem:[%s676 + $0x129] sm:$0xff]
      %v896 = vld [vmem:[%s676 + $0x139] sm:$0xff]
      %v897 = vld [vmem:[%s676 + $0x141] sm:$0xff]
      %v898 = vld [vmem:[%s676 + $0x151] sm:$0xff]
      %v899 = vld [vmem:[%s676 + $0x159] sm:$0xff]
      %v900 = vld [vmem:[%s676 + $0x169] sm:$0xff]
      %v901 = vld [vmem:[%s676 + $0x171] sm:$0xff]
      %934 = vrot.lane.b32.xlu0 %v870, 48
      %v935 = vpop.permute.xlu0 %934
      %936 = vrot.lane.b32.xlu0 %v871, 48
      %v937 = vpop.permute.xlu0 %936
      %938 = vrot.lane.b32.xlu0 %v872, 48
      %v939 = vpop.permute.xlu0 %938
      %940 = vrot.lane.b32.xlu0 %v873, 48
      %v941 = vpop.permute.xlu0 %940
      %942 = vrot.lane.b32.xlu0 %v874, 48
      %v943 = vpop.permute.xlu0 %942
      %944 = vrot.lane.b32.xlu0 %v875, 48
      %v945 = vpop.permute.xlu0 %944
      %946 = vrot.lane.b32.xlu0 %v876, 48
      %v947 = vpop.permute.xlu0 %946
      %948 = vrot.lane.b32.xlu0 %v877, 48
      %v949 = vpop.permute.xlu0 %948
      %950 = vrot.lane.b32.xlu0 %v878, 48
      %v951 = vpop.permute.xlu0 %950
      %952 = vrot.lane.b32.xlu0 %v879, 48
      %v953 = vpop.permute.xlu0 %952
      %954 = vrot.lane.b32.xlu0 %v880, 48
      %v955 = vpop.permute.xlu0 %954
      %956 = vrot.lane.b32.xlu0 %v881, 48
      %v957 = vpop.permute.xlu0 %956
      %958 = vrot.lane.b32.xlu0 %v882, 48
      %v959 = vpop.permute.xlu0 %958
      %960 = vrot.lane.b32.xlu0 %v883, 48
      %v961 = vpop.permute.xlu0 %960
      %962 = vrot.lane.b32.xlu0 %v884, 48
      %v963 = vpop.permute.xlu0 %962
      %964 = vrot.lane.b32.xlu0 %v885, 48
      %v965 = vpop.permute.xlu0 %964
      %966 = vrot.lane.b32.xlu0 %v886, 48
      %v967 = vpop.permute.xlu0 %966
      %968 = vrot.lane.b32.xlu0 %v887, 48
      %v969 = vpop.permute.xlu0 %968
      %970 = vrot.lane.b32.xlu0 %v888, 48
      %v971 = vpop.permute.xlu0 %970
      %972 = vrot.lane.b32.xlu0 %v889, 48
      %v973 = vpop.permute.xlu0 %972
      %974 = vrot.lane.b32.xlu0 %v890, 48
      %v975 = vpop.permute.xlu0 %974
      %976 = vrot.lane.b32.xlu0 %v891, 48
      %v977 = vpop.permute.xlu0 %976
      %978 = vrot.lane.b32.xlu0 %v892, 48
      %v979 = vpop.permute.xlu0 %978
      %980 = vrot.lane.b32.xlu0 %v893, 48
      %v981 = vpop.permute.xlu0 %980
      %982 = vrot.lane.b32.xlu0 %v894, 48
      %v983 = vpop.permute.xlu0 %982
      %984 = vrot.lane.b32.xlu0 %v895, 48
      %v985 = vpop.permute.xlu0 %984
      %986 = vrot.lane.b32.xlu0 %v896, 48
      %v987 = vpop.permute.xlu0 %986
      %988 = vrot.lane.b32.xlu0 %v897, 48
      %v989 = vpop.permute.xlu0 %988
      %990 = vrot.lane.b32.xlu0 %v898, 48
      %v991 = vpop.permute.xlu0 %990
      %992 = vrot.lane.b32.xlu0 %v899, 48
      %v993 = vpop.permute.xlu0 %992
      %994 = vrot.lane.b32.xlu0 %v900, 48
      %v995 = vpop.permute.xlu0 %994
      %996 = vrot.lane.b32.xlu0 %v901, 48
      %v997 = vpop.permute.xlu0 %996
      %vm1030 = vcmask 490880
      %1031 = vst.msk [vmem:[#allocation2] sm:$0xff] %vm1030, %v935
      %1032 = vst.msk [vmem:[#allocation2 + $0x8] sm:$0xff] %vm1030, %v937
      %1033 = vst.msk [vmem:[#allocation2 + $0x10] sm:$0xff] %vm1030, %v939
      %1034 = vst.msk [vmem:[#allocation2 + $0x18] sm:$0xff] %vm1030, %v941
      %1035 = vst.msk [vmem:[#allocation2 + $0x20] sm:$0xff] %vm1030, %v943
      %1036 = vst.msk [vmem:[#allocation2 + $0x28] sm:$0xff] %vm1030, %v945
      %1037 = vst.msk [vmem:[#allocation2 + $0x30] sm:$0xff] %vm1030, %v947
      %1038 = vst.msk [vmem:[#allocation2 + $0x38] sm:$0xff] %vm1030, %v949
      %1039 = vst.msk [vmem:[#allocation2 + $0x40] sm:$0xff] %vm1030, %v951
      %1040 = vst.msk [vmem:[#allocation2 + $0x48] sm:$0xff] %vm1030, %v953
      %1041 = vst.msk [vmem:[#allocation2 + $0x50] sm:$0xff] %vm1030, %v955
      %1042 = vst.msk [vmem:[#allocation2 + $0x58] sm:$0xff] %vm1030, %v957
      %1043 = vst.msk [vmem:[#allocation2 + $0x60] sm:$0xff] %vm1030, %v959
      %1044 = vst.msk [vmem:[#allocation2 + $0x68] sm:$0xff] %vm1030, %v961
      %1045 = vst.msk [vmem:[#allocation2 + $0x70] sm:$0xff] %vm1030, %v963
      %1046 = vst.msk [vmem:[#allocation2 + $0x78] sm:$0xff] %vm1030, %v965
      %1047 = vst.msk [vmem:[#allocation2 + $0x80] sm:$0xff] %vm1030, %v967
      %1048 = vst.msk [vmem:[#allocation2 + $0x88] sm:$0xff] %vm1030, %v969
      %1049 = vst.msk [vmem:[#allocation2 + $0x90] sm:$0xff] %vm1030, %v971
      %1050 = vst.msk [vmem:[#allocation2 + $0x98] sm:$0xff] %vm1030, %v973
      %1051 = vst.msk [vmem:[#allocation2 + $0xa0] sm:$0xff] %vm1030, %v975
      %1052 = vst.msk [vmem:[#allocation2 + $0xa8] sm:$0xff] %vm1030, %v977
      %1053 = vst.msk [vmem:[#allocation2 + $0xb0] sm:$0xff] %vm1030, %v979
      %1054 = vst.msk [vmem:[#allocation2 + $0xb8] sm:$0xff] %vm1030, %v981
      %1055 = vst.msk [vmem:[#allocation2 + $0xc0] sm:$0xff] %vm1030, %v983
      %1056 = vst.msk [vmem:[#allocation2 + $0xc8] sm:$0xff] %vm1030, %v985
      %1057 = vst.msk [vmem:[#allocation2 + $0xd0] sm:$0xff] %vm1030, %v987
      %1058 = vst.msk [vmem:[#allocation2 + $0xd8] sm:$0xff] %vm1030, %v989
      %1059 = vst.msk [vmem:[#allocation2 + $0xe0] sm:$0xff] %vm1030, %v991
      %1060 = vst.msk [vmem:[#allocation2 + $0xe8] sm:$0xff] %vm1030, %v993
      %1061 = vst.msk [vmem:[#allocation2 + $0xf0] sm:$0xff] %vm1030, %v995
      %1062 = vst.msk [vmem:[#allocation2 + $0xf8] sm:$0xff] %vm1030, %v997
      %v1063 = vld [vmem:[%s676 + $0x2] sm:$0xff]
      %v1064 = vld [vmem:[%s676 + $0xa] sm:$0xff]
      %v1065 = vld [vmem:[%s676 + $0x1a] sm:$0xff]
      %v1066 = vld [vmem:[%s676 + $0x22] sm:$0xff]
      %v1067 = vld [vmem:[%s676 + $0x32] sm:$0xff]
      %v1068 = vld [vmem:[%s676 + $0x3a] sm:$0xff]
      %v1069 = vld [vmem:[%s676 + $0x4a] sm:$0xff]
      %v1070 = vld [vmem:[%s676 + $0x52] sm:$0xff]
      %v1071 = vld [vmem:[%s676 + $0x62] sm:$0xff]
      %v1072 = vld [vmem:[%s676 + $0x6a] sm:$0xff]
      %v1073 = vld [vmem:[%s676 + $0x7a] sm:$0xff]
      %v1074 = vld [vmem:[%s676 + $0x82] sm:$0xff]
      %v1075 = vld [vmem:[%s676 + $0x92] sm:$0xff]
      %v1076 = vld [vmem:[%s676 + $0x9a] sm:$0xff]
      %v1077 = vld [vmem:[%s676 + $0xaa] sm:$0xff]
      %v1078 = vld [vmem:[%s676 + $0xb2] sm:$0xff]
      %v1079 = vld [vmem:[%s676 + $0xc2] sm:$0xff]
      %v1080 = vld [vmem:[%s676 + $0xca] sm:$0xff]
      %v1081 = vld [vmem:[%s676 + $0xda] sm:$0xff]
      %v1082 = vld [vmem:[%s676 + $0xe2] sm:$0xff]
      %v1083 = vld [vmem:[%s676 + $0xf2] sm:$0xff]
      %v1084 = vld [vmem:[%s676 + $0xfa] sm:$0xff]
      %v1085 = vld [vmem:[%s676 + $0x10a] sm:$0xff]
      %v1086 = vld [vmem:[%s676 + $0x112] sm:$0xff]
      %v1087 = vld [vmem:[%s676 + $0x122] sm:$0xff]
      %v1088 = vld [vmem:[%s676 + $0x12a] sm:$0xff]
      %v1089 = vld [vmem:[%s676 + $0x13a] sm:$0xff]
      %v1090 = vld [vmem:[%s676 + $0x142] sm:$0xff]
      %v1091 = vld [vmem:[%s676 + $0x152] sm:$0xff]
      %v1092 = vld [vmem:[%s676 + $0x15a] sm:$0xff]
      %v1093 = vld [vmem:[%s676 + $0x16a] sm:$0xff]
      %v1094 = vld [vmem:[%s676 + $0x172] sm:$0xff]
      %1127 = vrot.lane.b32.xlu0 %v1063, 60
      %v1128 = vpop.permute.xlu0 %1127
      %1129 = vrot.lane.b32.xlu0 %v1064, 60
      %v1130 = vpop.permute.xlu0 %1129
      %1131 = vrot.lane.b32.xlu0 %v1065, 60
      %v1132 = vpop.permute.xlu0 %1131
      %1133 = vrot.lane.b32.xlu0 %v1066, 60
      %v1134 = vpop.permute.xlu0 %1133
      %1135 = vrot.lane.b32.xlu0 %v1067, 60
      %v1136 = vpop.permute.xlu0 %1135
      %1137 = vrot.lane.b32.xlu0 %v1068, 60
      %v1138 = vpop.permute.xlu0 %1137
      %1139 = vrot.lane.b32.xlu0 %v1069, 60
      %v1140 = vpop.permute.xlu0 %1139
      %1141 = vrot.lane.b32.xlu0 %v1070, 60
      %v1142 = vpop.permute.xlu0 %1141
      %1143 = vrot.lane.b32.xlu0 %v1071, 60
      %v1144 = vpop.permute.xlu0 %1143
      %1145 = vrot.lane.b32.xlu0 %v1072, 60
      %v1146 = vpop.permute.xlu0 %1145
      %1147 = vrot.lane.b32.xlu0 %v1073, 60
      %v1148 = vpop.permute.xlu0 %1147
      %1149 = vrot.lane.b32.xlu0 %v1074, 60
      %v1150 = vpop.permute.xlu0 %1149
      %1151 = vrot.lane.b32.xlu0 %v1075, 60
      %v1152 = vpop.permute.xlu0 %1151
      %1153 = vrot.lane.b32.xlu0 %v1076, 60
      %v1154 = vpop.permute.xlu0 %1153
      %1155 = vrot.lane.b32.xlu0 %v1077, 60
      %v1156 = vpop.permute.xlu0 %1155
      %1157 = vrot.lane.b32.xlu0 %v1078, 60
      %v1158 = vpop.permute.xlu0 %1157
      %1159 = vrot.lane.b32.xlu0 %v1079, 60
      %v1160 = vpop.permute.xlu0 %1159
      %1161 = vrot.lane.b32.xlu0 %v1080, 60
      %v1162 = vpop.permute.xlu0 %1161
      %1163 = vrot.lane.b32.xlu0 %v1081, 60
      %v1164 = vpop.permute.xlu0 %1163
      %1165 = vrot.lane.b32.xlu0 %v1082, 60
      %v1166 = vpop.permute.xlu0 %1165
      %1167 = vrot.lane.b32.xlu0 %v1083, 60
      %v1168 = vpop.permute.xlu0 %1167
      %1169 = vrot.lane.b32.xlu0 %v1084, 60
      %v1170 = vpop.permute.xlu0 %1169
      %1171 = vrot.lane.b32.xlu0 %v1085, 60
      %v1172 = vpop.permute.xlu0 %1171
      %1173 = vrot.lane.b32.xlu0 %v1086, 60
      %v1174 = vpop.permute.xlu0 %1173
      %1175 = vrot.lane.b32.xlu0 %v1087, 60
      %v1176 = vpop.permute.xlu0 %1175
      %1177 = vrot.lane.b32.xlu0 %v1088, 60
      %v1178 = vpop.permute.xlu0 %1177
      %1179 = vrot.lane.b32.xlu0 %v1089, 60
      %v1180 = vpop.permute.xlu0 %1179
      %1181 = vrot.lane.b32.xlu0 %v1090, 60
      %v1182 = vpop.permute.xlu0 %1181
      %1183 = vrot.lane.b32.xlu0 %v1091, 60
      %v1184 = vpop.permute.xlu0 %1183
      %1185 = vrot.lane.b32.xlu0 %v1092, 60
      %v1186 = vpop.permute.xlu0 %1185
      %1187 = vrot.lane.b32.xlu0 %v1093, 60
      %v1188 = vpop.permute.xlu0 %1187
      %1189 = vrot.lane.b32.xlu0 %v1094, 60
      %v1190 = vpop.permute.xlu0 %1189
      %vm1223 = vcmask 589280
      %1224 = vst.msk [vmem:[#allocation2] sm:$0xff] %vm1223, %v1128
      %1225 = vst.msk [vmem:[#allocation2 + $0x8] sm:$0xff] %vm1223, %v1130
      %1226 = vst.msk [vmem:[#allocation2 + $0x10] sm:$0xff] %vm1223, %v1132
      %1227 = vst.msk [vmem:[#allocation2 + $0x18] sm:$0xff] %vm1223, %v1134
      %1228 = vst.msk [vmem:[#allocation2 + $0x20] sm:$0xff] %vm1223, %v1136
      %1229 = vst.msk [vmem:[#allocation2 + $0x28] sm:$0xff] %vm1223, %v1138
      %1230 = vst.msk [vmem:[#allocation2 + $0x30] sm:$0xff] %vm1223, %v1140
      %1231 = vst.msk [vmem:[#allocation2 + $0x38] sm:$0xff] %vm1223, %v1142
      %1232 = vst.msk [vmem:[#allocation2 + $0x40] sm:$0xff] %vm1223, %v1144
      %1233 = vst.msk [vmem:[#allocation2 + $0x48] sm:$0xff] %vm1223, %v1146
      %1234 = vst.msk [vmem:[#allocation2 + $0x50] sm:$0xff] %vm1223, %v1148
      %1235 = vst.msk [vmem:[#allocation2 + $0x58] sm:$0xff] %vm1223, %v1150
      %1236 = vst.msk [vmem:[#allocation2 + $0x60] sm:$0xff] %vm1223, %v1152
      %1237 = vst.msk [vmem:[#allocation2 + $0x68] sm:$0xff] %vm1223, %v1154
      %1238 = vst.msk [vmem:[#allocation2 + $0x70] sm:$0xff] %vm1223, %v1156
      %1239 = vst.msk [vmem:[#allocation2 + $0x78] sm:$0xff] %vm1223, %v1158
      %1240 = vst.msk [vmem:[#allocation2 + $0x80] sm:$0xff] %vm1223, %v1160
      %1241 = vst.msk [vmem:[#allocation2 + $0x88] sm:$0xff] %vm1223, %v1162
      %1242 = vst.msk [vmem:[#allocation2 + $0x90] sm:$0xff] %vm1223, %v1164
      %1243 = vst.msk [vmem:[#allocation2 + $0x98] sm:$0xff] %vm1223, %v1166
      %1244 = vst.msk [vmem:[#allocation2 + $0xa0] sm:$0xff] %vm1223, %v1168
      %1245 = vst.msk [vmem:[#allocation2 + $0xa8] sm:$0xff] %vm1223, %v1170
      %1246 = vst.msk [vmem:[#allocation2 + $0xb0] sm:$0xff] %vm1223, %v1172
      %1247 = vst.msk [vmem:[#allocation2 + $0xb8] sm:$0xff] %vm1223, %v1174
      %1248 = vst.msk [vmem:[#allocation2 + $0xc0] sm:$0xff] %vm1223, %v1176
      %1249 = vst.msk [vmem:[#allocation2 + $0xc8] sm:$0xff] %vm1223, %v1178
      %1250 = vst.msk [vmem:[#allocation2 + $0xd0] sm:$0xff] %vm1223, %v1180
      %1251 = vst.msk [vmem:[#allocation2 + $0xd8] sm:$0xff] %vm1223, %v1182
      %1252 = vst.msk [vmem:[#allocation2 + $0xe0] sm:$0xff] %vm1223, %v1184
      %1253 = vst.msk [vmem:[#allocation2 + $0xe8] sm:$0xff] %vm1223, %v1186
      %1254 = vst.msk [vmem:[#allocation2 + $0xf0] sm:$0xff] %vm1223, %v1188
      %1255 = vst.msk [vmem:[#allocation2 + $0xf8] sm:$0xff] %vm1223, %v1190
      %s1256 = scalar_lea.vmem %s219, 48
      %v1257 = vld [vmem:[%s1256] sm:$0xff]
      %v1258 = vld [vmem:[%s1256 + $0x8] sm:$0xff]
      %v1259 = vld [vmem:[%s1256 + $0x18] sm:$0xff]
      %v1260 = vld [vmem:[%s1256 + $0x20] sm:$0xff]
      %v1261 = vld [vmem:[%s1256 + $0x30] sm:$0xff]
      %v1262 = vld [vmem:[%s1256 + $0x38] sm:$0xff]
      %v1263 = vld [vmem:[%s1256 + $0x48] sm:$0xff]
      %v1264 = vld [vmem:[%s1256 + $0x50] sm:$0xff]
      %v1265 = vld [vmem:[%s1256 + $0x60] sm:$0xff]
      %v1266 = vld [vmem:[%s1256 + $0x68] sm:$0xff]
      %v1267 = vld [vmem:[%s1256 + $0x78] sm:$0xff]
      %v1268 = vld [vmem:[%s1256 + $0x80] sm:$0xff]
      %v1269 = vld [vmem:[%s1256 + $0x90] sm:$0xff]
      %v1270 = vld [vmem:[%s1256 + $0x98] sm:$0xff]
      %v1271 = vld [vmem:[%s1256 + $0xa8] sm:$0xff]
      %v1272 = vld [vmem:[%s1256 + $0xb0] sm:$0xff]
      %v1273 = vld [vmem:[%s1256 + $0xc0] sm:$0xff]
      %v1274 = vld [vmem:[%s1256 + $0xc8] sm:$0xff]
      %v1275 = vld [vmem:[%s1256 + $0xd8] sm:$0xff]
      %v1276 = vld [vmem:[%s1256 + $0xe0] sm:$0xff]
      %v1277 = vld [vmem:[%s1256 + $0xf0] sm:$0xff]
      %v1278 = vld [vmem:[%s1256 + $0xf8] sm:$0xff]
      %v1279 = vld [vmem:[%s1256 + $0x108] sm:$0xff]
      %v1280 = vld [vmem:[%s1256 + $0x110] sm:$0xff]
      %v1281 = vld [vmem:[%s1256 + $0x120] sm:$0xff]
      %v1282 = vld [vmem:[%s1256 + $0x128] sm:$0xff]
      %v1283 = vld [vmem:[%s1256 + $0x138] sm:$0xff]
      %v1284 = vld [vmem:[%s1256 + $0x140] sm:$0xff]
      %v1285 = vld [vmem:[%s1256 + $0x150] sm:$0xff]
      %v1286 = vld [vmem:[%s1256 + $0x158] sm:$0xff]
      %v1287 = vld [vmem:[%s1256 + $0x168] sm:$0xff]
      %v1288 = vld [vmem:[%s1256 + $0x170] sm:$0xff]
      %1321 = vrot.lane.b32.xlu0 %v1257, 72
      %v1322 = vpop.permute.xlu0 %1321
      %1323 = vrot.lane.b32.xlu0 %v1258, 72
      %v1324 = vpop.permute.xlu0 %1323
      %1325 = vrot.lane.b32.xlu0 %v1259, 72
      %v1326 = vpop.permute.xlu0 %1325
      %1327 = vrot.lane.b32.xlu0 %v1260, 72
      %v1328 = vpop.permute.xlu0 %1327
      %1329 = vrot.lane.b32.xlu0 %v1261, 72
      %v1330 = vpop.permute.xlu0 %1329
      %1331 = vrot.lane.b32.xlu0 %v1262, 72
      %v1332 = vpop.permute.xlu0 %1331
      %1333 = vrot.lane.b32.xlu0 %v1263, 72
      %v1334 = vpop.permute.xlu0 %1333
      %1335 = vrot.lane.b32.xlu0 %v1264, 72
      %v1336 = vpop.permute.xlu0 %1335
      %1337 = vrot.lane.b32.xlu0 %v1265, 72
      %v1338 = vpop.permute.xlu0 %1337
      %1339 = vrot.lane.b32.xlu0 %v1266, 72
      %v1340 = vpop.permute.xlu0 %1339
      %1341 = vrot.lane.b32.xlu0 %v1267, 72
      %v1342 = vpop.permute.xlu0 %1341
      %1343 = vrot.lane.b32.xlu0 %v1268, 72
      %v1344 = vpop.permute.xlu0 %1343
      %1345 = vrot.lane.b32.xlu0 %v1269, 72
      %v1346 = vpop.permute.xlu0 %1345
      %1347 = vrot.lane.b32.xlu0 %v1270, 72
      %v1348 = vpop.permute.xlu0 %1347
      %1349 = vrot.lane.b32.xlu0 %v1271, 72
      %v1350 = vpop.permute.xlu0 %1349
      %1351 = vrot.lane.b32.xlu0 %v1272, 72
      %v1352 = vpop.permute.xlu0 %1351
      %1353 = vrot.lane.b32.xlu0 %v1273, 72
      %v1354 = vpop.permute.xlu0 %1353
      %1355 = vrot.lane.b32.xlu0 %v1274, 72
      %v1356 = vpop.permute.xlu0 %1355
      %1357 = vrot.lane.b32.xlu0 %v1275, 72
      %v1358 = vpop.permute.xlu0 %1357
      %1359 = vrot.lane.b32.xlu0 %v1276, 72
      %v1360 = vpop.permute.xlu0 %1359
      %1361 = vrot.lane.b32.xlu0 %v1277, 72
      %v1362 = vpop.permute.xlu0 %1361
      %1363 = vrot.lane.b32.xlu0 %v1278, 72
      %v1364 = vpop.permute.xlu0 %1363
      %1365 = vrot.lane.b32.xlu0 %v1279, 72
      %v1366 = vpop.permute.xlu0 %1365
      %1367 = vrot.lane.b32.xlu0 %v1280, 72
      %v1368 = vpop.permute.xlu0 %1367
      %1369 = vrot.lane.b32.xlu0 %v1281, 72
      %v1370 = vpop.permute.xlu0 %1369
      %1371 = vrot.lane.b32.xlu0 %v1282, 72
      %v1372 = vpop.permute.xlu0 %1371
      %1373 = vrot.lane.b32.xlu0 %v1283, 72
      %v1374 = vpop.permute.xlu0 %1373
      %1375 = vrot.lane.b32.xlu0 %v1284, 72
      %v1376 = vpop.permute.xlu0 %1375
      %1377 = vrot.lane.b32.xlu0 %v1285, 72
      %v1378 = vpop.permute.xlu0 %1377
      %1379 = vrot.lane.b32.xlu0 %v1286, 72
      %v1380 = vpop.permute.xlu0 %1379
      %1381 = vrot.lane.b32.xlu0 %v1287, 72
      %v1382 = vpop.permute.xlu0 %1381
      %1383 = vrot.lane.b32.xlu0 %v1288, 72
      %v1384 = vpop.permute.xlu0 %1383
      %vm1417 = vcmask 687680
      %1418 = vst.msk [vmem:[#allocation2] sm:$0xff] %vm1417, %v1322
      %1419 = vst.msk [vmem:[#allocation2 + $0x8] sm:$0xff] %vm1417, %v1324
      %1420 = vst.msk [vmem:[#allocation2 + $0x10] sm:$0xff] %vm1417, %v1326
      %1421 = vst.msk [vmem:[#allocation2 + $0x18] sm:$0xff] %vm1417, %v1328
      %1422 = vst.msk [vmem:[#allocation2 + $0x20] sm:$0xff] %vm1417, %v1330
      %1423 = vst.msk [vmem:[#allocation2 + $0x28] sm:$0xff] %vm1417, %v1332
      %1424 = vst.msk [vmem:[#allocation2 + $0x30] sm:$0xff] %vm1417, %v1334
      %1425 = vst.msk [vmem:[#allocation2 + $0x38] sm:$0xff] %vm1417, %v1336
      %1426 = vst.msk [vmem:[#allocation2 + $0x40] sm:$0xff] %vm1417, %v1338
      %1427 = vst.msk [vmem:[#allocation2 + $0x48] sm:$0xff] %vm1417, %v1340
      %1428 = vst.msk [vmem:[#allocation2 + $0x50] sm:$0xff] %vm1417, %v1342
      %1429 = vst.msk [vmem:[#allocation2 + $0x58] sm:$0xff] %vm1417, %v1344
      %1430 = vst.msk [vmem:[#allocation2 + $0x60] sm:$0xff] %vm1417, %v1346
      %1431 = vst.msk [vmem:[#allocation2 + $0x68] sm:$0xff] %vm1417, %v1348
      %1432 = vst.msk [vmem:[#allocation2 + $0x70] sm:$0xff] %vm1417, %v1350
      %1433 = vst.msk [vmem:[#allocation2 + $0x78] sm:$0xff] %vm1417, %v1352
      %1434 = vst.msk [vmem:[#allocation2 + $0x80] sm:$0xff] %vm1417, %v1354
      %1435 = vst.msk [vmem:[#allocation2 + $0x88] sm:$0xff] %vm1417, %v1356
      %1436 = vst.msk [vmem:[#allocation2 + $0x90] sm:$0xff] %vm1417, %v1358
      %1437 = vst.msk [vmem:[#allocation2 + $0x98] sm:$0xff] %vm1417, %v1360
      %1438 = vst.msk [vmem:[#allocation2 + $0xa0] sm:$0xff] %vm1417, %v1362
      %1439 = vst.msk [vmem:[#allocation2 + $0xa8] sm:$0xff] %vm1417, %v1364
      %1440 = vst.msk [vmem:[#allocation2 + $0xb0] sm:$0xff] %vm1417, %v1366
      %1441 = vst.msk [vmem:[#allocation2 + $0xb8] sm:$0xff] %vm1417, %v1368
      %1442 = vst.msk [vmem:[#allocation2 + $0xc0] sm:$0xff] %vm1417, %v1370
      %1443 = vst.msk [vmem:[#allocation2 + $0xc8] sm:$0xff] %vm1417, %v1372
      %1444 = vst.msk [vmem:[#allocation2 + $0xd0] sm:$0xff] %vm1417, %v1374
      %1445 = vst.msk [vmem:[#allocation2 + $0xd8] sm:$0xff] %vm1417, %v1376
      %1446 = vst.msk [vmem:[#allocation2 + $0xe0] sm:$0xff] %vm1417, %v1378
      %1447 = vst.msk [vmem:[#allocation2 + $0xe8] sm:$0xff] %vm1417, %v1380
      %1448 = vst.msk [vmem:[#allocation2 + $0xf0] sm:$0xff] %vm1417, %v1382
      %1449 = vst.msk [vmem:[#allocation2 + $0xf8] sm:$0xff] %vm1417, %v1384
      %v1450 = vld [vmem:[%s1256 + $0x1] sm:$0xff]
      %v1451 = vld [vmem:[%s1256 + $0x9] sm:$0xff]
      %v1452 = vld [vmem:[%s1256 + $0x19] sm:$0xff]
      %v1453 = vld [vmem:[%s1256 + $0x21] sm:$0xff]
      %v1454 = vld [vmem:[%s1256 + $0x31] sm:$0xff]
      %v1455 = vld [vmem:[%s1256 + $0x39] sm:$0xff]
      %v1456 = vld [vmem:[%s1256 + $0x49] sm:$0xff]
      %v1457 = vld [vmem:[%s1256 + $0x51] sm:$0xff]
      %v1458 = vld [vmem:[%s1256 + $0x61] sm:$0xff]
      %v1459 = vld [vmem:[%s1256 + $0x69] sm:$0xff]
      %v1460 = vld [vmem:[%s1256 + $0x79] sm:$0xff]
      %v1461 = vld [vmem:[%s1256 + $0x81] sm:$0xff]
      %v1462 = vld [vmem:[%s1256 + $0x91] sm:$0xff]
      %v1463 = vld [vmem:[%s1256 + $0x99] sm:$0xff]
      %v1464 = vld [vmem:[%s1256 + $0xa9] sm:$0xff]
      %v1465 = vld [vmem:[%s1256 + $0xb1] sm:$0xff]
      %v1466 = vld [vmem:[%s1256 + $0xc1] sm:$0xff]
      %v1467 = vld [vmem:[%s1256 + $0xc9] sm:$0xff]
      %v1468 = vld [vmem:[%s1256 + $0xd9] sm:$0xff]
      %v1469 = vld [vmem:[%s1256 + $0xe1] sm:$0xff]
      %v1470 = vld [vmem:[%s1256 + $0xf1] sm:$0xff]
      %v1471 = vld [vmem:[%s1256 + $0xf9] sm:$0xff]
      %v1472 = vld [vmem:[%s1256 + $0x109] sm:$0xff]
      %v1473 = vld [vmem:[%s1256 + $0x111] sm:$0xff]
      %v1474 = vld [vmem:[%s1256 + $0x121] sm:$0xff]
      %v1475 = vld [vmem:[%s1256 + $0x129] sm:$0xff]
      %v1476 = vld [vmem:[%s1256 + $0x139] sm:$0xff]
      %v1477 = vld [vmem:[%s1256 + $0x141] sm:$0xff]
      %v1478 = vld [vmem:[%s1256 + $0x151] sm:$0xff]
      %v1479 = vld [vmem:[%s1256 + $0x159] sm:$0xff]
      %v1480 = vld [vmem:[%s1256 + $0x169] sm:$0xff]
      %v1481 = vld [vmem:[%s1256 + $0x171] sm:$0xff]
      %1514 = vrot.lane.b32.xlu0 %v1450, 84
      %v1515 = vpop.permute.xlu0 %1514
      %1516 = vrot.lane.b32.xlu0 %v1451, 84
      %v1517 = vpop.permute.xlu0 %1516
      %1518 = vrot.lane.b32.xlu0 %v1452, 84
      %v1519 = vpop.permute.xlu0 %1518
      %1520 = vrot.lane.b32.xlu0 %v1453, 84
      %v1521 = vpop.permute.xlu0 %1520
      %1522 = vrot.lane.b32.xlu0 %v1454, 84
      %v1523 = vpop.permute.xlu0 %1522
      %1524 = vrot.lane.b32.xlu0 %v1455, 84
      %v1525 = vpop.permute.xlu0 %1524
      %1526 = vrot.lane.b32.xlu0 %v1456, 84
      %v1527 = vpop.permute.xlu0 %1526
      %1528 = vrot.lane.b32.xlu0 %v1457, 84
      %v1529 = vpop.permute.xlu0 %1528
      %1530 = vrot.lane.b32.xlu0 %v1458, 84
      %v1531 = vpop.permute.xlu0 %1530
      %1532 = vrot.lane.b32.xlu0 %v1459, 84
      %v1533 = vpop.permute.xlu0 %1532
      %1534 = vrot.lane.b32.xlu0 %v1460, 84
      %v1535 = vpop.permute.xlu0 %1534
      %1536 = vrot.lane.b32.xlu0 %v1461, 84
      %v1537 = vpop.permute.xlu0 %1536
      %1538 = vrot.lane.b32.xlu0 %v1462, 84
      %v1539 = vpop.permute.xlu0 %1538
      %1540 = vrot.lane.b32.xlu0 %v1463, 84
      %v1541 = vpop.permute.xlu0 %1540
      %1542 = vrot.lane.b32.xlu0 %v1464, 84
      %v1543 = vpop.permute.xlu0 %1542
      %1544 = vrot.lane.b32.xlu0 %v1465, 84
      %v1545 = vpop.permute.xlu0 %1544
      %1546 = vrot.lane.b32.xlu0 %v1466, 84
      %v1547 = vpop.permute.xlu0 %1546
      %1548 = vrot.lane.b32.xlu0 %v1467, 84
      %v1549 = vpop.permute.xlu0 %1548
      %1550 = vrot.lane.b32.xlu0 %v1468, 84
      %v1551 = vpop.permute.xlu0 %1550
      %1552 = vrot.lane.b32.xlu0 %v1469, 84
      %v1553 = vpop.permute.xlu0 %1552
      %1554 = vrot.lane.b32.xlu0 %v1470, 84
      %v1555 = vpop.permute.xlu0 %1554
      %1556 = vrot.lane.b32.xlu0 %v1471, 84
      %v1557 = vpop.permute.xlu0 %1556
      %1558 = vrot.lane.b32.xlu0 %v1472, 84
      %v1559 = vpop.permute.xlu0 %1558
      %1560 = vrot.lane.b32.xlu0 %v1473, 84
      %v1561 = vpop.permute.xlu0 %1560
      %1562 = vrot.lane.b32.xlu0 %v1474, 84
      %v1563 = vpop.permute.xlu0 %1562
      %1564 = vrot.lane.b32.xlu0 %v1475, 84
      %v1565 = vpop.permute.xlu0 %1564
      %1566 = vrot.lane.b32.xlu0 %v1476, 84
      %v1567 = vpop.permute.xlu0 %1566
      %1568 = vrot.lane.b32.xlu0 %v1477, 84
      %v1569 = vpop.permute.xlu0 %1568
      %1570 = vrot.lane.b32.xlu0 %v1478, 84
      %v1571 = vpop.permute.xlu0 %1570
      %1572 = vrot.lane.b32.xlu0 %v1479, 84
      %v1573 = vpop.permute.xlu0 %1572
      %1574 = vrot.lane.b32.xlu0 %v1480, 84
      %v1575 = vpop.permute.xlu0 %1574
      %1576 = vrot.lane.b32.xlu0 %v1481, 84
      %v1577 = vpop.permute.xlu0 %1576
      %vm1610 = vcmask 786080
      %1611 = vst.msk [vmem:[#allocation2] sm:$0xff] %vm1610, %v1515
      %1612 = vst.msk [vmem:[#allocation2 + $0x8] sm:$0xff] %vm1610, %v1517
      %1613 = vst.msk [vmem:[#allocation2 + $0x10] sm:$0xff] %vm1610, %v1519
      %1614 = vst.msk [vmem:[#allocation2 + $0x18] sm:$0xff] %vm1610, %v1521
      %1615 = vst.msk [vmem:[#allocation2 + $0x20] sm:$0xff] %vm1610, %v1523
      %1616 = vst.msk [vmem:[#allocation2 + $0x28] sm:$0xff] %vm1610, %v1525
      %1617 = vst.msk [vmem:[#allocation2 + $0x30] sm:$0xff] %vm1610, %v1527
      %1618 = vst.msk [vmem:[#allocation2 + $0x38] sm:$0xff] %vm1610, %v1529
      %1619 = vst.msk [vmem:[#allocation2 + $0x40] sm:$0xff] %vm1610, %v1531
      %1620 = vst.msk [vmem:[#allocation2 + $0x48] sm:$0xff] %vm1610, %v1533
      %1621 = vst.msk [vmem:[#allocation2 + $0x50] sm:$0xff] %vm1610, %v1535
      %1622 = vst.msk [vmem:[#allocation2 + $0x58] sm:$0xff] %vm1610, %v1537
      %1623 = vst.msk [vmem:[#allocation2 + $0x60] sm:$0xff] %vm1610, %v1539
      %1624 = vst.msk [vmem:[#allocation2 + $0x68] sm:$0xff] %vm1610, %v1541
      %1625 = vst.msk [vmem:[#allocation2 + $0x70] sm:$0xff] %vm1610, %v1543
      %1626 = vst.msk [vmem:[#allocation2 + $0x78] sm:$0xff] %vm1610, %v1545
      %1627 = vst.msk [vmem:[#allocation2 + $0x80] sm:$0xff] %vm1610, %v1547
      %1628 = vst.msk [vmem:[#allocation2 + $0x88] sm:$0xff] %vm1610, %v1549
      %1629 = vst.msk [vmem:[#allocation2 + $0x90] sm:$0xff] %vm1610, %v1551
      %1630 = vst.msk [vmem:[#allocation2 + $0x98] sm:$0xff] %vm1610, %v1553
      %1631 = vst.msk [vmem:[#allocation2 + $0xa0] sm:$0xff] %vm1610, %v1555
      %1632 = vst.msk [vmem:[#allocation2 + $0xa8] sm:$0xff] %vm1610, %v1557
      %1633 = vst.msk [vmem:[#allocation2 + $0xb0] sm:$0xff] %vm1610, %v1559
      %1634 = vst.msk [vmem:[#allocation2 + $0xb8] sm:$0xff] %vm1610, %v1561
      %1635 = vst.msk [vmem:[#allocation2 + $0xc0] sm:$0xff] %vm1610, %v1563
      %1636 = vst.msk [vmem:[#allocation2 + $0xc8] sm:$0xff] %vm1610, %v1565
      %1637 = vst.msk [vmem:[#allocation2 + $0xd0] sm:$0xff] %vm1610, %v1567
      %1638 = vst.msk [vmem:[#allocation2 + $0xd8] sm:$0xff] %vm1610, %v1569
      %1639 = vst.msk [vmem:[#allocation2 + $0xe0] sm:$0xff] %vm1610, %v1571
      %1640 = vst.msk [vmem:[#allocation2 + $0xe8] sm:$0xff] %vm1610, %v1573
      %1641 = vst.msk [vmem:[#allocation2 + $0xf0] sm:$0xff] %vm1610, %v1575
      %1642 = vst.msk [vmem:[#allocation2 + $0xf8] sm:$0xff] %vm1610, %v1577
      %v1643 = vld [vmem:[%s1256 + $0x2] sm:$0xff]
      %v1644 = vld [vmem:[%s1256 + $0xa] sm:$0xff]
      %v1645 = vld [vmem:[%s1256 + $0x1a] sm:$0xff]
      %v1646 = vld [vmem:[%s1256 + $0x22] sm:$0xff]
      %v1647 = vld [vmem:[%s1256 + $0x32] sm:$0xff]
      %v1648 = vld [vmem:[%s1256 + $0x3a] sm:$0xff]
      %v1649 = vld [vmem:[%s1256 + $0x4a] sm:$0xff]
      %v1650 = vld [vmem:[%s1256 + $0x52] sm:$0xff]
      %v1651 = vld [vmem:[%s1256 + $0x62] sm:$0xff]
      %v1652 = vld [vmem:[%s1256 + $0x6a] sm:$0xff]
      %v1653 = vld [vmem:[%s1256 + $0x7a] sm:$0xff]
      %v1654 = vld [vmem:[%s1256 + $0x82] sm:$0xff]
      %v1655 = vld [vmem:[%s1256 + $0x92] sm:$0xff]
      %v1656 = vld [vmem:[%s1256 + $0x9a] sm:$0xff]
      %v1657 = vld [vmem:[%s1256 + $0xaa] sm:$0xff]
      %v1658 = vld [vmem:[%s1256 + $0xb2] sm:$0xff]
      %v1659 = vld [vmem:[%s1256 + $0xc2] sm:$0xff]
      %v1660 = vld [vmem:[%s1256 + $0xca] sm:$0xff]
      %v1661 = vld [vmem:[%s1256 + $0xda] sm:$0xff]
      %v1662 = vld [vmem:[%s1256 + $0xe2] sm:$0xff]
      %v1663 = vld [vmem:[%s1256 + $0xf2] sm:$0xff]
      %v1664 = vld [vmem:[%s1256 + $0xfa] sm:$0xff]
      %v1665 = vld [vmem:[%s1256 + $0x10a] sm:$0xff]
      %v1666 = vld [vmem:[%s1256 + $0x112] sm:$0xff]
      %v1667 = vld [vmem:[%s1256 + $0x122] sm:$0xff]
      %v1668 = vld [vmem:[%s1256 + $0x12a] sm:$0xff]
      %v1669 = vld [vmem:[%s1256 + $0x13a] sm:$0xff]
      %v1670 = vld [vmem:[%s1256 + $0x142] sm:$0xff]
      %v1671 = vld [vmem:[%s1256 + $0x152] sm:$0xff]
      %v1672 = vld [vmem:[%s1256 + $0x15a] sm:$0xff]
      %v1673 = vld [vmem:[%s1256 + $0x16a] sm:$0xff]
      %v1674 = vld [vmem:[%s1256 + $0x172] sm:$0xff]
      %1707 = vrot.lane.b32.xlu0 %v1643, 96
      %v1708 = vpop.permute.xlu0 %1707
      %1709 = vrot.lane.b32.xlu0 %v1644, 96
      %v1710 = vpop.permute.xlu0 %1709
      %1711 = vrot.lane.b32.xlu0 %v1645, 96
      %v1712 = vpop.permute.xlu0 %1711
      %1713 = vrot.lane.b32.xlu0 %v1646, 96
      %v1714 = vpop.permute.xlu0 %1713
      %1715 = vrot.lane.b32.xlu0 %v1647, 96
      %v1716 = vpop.permute.xlu0 %1715
      %1717 = vrot.lane.b32.xlu0 %v1648, 96
      %v1718 = vpop.permute.xlu0 %1717
      %1719 = vrot.lane.b32.xlu0 %v1649, 96
      %v1720 = vpop.permute.xlu0 %1719
      %1721 = vrot.lane.b32.xlu0 %v1650, 96
      %v1722 = vpop.permute.xlu0 %1721
      %1723 = vrot.lane.b32.xlu0 %v1651, 96
      %v1724 = vpop.permute.xlu0 %1723
      %1725 = vrot.lane.b32.xlu0 %v1652, 96
      %v1726 = vpop.permute.xlu0 %1725
      %1727 = vrot.lane.b32.xlu0 %v1653, 96
      %v1728 = vpop.permute.xlu0 %1727
      %1729 = vrot.lane.b32.xlu0 %v1654, 96
      %v1730 = vpop.permute.xlu0 %1729
      %1731 = vrot.lane.b32.xlu0 %v1655, 96
      %v1732 = vpop.permute.xlu0 %1731
      %1733 = vrot.lane.b32.xlu0 %v1656, 96
      %v1734 = vpop.permute.xlu0 %1733
      %1735 = vrot.lane.b32.xlu0 %v1657, 96
      %v1736 = vpop.permute.xlu0 %1735
      %1737 = vrot.lane.b32.xlu0 %v1658, 96
      %v1738 = vpop.permute.xlu0 %1737
      %1739 = vrot.lane.b32.xlu0 %v1659, 96
      %v1740 = vpop.permute.xlu0 %1739
      %1741 = vrot.lane.b32.xlu0 %v1660, 96
      %v1742 = vpop.permute.xlu0 %1741
      %1743 = vrot.lane.b32.xlu0 %v1661, 96
      %v1744 = vpop.permute.xlu0 %1743
      %1745 = vrot.lane.b32.xlu0 %v1662, 96
      %v1746 = vpop.permute.xlu0 %1745
      %1747 = vrot.lane.b32.xlu0 %v1663, 96
      %v1748 = vpop.permute.xlu0 %1747
      %1749 = vrot.lane.b32.xlu0 %v1664, 96
      %v1750 = vpop.permute.xlu0 %1749
      %1751 = vrot.lane.b32.xlu0 %v1665, 96
      %v1752 = vpop.permute.xlu0 %1751
      %1753 = vrot.lane.b32.xlu0 %v1666, 96
      %v1754 = vpop.permute.xlu0 %1753
      %1755 = vrot.lane.b32.xlu0 %v1667, 96
      %v1756 = vpop.permute.xlu0 %1755
      %1757 = vrot.lane.b32.xlu0 %v1668, 96
      %v1758 = vpop.permute.xlu0 %1757
      %1759 = vrot.lane.b32.xlu0 %v1669, 96
      %v1760 = vpop.permute.xlu0 %1759
      %1761 = vrot.lane.b32.xlu0 %v1670, 96
      %v1762 = vpop.permute.xlu0 %1761
      %1763 = vrot.lane.b32.xlu0 %v1671, 96
      %v1764 = vpop.permute.xlu0 %1763
      %1765 = vrot.lane.b32.xlu0 %v1672, 96
      %v1766 = vpop.permute.xlu0 %1765
      %1767 = vrot.lane.b32.xlu0 %v1673, 96
      %v1768 = vpop.permute.xlu0 %1767
      %1769 = vrot.lane.b32.xlu0 %v1674, 96
      %v1770 = vpop.permute.xlu0 %1769
      %vm1803 = vcmask 884480
      %1804 = vst.msk [vmem:[#allocation2] sm:$0xff] %vm1803, %v1708
      %1805 = vst.msk [vmem:[#allocation2 + $0x8] sm:$0xff] %vm1803, %v1710
      %1806 = vst.msk [vmem:[#allocation2 + $0x10] sm:$0xff] %vm1803, %v1712
      %1807 = vst.msk [vmem:[#allocation2 + $0x18] sm:$0xff] %vm1803, %v1714
      %1808 = vst.msk [vmem:[#allocation2 + $0x20] sm:$0xff] %vm1803, %v1716
      %1809 = vst.msk [vmem:[#allocation2 + $0x28] sm:$0xff] %vm1803, %v1718
      %1810 = vst.msk [vmem:[#allocation2 + $0x30] sm:$0xff] %vm1803, %v1720
      %1811 = vst.msk [vmem:[#allocation2 + $0x38] sm:$0xff] %vm1803, %v1722
      %1812 = vst.msk [vmem:[#allocation2 + $0x40] sm:$0xff] %vm1803, %v1724
      %1813 = vst.msk [vmem:[#allocation2 + $0x48] sm:$0xff] %vm1803, %v1726
      %1814 = vst.msk [vmem:[#allocation2 + $0x50] sm:$0xff] %vm1803, %v1728
      %1815 = vst.msk [vmem:[#allocation2 + $0x58] sm:$0xff] %vm1803, %v1730
      %1816 = vst.msk [vmem:[#allocation2 + $0x60] sm:$0xff] %vm1803, %v1732
      %1817 = vst.msk [vmem:[#allocation2 + $0x68] sm:$0xff] %vm1803, %v1734
      %1818 = vst.msk [vmem:[#allocation2 + $0x70] sm:$0xff] %vm1803, %v1736
      %1819 = vst.msk [vmem:[#allocation2 + $0x78] sm:$0xff] %vm1803, %v1738
      %1820 = vst.msk [vmem:[#allocation2 + $0x80] sm:$0xff] %vm1803, %v1740
      %1821 = vst.msk [vmem:[#allocation2 + $0x88] sm:$0xff] %vm1803, %v1742
      %1822 = vst.msk [vmem:[#allocation2 + $0x90] sm:$0xff] %vm1803, %v1744
      %1823 = vst.msk [vmem:[#allocation2 + $0x98] sm:$0xff] %vm1803, %v1746
      %1824 = vst.msk [vmem:[#allocation2 + $0xa0] sm:$0xff] %vm1803, %v1748
      %1825 = vst.msk [vmem:[#allocation2 + $0xa8] sm:$0xff] %vm1803, %v1750
      %1826 = vst.msk [vmem:[#allocation2 + $0xb0] sm:$0xff] %vm1803, %v1752
      %1827 = vst.msk [vmem:[#allocation2 + $0xb8] sm:$0xff] %vm1803, %v1754
      %1828 = vst.msk [vmem:[#allocation2 + $0xc0] sm:$0xff] %vm1803, %v1756
      %1829 = vst.msk [vmem:[#allocation2 + $0xc8] sm:$0xff] %vm1803, %v1758
      %1830 = vst.msk [vmem:[#allocation2 + $0xd0] sm:$0xff] %vm1803, %v1760
      %1831 = vst.msk [vmem:[#allocation2 + $0xd8] sm:$0xff] %vm1803, %v1762
      %1832 = vst.msk [vmem:[#allocation2 + $0xe0] sm:$0xff] %vm1803, %v1764
      %1833 = vst.msk [vmem:[#allocation2 + $0xe8] sm:$0xff] %vm1803, %v1766
      %1834 = vst.msk [vmem:[#allocation2 + $0xf0] sm:$0xff] %vm1803, %v1768
      %1835 = vst.msk [vmem:[#allocation2 + $0xf8] sm:$0xff] %vm1803, %v1770
      %v1836 = vld [vmem:[#allocation2] sm:$0xff]
      %v1837 = vld [vmem:[#allocation2 + $0x8] sm:$0xff]
      %v1838 = vld [vmem:[#allocation2 + $0x10] sm:$0xff]
      %v1839 = vld [vmem:[#allocation2 + $0x18] sm:$0xff]
      %v1840 = vld [vmem:[#allocation2 + $0x20] sm:$0xff]
      %v1841 = vld [vmem:[#allocation2 + $0x28] sm:$0xff]
      %v1842 = vld [vmem:[#allocation2 + $0x30] sm:$0xff]
      %v1843 = vld [vmem:[#allocation2 + $0x38] sm:$0xff]
      %v1844 = vld [vmem:[#allocation2 + $0x40] sm:$0xff]
      %v1845 = vld [vmem:[#allocation2 + $0x48] sm:$0xff]
      %v1846 = vld [vmem:[#allocation2 + $0x50] sm:$0xff]
      %v1847 = vld [vmem:[#allocation2 + $0x58] sm:$0xff]
      %v1848 = vld [vmem:[#allocation2 + $0x60] sm:$0xff]
      %v1849 = vld [vmem:[#allocation2 + $0x68] sm:$0xff]
      %v1850 = vld [vmem:[#allocation2 + $0x70] sm:$0xff]
      %v1851 = vld [vmem:[#allocation2 + $0x78] sm:$0xff]
      %v1852 = vld [vmem:[#allocation2 + $0x80] sm:$0xff]
      %v1853 = vld [vmem:[#allocation2 + $0x88] sm:$0xff]
      %v1854 = vld [vmem:[#allocation2 + $0x90] sm:$0xff]
      %v1855 = vld [vmem:[#allocation2 + $0x98] sm:$0xff]
      %v1856 = vld [vmem:[#allocation2 + $0xa0] sm:$0xff]
      %v1857 = vld [vmem:[#allocation2 + $0xa8] sm:$0xff]
      %v1858 = vld [vmem:[#allocation2 + $0xb0] sm:$0xff]
      %v1859 = vld [vmem:[#allocation2 + $0xb8] sm:$0xff]
      %v1860 = vld [vmem:[#allocation2 + $0xc0] sm:$0xff]
      %v1861 = vld [vmem:[#allocation2 + $0xc8] sm:$0xff]
      %v1862 = vld [vmem:[#allocation2 + $0xd0] sm:$0xff]
      %v1863 = vld [vmem:[#allocation2 + $0xd8] sm:$0xff]
      %v1864 = vld [vmem:[#allocation2 + $0xe0] sm:$0xff]
      %v1865 = vld [vmem:[#allocation2 + $0xe8] sm:$0xff]
      %v1866 = vld [vmem:[#allocation2 + $0xf0] sm:$0xff]
      %v1867 = vld [vmem:[#allocation2 + $0xf8] sm:$0xff]
      %v1868 = vld [vmem:[%s1] sm:$0xff]
      %v1869 = vld [vmem:[%s1 + $0x8] sm:$0xff]
      %v1870 = vld [vmem:[%s1 + $0x10] sm:$0xff]
      %v1871 = vld [vmem:[%s1 + $0x18] sm:$0xff]
      %v1872 = vld [vmem:[%s1 + $0x20] sm:$0xff]
      %v1873 = vld [vmem:[%s1 + $0x28] sm:$0xff]
      %v1874 = vld [vmem:[%s1 + $0x30] sm:$0xff]
      %v1875 = vld [vmem:[%s1 + $0x38] sm:$0xff]
      %v1876 = vld [vmem:[%s1 + $0x40] sm:$0xff]
      %v1877 = vld [vmem:[%s1 + $0x48] sm:$0xff]
      %v1878 = vld [vmem:[%s1 + $0x50] sm:$0xff]
      %v1879 = vld [vmem:[%s1 + $0x58] sm:$0xff]
      %v1880 = vld [vmem:[%s1 + $0x60] sm:$0xff]
      %v1881 = vld [vmem:[%s1 + $0x68] sm:$0xf]
      %v1882 = vld [vmem:[%s2] sm:$0x1]
      %v1884 = vlaneseq
      %v1885 = vshrl.u32 %v1884, 7
      %v1886 = vsub.s32 0, %v1885
      %v1887 = vrot.slane %v1882, %v1886
      %vm1889 = vcmask 883712
      %v1891 = vsel %vm1889, %v1836, 0
      %v1894 = vsel %vm1889, %v1837, 0
      %v1897 = vsel %vm1889, %v1838, 0
      %v1900 = vsel %vm1889, %v1839, 0
      %v1903 = vsel %vm1889, %v1840, 0
      %v1906 = vsel %vm1889, %v1841, 0
      %v1909 = vsel %vm1889, %v1842, 0
      %v1912 = vsel %vm1889, %v1843, 0
      %v1915 = vsel %vm1889, %v1844, 0
      %v1918 = vsel %vm1889, %v1845, 0
      %v1921 = vsel %vm1889, %v1846, 0
      %v1924 = vsel %vm1889, %v1847, 0
      %v1927 = vsel %vm1889, %v1848, 0
      %v1930 = vsel %vm1889, %v1849, 0
      %v1933 = vsel %vm1889, %v1850, 0
      %v1936 = vsel %vm1889, %v1851, 0
      %v1939 = vsel %vm1889, %v1852, 0
      %v1942 = vsel %vm1889, %v1853, 0
      %v1945 = vsel %vm1889, %v1854, 0
      %v1948 = vsel %vm1889, %v1855, 0
      %v1951 = vsel %vm1889, %v1856, 0
      %v1954 = vsel %vm1889, %v1857, 0
      %v1957 = vsel %vm1889, %v1858, 0
      %v1960 = vsel %vm1889, %v1859, 0
      %v1963 = vsel %vm1889, %v1860, 0
      %v1966 = vsel %vm1889, %v1861, 0
      %v1969 = vsel %vm1889, %v1862, 0
      %v1972 = vsel %vm1889, %v1863, 0
      %v1975 = vsel %vm1889, %v1864, 0
      %v1978 = vsel %vm1889, %v1865, 0
      %v1981 = vsel %vm1889, %v1866, 0
      %v1984 = vsel %vm1889, %v1867, 0
      %vm1986 = vcmask 1043456
      %v1988 = vsel %vm1986, %v1881, 0
      %1990 = vmatprep.subr.mxu0 0.0
      %1991 = vmatpush1.msra.mxu0 0.0
      %1992 = vmatprep.subr.mxu0 0.0
      %1993 = vmatpush1.msra.mxu0 0.0
      %1994 = vmatprep.subr.mxu0 0.0
      %1995 = vmatpush1.msra.mxu0 %v1988
      %1996 = vmatprep.subr.mxu0 0.0
      %1997 = vmatpush1.msra.mxu0 %v1880
      %1998 = vmatprep.subr.mxu0 0.0
      %1999 = vmatpush1.msra.mxu0 %v1879
      %2000 = vmatprep.subr.mxu0 0.0
      %2001 = vmatpush1.msra.mxu0 %v1878
      %2002 = vmatprep.subr.mxu0 0.0
      %2003 = vmatpush1.msra.mxu0 %v1877
      %2004 = vmatprep.subr.mxu0 0.0
      %2005 = vmatpush1.msra.mxu0 %v1876
      %2006 = vmatprep.subr.mxu0 0.0
      %2007 = vmatpush1.msra.mxu0 %v1875
      %2008 = vmatprep.subr.mxu0 0.0
      %2009 = vmatpush1.msra.mxu0 %v1874
      %2010 = vmatprep.subr.mxu0 0.0
      %2011 = vmatpush1.msra.mxu0 %v1873
      %2012 = vmatprep.subr.mxu0 0.0
      %2013 = vmatpush1.msra.mxu0 %v1872
      %2014 = vmatprep.subr.mxu0 0.0
      %2015 = vmatpush1.msra.mxu0 %v1871
      %2016 = vmatprep.subr.mxu0 0.0
      %2017 = vmatpush1.msra.mxu0 %v1870
      %2018 = vmatprep.subr.mxu0 0.0
      %2019 = vmatpush1.msra.mxu0 %v1869
      %2020 = vmatprep.subr.mxu0 0.0
      %2021 = vmatpush1.msra.mxu0 %v1868
      %2022 = vmatprep.subr.mxu0 0.0
      %2023 = vmatpush2.msra.mxu0 0.0
      %2024 = vmatprep.subr.mxu0 0.0
      %2025 = vmatpush2.msra.mxu0 0.0
      %2026 = vmatprep.subr.mxu0 0.0
      %2027 = vmatpush2.msra.mxu0 0.0
      %2028 = vmatprep.subr.mxu0 0.0
      %2029 = vmatpush2.msra.mxu0 0.0
      %2030 = vmatprep.subr.mxu0 0.0
      %2031 = vmatpush2.msra.mxu0 0.0
      %2032 = vmatprep.subr.mxu0 0.0
      %2033 = vmatpush2.msra.mxu0 0.0
      %2034 = vmatprep.subr.mxu0 0.0
      %2035 = vmatpush2.msra.mxu0 0.0
      %2036 = vmatprep.subr.mxu0 0.0
      %2037 = vmatpush2.msra.mxu0 0.0
      %2038 = vmatprep.subr.mxu0 0.0
      %2039 = vmatpush2.msra.mxu0 0.0
      %2040 = vmatprep.subr.mxu0 0.0
      %2041 = vmatpush2.msra.mxu0 0.0
      %2042 = vmatprep.subr.mxu0 0.0
      %2043 = vmatpush2.msra.mxu0 0.0
      %2044 = vmatprep.subr.mxu0 0.0
      %2045 = vmatpush2.msra.mxu0 0.0
      %2046 = vmatprep.subr.mxu0 0.0
      %2047 = vmatpush2.msra.mxu0 0.0
      %2048 = vmatprep.subr.mxu0 0.0
      %2049 = vmatpush2.msra.mxu0 0.0
      %2050 = vmatprep.subr.mxu0 0.0
      %2051 = vmatpush2.msra.mxu0 0.0
      %2052 = vmatprep.subr.mxu0 0.0
      %2053 = vmatpush2.msra.mxu0 0.0
      %2054 = vmatprep.mubr.f32.mxu0 0.0
      %2055 = vmatmul.mubr.f32.gmra.mxu0 %v1891
      %v2056 = vpop.f32.mrf.mxu0
      %v2057 = vadd.f32 %v1887, %v2056
      %v2058 = vpop.f32.mrf.mxu0
      %2059 = vmatprep.mubr.f32.mxu0 0.0
      %2060 = vmatmul.mubr.f32.gmra.mxu0 %v1894
      %v2061 = vpop.f32.mrf.mxu0
      %v2062 = vadd.f32 %v1887, %v2061
      %v2063 = vpop.f32.mrf.mxu0
      %2064 = vmatprep.mubr.f32.mxu0 0.0
      %2065 = vmatmul.mubr.f32.gmra.mxu0 %v1897
      %v2066 = vpop.f32.mrf.mxu0
      %v2067 = vadd.f32 %v1887, %v2066
      %v2068 = vpop.f32.mrf.mxu0
      %2069 = vmatprep.mubr.f32.mxu0 0.0
      %2070 = vmatmul.mubr.f32.gmra.mxu0 %v1900
      %v2071 = vpop.f32.mrf.mxu0
      %v2072 = vadd.f32 %v1887, %v2071
      %v2073 = vpop.f32.mrf.mxu0
      %2074 = vmatprep.mubr.f32.mxu0 0.0
      %2075 = vmatmul.mubr.f32.gmra.mxu0 %v1903
      %v2076 = vpop.f32.mrf.mxu0
      %v2077 = vadd.f32 %v1887, %v2076
      %v2078 = vpop.f32.mrf.mxu0
      %2079 = vmatprep.mubr.f32.mxu0 0.0
      %2080 = vmatmul.mubr.f32.gmra.mxu0 %v1906
      %v2081 = vpop.f32.mrf.mxu0
      %v2082 = vadd.f32 %v1887, %v2081
      %v2083 = vpop.f32.mrf.mxu0
      %2084 = vmatprep.mubr.f32.mxu0 0.0
      %2085 = vmatmul.mubr.f32.gmra.mxu0 %v1909
      %v2086 = vpop.f32.mrf.mxu0
      %v2087 = vadd.f32 %v1887, %v2086
      %v2088 = vpop.f32.mrf.mxu0
      %2089 = vmatprep.mubr.f32.mxu0 0.0
      %2090 = vmatmul.mubr.f32.gmra.mxu0 %v1912
      %v2091 = vpop.f32.mrf.mxu0
      %v2092 = vadd.f32 %v1887, %v2091
      %v2093 = vpop.f32.mrf.mxu0
      %2094 = vmatprep.mubr.f32.mxu0 0.0
      %2095 = vmatmul.mubr.f32.gmra.mxu0 %v1915
      %v2096 = vpop.f32.mrf.mxu0
      %v2097 = vadd.f32 %v1887, %v2096
      %v2098 = vpop.f32.mrf.mxu0
      %2099 = vmatprep.mubr.f32.mxu0 0.0
      %2100 = vmatmul.mubr.f32.gmra.mxu0 %v1918
      %v2101 = vpop.f32.mrf.mxu0
      %v2102 = vadd.f32 %v1887, %v2101
      %v2103 = vpop.f32.mrf.mxu0
      %2104 = vmatprep.mubr.f32.mxu0 0.0
      %2105 = vmatmul.mubr.f32.gmra.mxu0 %v1921
      %v2106 = vpop.f32.mrf.mxu0
      %v2107 = vadd.f32 %v1887, %v2106
      %v2108 = vpop.f32.mrf.mxu0
      %2109 = vmatprep.mubr.f32.mxu0 0.0
      %2110 = vmatmul.mubr.f32.gmra.mxu0 %v1924
      %v2111 = vpop.f32.mrf.mxu0
      %v2112 = vadd.f32 %v1887, %v2111
      %v2113 = vpop.f32.mrf.mxu0
      %2114 = vmatprep.mubr.f32.mxu0 0.0
      %2115 = vmatmul.mubr.f32.gmra.mxu0 %v1927
      %v2116 = vpop.f32.mrf.mxu0
      %v2117 = vadd.f32 %v1887, %v2116
      %v2118 = vpop.f32.mrf.mxu0
      %2119 = vmatprep.mubr.f32.mxu0 0.0
      %2120 = vmatmul.mubr.f32.gmra.mxu0 %v1930
      %v2121 = vpop.f32.mrf.mxu0
      %v2122 = vadd.f32 %v1887, %v2121
      %v2123 = vpop.f32.mrf.mxu0
      %2124 = vmatprep.mubr.f32.mxu0 0.0
      %2125 = vmatmul.mubr.f32.gmra.mxu0 %v1933
      %v2126 = vpop.f32.mrf.mxu0
      %v2127 = vadd.f32 %v1887, %v2126
      %v2128 = vpop.f32.mrf.mxu0
      %2129 = vmatprep.mubr.f32.mxu0 0.0
      %2130 = vmatmul.mubr.f32.gmra.mxu0 %v1936
      %v2131 = vpop.f32.mrf.mxu0
      %v2132 = vadd.f32 %v1887, %v2131
      %v2133 = vpop.f32.mrf.mxu0
      %2134 = vmatprep.mubr.f32.mxu0 0.0
      %2135 = vmatmul.mubr.f32.gmra.mxu0 %v1939
      %v2136 = vpop.f32.mrf.mxu0
      %v2137 = vadd.f32 %v1887, %v2136
      %v2138 = vpop.f32.mrf.mxu0
      %2139 = vmatprep.mubr.f32.mxu0 0.0
      %2140 = vmatmul.mubr.f32.gmra.mxu0 %v1942
      %v2141 = vpop.f32.mrf.mxu0
      %v2142 = vadd.f32 %v1887, %v2141
      %v2143 = vpop.f32.mrf.mxu0
      %2144 = vmatprep.mubr.f32.mxu0 0.0
      %2145 = vmatmul.mubr.f32.gmra.mxu0 %v1945
      %v2146 = vpop.f32.mrf.mxu0
      %v2147 = vadd.f32 %v1887, %v2146
      %v2148 = vpop.f32.mrf.mxu0
      %2149 = vmatprep.mubr.f32.mxu0 0.0
      %2150 = vmatmul.mubr.f32.gmra.mxu0 %v1948
      %v2151 = vpop.f32.mrf.mxu0
      %v2152 = vadd.f32 %v1887, %v2151
      %v2153 = vpop.f32.mrf.mxu0
      %2154 = vmatprep.mubr.f32.mxu0 0.0
      %2155 = vmatmul.mubr.f32.gmra.mxu0 %v1951
      %v2156 = vpop.f32.mrf.mxu0
      %v2157 = vadd.f32 %v1887, %v2156
      %v2158 = vpop.f32.mrf.mxu0
      %2159 = vmatprep.mubr.f32.mxu0 0.0
      %2160 = vmatmul.mubr.f32.gmra.mxu0 %v1954
      %v2161 = vpop.f32.mrf.mxu0
      %v2162 = vadd.f32 %v1887, %v2161
      %v2163 = vpop.f32.mrf.mxu0
      %2164 = vmatprep.mubr.f32.mxu0 0.0
      %2165 = vmatmul.mubr.f32.gmra.mxu0 %v1957
      %v2166 = vpop.f32.mrf.mxu0
      %v2167 = vadd.f32 %v1887, %v2166
      %v2168 = vpop.f32.mrf.mxu0
      %2169 = vmatprep.mubr.f32.mxu0 0.0
      %2170 = vmatmul.mubr.f32.gmra.mxu0 %v1960
      %v2171 = vpop.f32.mrf.mxu0
      %v2172 = vadd.f32 %v1887, %v2171
      %v2173 = vpop.f32.mrf.mxu0
      %2174 = vmatprep.mubr.f32.mxu0 0.0
      %2175 = vmatmul.mubr.f32.gmra.mxu0 %v1963
      %v2176 = vpop.f32.mrf.mxu0
      %v2177 = vadd.f32 %v1887, %v2176
      %v2178 = vpop.f32.mrf.mxu0
      %2179 = vmatprep.mubr.f32.mxu0 0.0
      %2180 = vmatmul.mubr.f32.gmra.mxu0 %v1966
      %v2181 = vpop.f32.mrf.mxu0
      %v2182 = vadd.f32 %v1887, %v2181
      %v2183 = vpop.f32.mrf.mxu0
      %2184 = vmatprep.mubr.f32.mxu0 0.0
      %2185 = vmatmul.mubr.f32.gmra.mxu0 %v1969
      %v2186 = vpop.f32.mrf.mxu0
      %v2187 = vadd.f32 %v1887, %v2186
      %v2188 = vpop.f32.mrf.mxu0
      %2189 = vmatprep.mubr.f32.mxu0 0.0
      %2190 = vmatmul.mubr.f32.gmra.mxu0 %v1972
      %v2191 = vpop.f32.mrf.mxu0
      %v2192 = vadd.f32 %v1887, %v2191
      %v2193 = vpop.f32.mrf.mxu0
      %2194 = vmatprep.mubr.f32.mxu0 0.0
      %2195 = vmatmul.mubr.f32.gmra.mxu0 %v1975
      %v2196 = vpop.f32.mrf.mxu0
      %v2197 = vadd.f32 %v1887, %v2196
      %v2198 = vpop.f32.mrf.mxu0
      %2199 = vmatprep.mubr.f32.mxu0 0.0
      %2200 = vmatmul.mubr.f32.gmra.mxu0 %v1978
      %v2201 = vpop.f32.mrf.mxu0
      %v2202 = vadd.f32 %v1887, %v2201
      %v2203 = vpop.f32.mrf.mxu0
      %2204 = vmatprep.mubr.f32.mxu0 0.0
      %2205 = vmatmul.mubr.f32.gmra.mxu0 %v1981
      %v2206 = vpop.f32.mrf.mxu0
      %v2207 = vadd.f32 %v1887, %v2206
      %v2208 = vpop.f32.mrf.mxu0
      %2209 = vmatprep.mubr.f32.mxu0 0.0
      %2210 = vmatmul.mubr.f32.gmra.mxu0 %v1984
      %v2211 = vpop.f32.mrf.mxu0
      %v2212 = vadd.f32 %v1887, %v2211
      %v2213 = vpop.f32.mrf.mxu0
      %2214 = vdwg.mxu0
      %vm2215 = vcmask 64512
      %2216 = vst.msk [vmem:[#allocation3] sm:$0xff] %vm2215, 0.0
      %2217 = vst.msk [vmem:[#allocation3 + $0x8] sm:$0xff] %vm2215, 0.0
      %2218 = vst.msk [vmem:[#allocation3 + $0x10] sm:$0xff] %vm2215, 0.0
      %2219 = vst.msk [vmem:[#allocation3 + $0x18] sm:$0xff] %vm2215, 0.0
      %2220 = vst.msk [vmem:[#allocation3 + $0x20] sm:$0xff] %vm2215, 0.0
      %2221 = vst.msk [vmem:[#allocation3 + $0x28] sm:$0xff] %vm2215, 0.0
      %2222 = vst.msk [vmem:[#allocation3 + $0x30] sm:$0xff] %vm2215, 0.0
      %2223 = vst.msk [vmem:[#allocation3 + $0x38] sm:$0xff] %vm2215, 0.0
      %2224 = vst.msk [vmem:[#allocation3 + $0x40] sm:$0xff] %vm2215, 0.0
      %2225 = vst.msk [vmem:[#allocation3 + $0x48] sm:$0xff] %vm2215, 0.0
      %2226 = vst.msk [vmem:[#allocation3 + $0x50] sm:$0xff] %vm2215, 0.0
      %2227 = vst.msk [vmem:[#allocation3 + $0x58] sm:$0xff] %vm2215, 0.0
      %2228 = vst.msk [vmem:[#allocation3 + $0x60] sm:$0xff] %vm2215, 0.0
      %2229 = vst.msk [vmem:[#allocation3 + $0x68] sm:$0xff] %vm2215, 0.0
      %2230 = vst.msk [vmem:[#allocation3 + $0x70] sm:$0xff] %vm2215, 0.0
      %2231 = vst.msk [vmem:[#allocation3 + $0x78] sm:$0xff] %vm2215, 0.0
      %2232 = vst.msk [vmem:[#allocation3 + $0x80] sm:$0xff] %vm2215, 0.0
      %2233 = vst.msk [vmem:[#allocation3 + $0x88] sm:$0xff] %vm2215, 0.0
      %2234 = vst.msk [vmem:[#allocation3 + $0x90] sm:$0xff] %vm2215, 0.0
      %2235 = vst.msk [vmem:[#allocation3 + $0x98] sm:$0xff] %vm2215, 0.0
      %2236 = vst.msk [vmem:[#allocation3 + $0xa0] sm:$0xff] %vm2215, 0.0
      %2237 = vst.msk [vmem:[#allocation3 + $0xa8] sm:$0xff] %vm2215, 0.0
      %2238 = vst.msk [vmem:[#allocation3 + $0xb0] sm:$0xff] %vm2215, 0.0
      %2239 = vst.msk [vmem:[#allocation3 + $0xb8] sm:$0xff] %vm2215, 0.0
      %2240 = vst.msk [vmem:[#allocation3 + $0xc0] sm:$0xff] %vm2215, 0.0
      %2241 = vst.msk [vmem:[#allocation3 + $0xc8] sm:$0xff] %vm2215, 0.0
      %2242 = vst.msk [vmem:[#allocation3 + $0xd0] sm:$0xff] %vm2215, 0.0
      %2243 = vst.msk [vmem:[#allocation3 + $0xd8] sm:$0xff] %vm2215, 0.0
      %2244 = vst.msk [vmem:[#allocation3 + $0xe0] sm:$0xff] %vm2215, 0.0
      %2245 = vst.msk [vmem:[#allocation3 + $0xe8] sm:$0xff] %vm2215, 0.0
      %2246 = vst.msk [vmem:[#allocation3 + $0xf0] sm:$0xff] %vm2215, 0.0
      %2247 = vst.msk [vmem:[#allocation3 + $0xf8] sm:$0xff] %vm2215, 0.0
      %2248 = vst.msk [vmem:[#allocation3 + $0x100] sm:$0xff] %vm2215, 0.0
      %2249 = vst.msk [vmem:[#allocation3 + $0x108] sm:$0xff] %vm2215, 0.0
      %2250 = vst.msk [vmem:[#allocation3 + $0x110] sm:$0xff] %vm2215, 0.0
      %2251 = vst.msk [vmem:[#allocation3 + $0x118] sm:$0xff] %vm2215, 0.0
      %2252 = vst.msk [vmem:[#allocation3 + $0x120] sm:$0xff] %vm2215, 0.0
      %2253 = vst.msk [vmem:[#allocation3 + $0x128] sm:$0xff] %vm2215, 0.0
      %2254 = vst.msk [vmem:[#allocation3 + $0x130] sm:$0xff] %vm2215, 0.0
      %2255 = vst.msk [vmem:[#allocation3 + $0x138] sm:$0xff] %vm2215, 0.0
      %2256 = vst.msk [vmem:[#allocation3 + $0x140] sm:$0xff] %vm2215, 0.0
      %2257 = vst.msk [vmem:[#allocation3 + $0x148] sm:$0xff] %vm2215, 0.0
      %2258 = vst.msk [vmem:[#allocation3 + $0x150] sm:$0xff] %vm2215, 0.0
      %2259 = vst.msk [vmem:[#allocation3 + $0x158] sm:$0xff] %vm2215, 0.0
      %2260 = vst.msk [vmem:[#allocation3 + $0x160] sm:$0xff] %vm2215, 0.0
      %2261 = vst.msk [vmem:[#allocation3 + $0x168] sm:$0xff] %vm2215, 0.0
      %2262 = vst.msk [vmem:[#allocation3 + $0x170] sm:$0xff] %vm2215, 0.0
      %2263 = vst.msk [vmem:[#allocation3 + $0x178] sm:$0xff] %vm2215, 0.0
      %2264 = vst.msk [vmem:[#allocation3 + $0x180] sm:$0xff] %vm2215, 0.0
      %2265 = vst.msk [vmem:[#allocation3 + $0x188] sm:$0xff] %vm2215, 0.0
      %2266 = vst.msk [vmem:[#allocation3 + $0x190] sm:$0xff] %vm2215, 0.0
      %2267 = vst.msk [vmem:[#allocation3 + $0x198] sm:$0xff] %vm2215, 0.0
      %2268 = vst.msk [vmem:[#allocation3 + $0x1a0] sm:$0xff] %vm2215, 0.0
      %2269 = vst.msk [vmem:[#allocation3 + $0x1a8] sm:$0xff] %vm2215, 0.0
      %2270 = vst.msk [vmem:[#allocation3 + $0x1b0] sm:$0xff] %vm2215, 0.0
      %2271 = vst.msk [vmem:[#allocation3 + $0x1b8] sm:$0xff] %vm2215, 0.0
      %2272 = vst.msk [vmem:[#allocation3 + $0x1c0] sm:$0xff] %vm2215, 0.0
      %2273 = vst.msk [vmem:[#allocation3 + $0x1c8] sm:$0xff] %vm2215, 0.0
      %2274 = vst.msk [vmem:[#allocation3 + $0x1d0] sm:$0xff] %vm2215, 0.0
      %2275 = vst.msk [vmem:[#allocation3 + $0x1d8] sm:$0xff] %vm2215, 0.0
      %2276 = vst.msk [vmem:[#allocation3 + $0x1e0] sm:$0xff] %vm2215, 0.0
      %2277 = vst.msk [vmem:[#allocation3 + $0x1e8] sm:$0xff] %vm2215, 0.0
      %2278 = vst.msk [vmem:[#allocation3 + $0x1f0] sm:$0xff] %vm2215, 0.0
      %2279 = vst.msk [vmem:[#allocation3 + $0x1f8] sm:$0xff] %vm2215, 0.0
      %2280 = vst.msk [vmem:[#allocation3 + $0x200] sm:$0xff] %vm2215, 0.0
      %2281 = vst.msk [vmem:[#allocation3 + $0x208] sm:$0xff] %vm2215, 0.0
      %2282 = vst.msk [vmem:[#allocation3 + $0x210] sm:$0xff] %vm2215, 0.0
      %2283 = vst.msk [vmem:[#allocation3 + $0x218] sm:$0xff] %vm2215, 0.0
      %2284 = vst.msk [vmem:[#allocation3 + $0x220] sm:$0xff] %vm2215, 0.0
      %2285 = vst.msk [vmem:[#allocation3 + $0x228] sm:$0xff] %vm2215, 0.0
      %2286 = vst.msk [vmem:[#allocation3 + $0x230] sm:$0xff] %vm2215, 0.0
      %2287 = vst.msk [vmem:[#allocation3 + $0x238] sm:$0xff] %vm2215, 0.0
      %s2288 = scalar_lea.vmem [#allocation3], 32
      %2289 = vst.msk [vmem:[%s2288 + $0x8] sm:$0xff] %vm2215, %v2057
      %2290 = vst.msk [vmem:[%s2288 + $0x10] sm:$0xff] %vm2215, %v2062
      %2291 = vst.msk [vmem:[%s2288 + $0x28] sm:$0xff] %vm2215, %v2067
      %2292 = vst.msk [vmem:[%s2288 + $0x30] sm:$0xff] %vm2215, %v2072
      %2293 = vst.msk [vmem:[%s2288 + $0x48] sm:$0xff] %vm2215, %v2077
      %2294 = vst.msk [vmem:[%s2288 + $0x50] sm:$0xff] %vm2215, %v2082
      %2295 = vst.msk [vmem:[%s2288 + $0x68] sm:$0xff] %vm2215, %v2087
      %2296 = vst.msk [vmem:[%s2288 + $0x70] sm:$0xff] %vm2215, %v2092
      %2297 = vst.msk [vmem:[%s2288 + $0x88] sm:$0xff] %vm2215, %v2097
      %2298 = vst.msk [vmem:[%s2288 + $0x90] sm:$0xff] %vm2215, %v2102
      %2299 = vst.msk [vmem:[%s2288 + $0xa8] sm:$0xff] %vm2215, %v2107
      %2300 = vst.msk [vmem:[%s2288 + $0xb0] sm:$0xff] %vm2215, %v2112
      %2301 = vst.msk [vmem:[%s2288 + $0xc8] sm:$0xff] %vm2215, %v2117
      %2302 = vst.msk [vmem:[%s2288 + $0xd0] sm:$0xff] %vm2215, %v2122
      %2303 = vst.msk [vmem:[%s2288 + $0xe8] sm:$0xff] %vm2215, %v2127
      %2304 = vst.msk [vmem:[%s2288 + $0xf0] sm:$0xff] %vm2215, %v2132
      %2305 = vst.msk [vmem:[%s2288 + $0x108] sm:$0xff] %vm2215, %v2137
      %2306 = vst.msk [vmem:[%s2288 + $0x110] sm:$0xff] %vm2215, %v2142
      %2307 = vst.msk [vmem:[%s2288 + $0x128] sm:$0xff] %vm2215, %v2147
      %2308 = vst.msk [vmem:[%s2288 + $0x130] sm:$0xff] %vm2215, %v2152
      %2309 = vst.msk [vmem:[%s2288 + $0x148] sm:$0xff] %vm2215, %v2157
      %2310 = vst.msk [vmem:[%s2288 + $0x150] sm:$0xff] %vm2215, %v2162
      %2311 = vst.msk [vmem:[%s2288 + $0x168] sm:$0xff] %vm2215, %v2167
      %2312 = vst.msk [vmem:[%s2288 + $0x170] sm:$0xff] %vm2215, %v2172
      %2313 = vst.msk [vmem:[%s2288 + $0x188] sm:$0xff] %vm2215, %v2177
      %2314 = vst.msk [vmem:[%s2288 + $0x190] sm:$0xff] %vm2215, %v2182
      %2315 = vst.msk [vmem:[%s2288 + $0x1a8] sm:$0xff] %vm2215, %v2187
      %2316 = vst.msk [vmem:[%s2288 + $0x1b0] sm:$0xff] %vm2215, %v2192
      %2317 = vst.msk [vmem:[%s2288 + $0x1c8] sm:$0xff] %vm2215, %v2197
      %2318 = vst.msk [vmem:[%s2288 + $0x1d0] sm:$0xff] %vm2215, %v2202
      %2319 = vst.msk [vmem:[%s2288 + $0x1e8] sm:$0xff] %vm2215, %v2207
      %2320 = vst.msk [vmem:[%s2288 + $0x1f0] sm:$0xff] %vm2215, %v2212
      %v2321 = vld [vmem:[#allocation3 + $0x7] sm:$0xff]
      %v2322 = vld [vmem:[#allocation3 + $0xf] sm:$0xff]
      %v2323 = vld [vmem:[#allocation3 + $0x27] sm:$0xff]
      %v2324 = vld [vmem:[#allocation3 + $0x2f] sm:$0xff]
      %v2325 = vld [vmem:[#allocation3 + $0x47] sm:$0xff]
      %v2326 = vld [vmem:[#allocation3 + $0x4f] sm:$0xff]
      %v2327 = vld [vmem:[#allocation3 + $0x67] sm:$0xff]
      %v2328 = vld [vmem:[#allocation3 + $0x6f] sm:$0xff]
      %v2329 = vld [vmem:[#allocation3 + $0x87] sm:$0xff]
      %v2330 = vld [vmem:[#allocation3 + $0x8f] sm:$0xff]
      %v2331 = vld [vmem:[#allocation3 + $0xa7] sm:$0xff]
      %v2332 = vld [vmem:[#allocation3 + $0xaf] sm:$0xff]
      %v2333 = vld [vmem:[#allocation3 + $0xc7] sm:$0xff]
      %v2334 = vld [vmem:[#allocation3 + $0xcf] sm:$0xff]
      %v2335 = vld [vmem:[#allocation3 + $0xe7] sm:$0xff]
      %v2336 = vld [vmem:[#allocation3 + $0xef] sm:$0xff]
      %v2337 = vld [vmem:[#allocation3 + $0x107] sm:$0xff]
      %v2338 = vld [vmem:[#allocation3 + $0x10f] sm:$0xff]
      %v2339 = vld [vmem:[#allocation3 + $0x127] sm:$0xff]
      %v2340 = vld [vmem:[#allocation3 + $0x12f] sm:$0xff]
      %v2341 = vld [vmem:[#allocation3 + $0x147] sm:$0xff]
      %v2342 = vld [vmem:[#allocation3 + $0x14f] sm:$0xff]
      %v2343 = vld [vmem:[#allocation3 + $0x167] sm:$0xff]
      %v2344 = vld [vmem:[#allocation3 + $0x16f] sm:$0xff]
      %v2345 = vld [vmem:[#allocation3 + $0x187] sm:$0xff]
      %v2346 = vld [vmem:[#allocation3 + $0x18f] sm:$0xff]
      %v2347 = vld [vmem:[#allocation3 + $0x1a7] sm:$0xff]
      %v2348 = vld [vmem:[#allocation3 + $0x1af] sm:$0xff]
      %v2349 = vld [vmem:[#allocation3 + $0x1c7] sm:$0xff]
      %v2350 = vld [vmem:[#allocation3 + $0x1cf] sm:$0xff]
      %v2351 = vld [vmem:[#allocation3 + $0x1e7] sm:$0xff]
      %v2352 = vld [vmem:[#allocation3 + $0x1ef] sm:$0xff]
      %2353 = vst.msk [vmem:[#allocation4] sm:$0xff] %vm2215, %v2321
      %2354 = vst.msk [vmem:[#allocation4 + $0x8] sm:$0xff] %vm2215, %v2322
      %2355 = vst.msk [vmem:[#allocation4 + $0x10] sm:$0xff] %vm2215, %v2323
      %2356 = vst.msk [vmem:[#allocation4 + $0x18] sm:$0xff] %vm2215, %v2324
      %2357 = vst.msk [vmem:[#allocation4 + $0x20] sm:$0xff] %vm2215, %v2325
      %2358 = vst.msk [vmem:[#allocation4 + $0x28] sm:$0xff] %vm2215, %v2326
      %2359 = vst.msk [vmem:[#allocation4 + $0x30] sm:$0xff] %vm2215, %v2327
      %2360 = vst.msk [vmem:[#allocation4 + $0x38] sm:$0xff] %vm2215, %v2328
      %2361 = vst.msk [vmem:[#allocation4 + $0x40] sm:$0xff] %vm2215, %v2329
      %2362 = vst.msk [vmem:[#allocation4 + $0x48] sm:$0xff] %vm2215, %v2330
      %2363 = vst.msk [vmem:[#allocation4 + $0x50] sm:$0xff] %vm2215, %v2331
      %2364 = vst.msk [vmem:[#allocation4 + $0x58] sm:$0xff] %vm2215, %v2332
      %2365 = vst.msk [vmem:[#allocation4 + $0x60] sm:$0xff] %vm2215, %v2333
      %2366 = vst.msk [vmem:[#allocation4 + $0x68] sm:$0xff] %vm2215, %v2334
      %2367 = vst.msk [vmem:[#allocation4 + $0x70] sm:$0xff] %vm2215, %v2335
      %2368 = vst.msk [vmem:[#allocation4 + $0x78] sm:$0xff] %vm2215, %v2336
      %2369 = vst.msk [vmem:[#allocation4 + $0x80] sm:$0xff] %vm2215, %v2337
      %2370 = vst.msk [vmem:[#allocation4 + $0x88] sm:$0xff] %vm2215, %v2338
      %2371 = vst.msk [vmem:[#allocation4 + $0x90] sm:$0xff] %vm2215, %v2339
      %2372 = vst.msk [vmem:[#allocation4 + $0x98] sm:$0xff] %vm2215, %v2340
      %2373 = vst.msk [vmem:[#allocation4 + $0xa0] sm:$0xff] %vm2215, %v2341
      %2374 = vst.msk [vmem:[#allocation4 + $0xa8] sm:$0xff] %vm2215, %v2342
      %2375 = vst.msk [vmem:[#allocation4 + $0xb0] sm:$0xff] %vm2215, %v2343
      %2376 = vst.msk [vmem:[#allocation4 + $0xb8] sm:$0xff] %vm2215, %v2344
      %2377 = vst.msk [vmem:[#allocation4 + $0xc0] sm:$0xff] %vm2215, %v2345
      %2378 = vst.msk [vmem:[#allocation4 + $0xc8] sm:$0xff] %vm2215, %v2346
      %2379 = vst.msk [vmem:[#allocation4 + $0xd0] sm:$0xff] %vm2215, %v2347
      %2380 = vst.msk [vmem:[#allocation4 + $0xd8] sm:$0xff] %vm2215, %v2348
      %2381 = vst.msk [vmem:[#allocation4 + $0xe0] sm:$0xff] %vm2215, %v2349
      %2382 = vst.msk [vmem:[#allocation4 + $0xe8] sm:$0xff] %vm2215, %v2350
      %2383 = vst.msk [vmem:[#allocation4 + $0xf0] sm:$0xff] %vm2215, %v2351
      %2384 = vst.msk [vmem:[#allocation4 + $0xf8] sm:$0xff] %vm2215, %v2352
      %v2385 = vld [vmem:[#allocation3 + $0x8] sm:$0xff]
      %v2386 = vld [vmem:[#allocation3 + $0x10] sm:$0xff]
      %v2387 = vld [vmem:[#allocation3 + $0x28] sm:$0xff]
      %v2388 = vld [vmem:[#allocation3 + $0x30] sm:$0xff]
      %v2389 = vld [vmem:[#allocation3 + $0x48] sm:$0xff]
      %v2390 = vld [vmem:[#allocation3 + $0x50] sm:$0xff]
      %v2391 = vld [vmem:[#allocation3 + $0x68] sm:$0xff]
      %v2392 = vld [vmem:[#allocation3 + $0x70] sm:$0xff]
      %v2393 = vld [vmem:[#allocation3 + $0x88] sm:$0xff]
      %v2394 = vld [vmem:[#allocation3 + $0x90] sm:$0xff]
      %v2395 = vld [vmem:[#allocation3 + $0xa8] sm:$0xff]
      %v2396 = vld [vmem:[#allocation3 + $0xb0] sm:$0xff]
      %v2397 = vld [vmem:[#allocation3 + $0xc8] sm:$0xff]
      %v2398 = vld [vmem:[#allocation3 + $0xd0] sm:$0xff]
      %v2399 = vld [vmem:[#allocation3 + $0xe8] sm:$0xff]
      %v2400 = vld [vmem:[#allocation3 + $0xf0] sm:$0xff]
      %v2401 = vld [vmem:[#allocation3 + $0x108] sm:$0xff]
      %v2402 = vld [vmem:[#allocation3 + $0x110] sm:$0xff]
      %v2403 = vld [vmem:[#allocation3 + $0x128] sm:$0xff]
      %v2404 = vld [vmem:[#allocation3 + $0x130] sm:$0xff]
      %v2405 = vld [vmem:[#allocation3 + $0x148] sm:$0xff]
      %v2406 = vld [vmem:[#allocation3 + $0x150] sm:$0xff]
      %v2407 = vld [vmem:[#allocation3 + $0x168] sm:$0xff]
      %v2408 = vld [vmem:[#allocation3 + $0x170] sm:$0xff]
      %v2409 = vld [vmem:[#allocation3 + $0x188] sm:$0xff]
      %v2410 = vld [vmem:[#allocation3 + $0x190] sm:$0xff]
      %v2411 = vld [vmem:[#allocation3 + $0x1a8] sm:$0xff]
      %v2412 = vld [vmem:[#allocation3 + $0x1b0] sm:$0xff]
      %v2413 = vld [vmem:[#allocation3 + $0x1c8] sm:$0xff]
      %v2414 = vld [vmem:[#allocation3 + $0x1d0] sm:$0xff]
      %v2415 = vld [vmem:[#allocation3 + $0x1e8] sm:$0xff]
      %v2416 = vld [vmem:[#allocation3 + $0x1f0] sm:$0xff]
      %2449 = vrot.lane.b32.xlu0 %v2385, 8
      %v2450 = vpop.permute.xlu0 %2449
      %2451 = vrot.lane.b32.xlu0 %v2386, 8
      %v2452 = vpop.permute.xlu0 %2451
      %2453 = vrot.lane.b32.xlu0 %v2387, 8
      %v2454 = vpop.permute.xlu0 %2453
      %2455 = vrot.lane.b32.xlu0 %v2388, 8
      %v2456 = vpop.permute.xlu0 %2455
      %2457 = vrot.lane.b32.xlu0 %v2389, 8
      %v2458 = vpop.permute.xlu0 %2457
      %2459 = vrot.lane.b32.xlu0 %v2390, 8
      %v2460 = vpop.permute.xlu0 %2459
      %2461 = vrot.lane.b32.xlu0 %v2391, 8
      %v2462 = vpop.permute.xlu0 %2461
      %2463 = vrot.lane.b32.xlu0 %v2392, 8
      %v2464 = vpop.permute.xlu0 %2463
      %2465 = vrot.lane.b32.xlu0 %v2393, 8
      %v2466 = vpop.permute.xlu0 %2465
      %2467 = vrot.lane.b32.xlu0 %v2394, 8
      %v2468 = vpop.permute.xlu0 %2467
      %2469 = vrot.lane.b32.xlu0 %v2395, 8
      %v2470 = vpop.permute.xlu0 %2469
      %2471 = vrot.lane.b32.xlu0 %v2396, 8
      %v2472 = vpop.permute.xlu0 %2471
      %2473 = vrot.lane.b32.xlu0 %v2397, 8
      %v2474 = vpop.permute.xlu0 %2473
      %2475 = vrot.lane.b32.xlu0 %v2398, 8
      %v2476 = vpop.permute.xlu0 %2475
      %2477 = vrot.lane.b32.xlu0 %v2399, 8
      %v2478 = vpop.permute.xlu0 %2477
      %2479 = vrot.lane.b32.xlu0 %v2400, 8
      %v2480 = vpop.permute.xlu0 %2479
      %2481 = vrot.lane.b32.xlu0 %v2401, 8
      %v2482 = vpop.permute.xlu0 %2481
      %2483 = vrot.lane.b32.xlu0 %v2402, 8
      %v2484 = vpop.permute.xlu0 %2483
      %2485 = vrot.lane.b32.xlu0 %v2403, 8
      %v2486 = vpop.permute.xlu0 %2485
      %2487 = vrot.lane.b32.xlu0 %v2404, 8
      %v2488 = vpop.permute.xlu0 %2487
      %2489 = vrot.lane.b32.xlu0 %v2405, 8
      %v2490 = vpop.permute.xlu0 %2489
      %2491 = vrot.lane.b32.xlu0 %v2406, 8
      %v2492 = vpop.permute.xlu0 %2491
      %2493 = vrot.lane.b32.xlu0 %v2407, 8
      %v2494 = vpop.permute.xlu0 %2493
      %2495 = vrot.lane.b32.xlu0 %v2408, 8
      %v2496 = vpop.permute.xlu0 %2495
      %2497 = vrot.lane.b32.xlu0 %v2409, 8
      %v2498 = vpop.permute.xlu0 %2497
      %2499 = vrot.lane.b32.xlu0 %v2410, 8
      %v2500 = vpop.permute.xlu0 %2499
      %2501 = vrot.lane.b32.xlu0 %v2411, 8
      %v2502 = vpop.permute.xlu0 %2501
      %2503 = vrot.lane.b32.xlu0 %v2412, 8
      %v2504 = vpop.permute.xlu0 %2503
      %2505 = vrot.lane.b32.xlu0 %v2413, 8
      %v2506 = vpop.permute.xlu0 %2505
      %2507 = vrot.lane.b32.xlu0 %v2414, 8
      %v2508 = vpop.permute.xlu0 %2507
      %2509 = vrot.lane.b32.xlu0 %v2415, 8
      %v2510 = vpop.permute.xlu0 %2509
      %2511 = vrot.lane.b32.xlu0 %v2416, 8
      %v2512 = vpop.permute.xlu0 %2511
      %vm2545 = vcmask 130112
      %2546 = vst.msk [vmem:[#allocation4] sm:$0xff] %vm2545, %v2450
      %2547 = vst.msk [vmem:[#allocation4 + $0x8] sm:$0xff] %vm2545, %v2452
      %2548 = vst.msk [vmem:[#allocation4 + $0x10] sm:$0xff] %vm2545, %v2454
      %2549 = vst.msk [vmem:[#allocation4 + $0x18] sm:$0xff] %vm2545, %v2456
      %2550 = vst.msk [vmem:[#allocation4 + $0x20] sm:$0xff] %vm2545, %v2458
      %2551 = vst.msk [vmem:[#allocation4 + $0x28] sm:$0xff] %vm2545, %v2460
      %2552 = vst.msk [vmem:[#allocation4 + $0x30] sm:$0xff] %vm2545, %v2462
      %2553 = vst.msk [vmem:[#allocation4 + $0x38] sm:$0xff] %vm2545, %v2464
      %2554 = vst.msk [vmem:[#allocation4 + $0x40] sm:$0xff] %vm2545, %v2466
      %2555 = vst.msk [vmem:[#allocation4 + $0x48] sm:$0xff] %vm2545, %v2468
      %2556 = vst.msk [vmem:[#allocation4 + $0x50] sm:$0xff] %vm2545, %v2470
      %2557 = vst.msk [vmem:[#allocation4 + $0x58] sm:$0xff] %vm2545, %v2472
      %2558 = vst.msk [vmem:[#allocation4 + $0x60] sm:$0xff] %vm2545, %v2474
      %2559 = vst.msk [vmem:[#allocation4 + $0x68] sm:$0xff] %vm2545, %v2476
      %2560 = vst.msk [vmem:[#allocation4 + $0x70] sm:$0xff] %vm2545, %v2478
      %2561 = vst.msk [vmem:[#allocation4 + $0x78] sm:$0xff] %vm2545, %v2480
      %2562 = vst.msk [vmem:[#allocation4 + $0x80] sm:$0xff] %vm2545, %v2482
      %2563 = vst.msk [vmem:[#allocation4 + $0x88] sm:$0xff] %vm2545, %v2484
      %2564 = vst.msk [vmem:[#allocation4 + $0x90] sm:$0xff] %vm2545, %v2486
      %2565 = vst.msk [vmem:[#allocation4 + $0x98] sm:$0xff] %vm2545, %v2488
      %2566 = vst.msk [vmem:[#allocation4 + $0xa0] sm:$0xff] %vm2545, %v2490
      %2567 = vst.msk [vmem:[#allocation4 + $0xa8] sm:$0xff] %vm2545, %v2492
      %2568 = vst.msk [vmem:[#allocation4 + $0xb0] sm:$0xff] %vm2545, %v2494
      %2569 = vst.msk [vmem:[#allocation4 + $0xb8] sm:$0xff] %vm2545, %v2496
      %2570 = vst.msk [vmem:[#allocation4 + $0xc0] sm:$0xff] %vm2545, %v2498
      %2571 = vst.msk [vmem:[#allocation4 + $0xc8] sm:$0xff] %vm2545, %v2500
      %2572 = vst.msk [vmem:[#allocation4 + $0xd0] sm:$0xff] %vm2545, %v2502
      %2573 = vst.msk [vmem:[#allocation4 + $0xd8] sm:$0xff] %vm2545, %v2504
      %2574 = vst.msk [vmem:[#allocation4 + $0xe0] sm:$0xff] %vm2545, %v2506
      %2575 = vst.msk [vmem:[#allocation4 + $0xe8] sm:$0xff] %vm2545, %v2508
      %2576 = vst.msk [vmem:[#allocation4 + $0xf0] sm:$0xff] %vm2545, %v2510
      %2577 = vst.msk [vmem:[#allocation4 + $0xf8] sm:$0xff] %vm2545, %v2512
      %v2578 = vld [vmem:[#allocation3 + $0x9] sm:$0xff]
      %v2579 = vld [vmem:[#allocation3 + $0x11] sm:$0xff]
      %v2580 = vld [vmem:[#allocation3 + $0x29] sm:$0xff]
      %v2581 = vld [vmem:[#allocation3 + $0x31] sm:$0xff]
      %v2582 = vld [vmem:[#allocation3 + $0x49] sm:$0xff]
      %v2583 = vld [vmem:[#allocation3 + $0x51] sm:$0xff]
      %v2584 = vld [vmem:[#allocation3 + $0x69] sm:$0xff]
      %v2585 = vld [vmem:[#allocation3 + $0x71] sm:$0xff]
      %v2586 = vld [vmem:[#allocation3 + $0x89] sm:$0xff]
      %v2587 = vld [vmem:[#allocation3 + $0x91] sm:$0xff]
      %v2588 = vld [vmem:[#allocation3 + $0xa9] sm:$0xff]
      %v2589 = vld [vmem:[#allocation3 + $0xb1] sm:$0xff]
      %v2590 = vld [vmem:[#allocation3 + $0xc9] sm:$0xff]
      %v2591 = vld [vmem:[#allocation3 + $0xd1] sm:$0xff]
      %v2592 = vld [vmem:[#allocation3 + $0xe9] sm:$0xff]
      %v2593 = vld [vmem:[#allocation3 + $0xf1] sm:$0xff]
      %v2594 = vld [vmem:[#allocation3 + $0x109] sm:$0xff]
      %v2595 = vld [vmem:[#allocation3 + $0x111] sm:$0xff]
      %v2596 = vld [vmem:[#allocation3 + $0x129] sm:$0xff]
      %v2597 = vld [vmem:[#allocation3 + $0x131] sm:$0xff]
      %v2598 = vld [vmem:[#allocation3 + $0x149] sm:$0xff]
      %v2599 = vld [vmem:[#allocation3 + $0x151] sm:$0xff]
      %v2600 = vld [vmem:[#allocation3 + $0x169] sm:$0xff]
      %v2601 = vld [vmem:[#allocation3 + $0x171] sm:$0xff]
      %v2602 = vld [vmem:[#allocation3 + $0x189] sm:$0xff]
      %v2603 = vld [vmem:[#allocation3 + $0x191] sm:$0xff]
      %v2604 = vld [vmem:[#allocation3 + $0x1a9] sm:$0xff]
      %v2605 = vld [vmem:[#allocation3 + $0x1b1] sm:$0xff]
      %v2606 = vld [vmem:[#allocation3 + $0x1c9] sm:$0xff]
      %v2607 = vld [vmem:[#allocation3 + $0x1d1] sm:$0xff]
      %v2608 = vld [vmem:[#allocation3 + $0x1e9] sm:$0xff]
      %v2609 = vld [vmem:[#allocation3 + $0x1f1] sm:$0xff]
      %2642 = vrot.lane.b32.xlu0 %v2578, 16
      %v2643 = vpop.permute.xlu0 %2642
      %2644 = vrot.lane.b32.xlu0 %v2579, 16
      %v2645 = vpop.permute.xlu0 %2644
      %2646 = vrot.lane.b32.xlu0 %v2580, 16
      %v2647 = vpop.permute.xlu0 %2646
      %2648 = vrot.lane.b32.xlu0 %v2581, 16
      %v2649 = vpop.permute.xlu0 %2648
      %2650 = vrot.lane.b32.xlu0 %v2582, 16
      %v2651 = vpop.permute.xlu0 %2650
      %2652 = vrot.lane.b32.xlu0 %v2583, 16
      %v2653 = vpop.permute.xlu0 %2652
      %2654 = vrot.lane.b32.xlu0 %v2584, 16
      %v2655 = vpop.permute.xlu0 %2654
      %2656 = vrot.lane.b32.xlu0 %v2585, 16
      %v2657 = vpop.permute.xlu0 %2656
      %2658 = vrot.lane.b32.xlu0 %v2586, 16
      %v2659 = vpop.permute.xlu0 %2658
      %2660 = vrot.lane.b32.xlu0 %v2587, 16
      %v2661 = vpop.permute.xlu0 %2660
      %2662 = vrot.lane.b32.xlu0 %v2588, 16
      %v2663 = vpop.permute.xlu0 %2662
      %2664 = vrot.lane.b32.xlu0 %v2589, 16
      %v2665 = vpop.permute.xlu0 %2664
      %2666 = vrot.lane.b32.xlu0 %v2590, 16
      %v2667 = vpop.permute.xlu0 %2666
      %2668 = vrot.lane.b32.xlu0 %v2591, 16
      %v2669 = vpop.permute.xlu0 %2668
      %2670 = vrot.lane.b32.xlu0 %v2592, 16
      %v2671 = vpop.permute.xlu0 %2670
      %2672 = vrot.lane.b32.xlu0 %v2593, 16
      %v2673 = vpop.permute.xlu0 %2672
      %2674 = vrot.lane.b32.xlu0 %v2594, 16
      %v2675 = vpop.permute.xlu0 %2674
      %2676 = vrot.lane.b32.xlu0 %v2595, 16
      %v2677 = vpop.permute.xlu0 %2676
      %2678 = vrot.lane.b32.xlu0 %v2596, 16
      %v2679 = vpop.permute.xlu0 %2678
      %2680 = vrot.lane.b32.xlu0 %v2597, 16
      %v2681 = vpop.permute.xlu0 %2680
      %2682 = vrot.lane.b32.xlu0 %v2598, 16
      %v2683 = vpop.permute.xlu0 %2682
      %2684 = vrot.lane.b32.xlu0 %v2599, 16
      %v2685 = vpop.permute.xlu0 %2684
      %2686 = vrot.lane.b32.xlu0 %v2600, 16
      %v2687 = vpop.permute.xlu0 %2686
      %2688 = vrot.lane.b32.xlu0 %v2601, 16
      %v2689 = vpop.permute.xlu0 %2688
      %2690 = vrot.lane.b32.xlu0 %v2602, 16
      %v2691 = vpop.permute.xlu0 %2690
      %2692 = vrot.lane.b32.xlu0 %v2603, 16
      %v2693 = vpop.permute.xlu0 %2692
      %2694 = vrot.lane.b32.xlu0 %v2604, 16
      %v2695 = vpop.permute.xlu0 %2694
      %2696 = vrot.lane.b32.xlu0 %v2605, 16
      %v2697 = vpop.permute.xlu0 %2696
      %2698 = vrot.lane.b32.xlu0 %v2606, 16
      %v2699 = vpop.permute.xlu0 %2698
      %2700 = vrot.lane.b32.xlu0 %v2607, 16
      %v2701 = vpop.permute.xlu0 %2700
      %2702 = vrot.lane.b32.xlu0 %v2608, 16
      %v2703 = vpop.permute.xlu0 %2702
      %2704 = vrot.lane.b32.xlu0 %v2609, 16
      %v2705 = vpop.permute.xlu0 %2704
      %vm2738 = vcmask 195712
      %2739 = vst.msk [vmem:[#allocation4] sm:$0xff] %vm2738, %v2643
      %2740 = vst.msk [vmem:[#allocation4 + $0x8] sm:$0xff] %vm2738, %v2645
      %2741 = vst.msk [vmem:[#allocation4 + $0x10] sm:$0xff] %vm2738, %v2647
      %2742 = vst.msk [vmem:[#allocation4 + $0x18] sm:$0xff] %vm2738, %v2649
      %2743 = vst.msk [vmem:[#allocation4 + $0x20] sm:$0xff] %vm2738, %v2651
      %2744 = vst.msk [vmem:[#allocation4 + $0x28] sm:$0xff] %vm2738, %v2653
      %2745 = vst.msk [vmem:[#allocation4 + $0x30] sm:$0xff] %vm2738, %v2655
      %2746 = vst.msk [vmem:[#allocation4 + $0x38] sm:$0xff] %vm2738, %v2657
      %2747 = vst.msk [vmem:[#allocation4 + $0x40] sm:$0xff] %vm2738, %v2659
      %2748 = vst.msk [vmem:[#allocation4 + $0x48] sm:$0xff] %vm2738, %v2661
      %2749 = vst.msk [vmem:[#allocation4 + $0x50] sm:$0xff] %vm2738, %v2663
      %2750 = vst.msk [vmem:[#allocation4 + $0x58] sm:$0xff] %vm2738, %v2665
      %2751 = vst.msk [vmem:[#allocation4 + $0x60] sm:$0xff] %vm2738, %v2667
      %2752 = vst.msk [vmem:[#allocation4 + $0x68] sm:$0xff] %vm2738, %v2669
      %2753 = vst.msk [vmem:[#allocation4 + $0x70] sm:$0xff] %vm2738, %v2671
      %2754 = vst.msk [vmem:[#allocation4 + $0x78] sm:$0xff] %vm2738, %v2673
      %2755 = vst.msk [vmem:[#allocation4 + $0x80] sm:$0xff] %vm2738, %v2675
      %2756 = vst.msk [vmem:[#allocation4 + $0x88] sm:$0xff] %vm2738, %v2677
      %2757 = vst.msk [vmem:[#allocation4 + $0x90] sm:$0xff] %vm2738, %v2679
      %2758 = vst.msk [vmem:[#allocation4 + $0x98] sm:$0xff] %vm2738, %v2681
      %2759 = vst.msk [vmem:[#allocation4 + $0xa0] sm:$0xff] %vm2738, %v2683
      %2760 = vst.msk [vmem:[#allocation4 + $0xa8] sm:$0xff] %vm2738, %v2685
      %2761 = vst.msk [vmem:[#allocation4 + $0xb0] sm:$0xff] %vm2738, %v2687
      %2762 = vst.msk [vmem:[#allocation4 + $0xb8] sm:$0xff] %vm2738, %v2689
      %2763 = vst.msk [vmem:[#allocation4 + $0xc0] sm:$0xff] %vm2738, %v2691
      %2764 = vst.msk [vmem:[#allocation4 + $0xc8] sm:$0xff] %vm2738, %v2693
      %2765 = vst.msk [vmem:[#allocation4 + $0xd0] sm:$0xff] %vm2738, %v2695
      %2766 = vst.msk [vmem:[#allocation4 + $0xd8] sm:$0xff] %vm2738, %v2697
      %2767 = vst.msk [vmem:[#allocation4 + $0xe0] sm:$0xff] %vm2738, %v2699
      %2768 = vst.msk [vmem:[#allocation4 + $0xe8] sm:$0xff] %vm2738, %v2701
      %2769 = vst.msk [vmem:[#allocation4 + $0xf0] sm:$0xff] %vm2738, %v2703
      %2770 = vst.msk [vmem:[#allocation4 + $0xf8] sm:$0xff] %vm2738, %v2705
      %v2771 = vld [vmem:[%s2288 + $0x7] sm:$0xff]
      %v2772 = vld [vmem:[%s2288 + $0xf] sm:$0xff]
      %v2773 = vld [vmem:[%s2288 + $0x27] sm:$0xff]
      %v2774 = vld [vmem:[%s2288 + $0x2f] sm:$0xff]
      %v2775 = vld [vmem:[%s2288 + $0x47] sm:$0xff]
      %v2776 = vld [vmem:[%s2288 + $0x4f] sm:$0xff]
      %v2777 = vld [vmem:[%s2288 + $0x67] sm:$0xff]
      %v2778 = vld [vmem:[%s2288 + $0x6f] sm:$0xff]
      %v2779 = vld [vmem:[%s2288 + $0x87] sm:$0xff]
      %v2780 = vld [vmem:[%s2288 + $0x8f] sm:$0xff]
      %v2781 = vld [vmem:[%s2288 + $0xa7] sm:$0xff]
      %v2782 = vld [vmem:[%s2288 + $0xaf] sm:$0xff]
      %v2783 = vld [vmem:[%s2288 + $0xc7] sm:$0xff]
      %v2784 = vld [vmem:[%s2288 + $0xcf] sm:$0xff]
      %v2785 = vld [vmem:[%s2288 + $0xe7] sm:$0xff]
      %v2786 = vld [vmem:[%s2288 + $0xef] sm:$0xff]
      %v2787 = vld [vmem:[%s2288 + $0x107] sm:$0xff]
      %v2788 = vld [vmem:[%s2288 + $0x10f] sm:$0xff]
      %v2789 = vld [vmem:[%s2288 + $0x127] sm:$0xff]
      %v2790 = vld [vmem:[%s2288 + $0x12f] sm:$0xff]
      %v2791 = vld [vmem:[%s2288 + $0x147] sm:$0xff]
      %v2792 = vld [vmem:[%s2288 + $0x14f] sm:$0xff]
      %v2793 = vld [vmem:[%s2288 + $0x167] sm:$0xff]
      %v2794 = vld [vmem:[%s2288 + $0x16f] sm:$0xff]
      %v2795 = vld [vmem:[%s2288 + $0x187] sm:$0xff]
      %v2796 = vld [vmem:[%s2288 + $0x18f] sm:$0xff]
      %v2797 = vld [vmem:[%s2288 + $0x1a7] sm:$0xff]
      %v2798 = vld [vmem:[%s2288 + $0x1af] sm:$0xff]
      %v2799 = vld [vmem:[%s2288 + $0x1c7] sm:$0xff]
      %v2800 = vld [vmem:[%s2288 + $0x1cf] sm:$0xff]
      %v2801 = vld [vmem:[%s2288 + $0x1e7] sm:$0xff]
      %v2802 = vld [vmem:[%s2288 + $0x1ef] sm:$0xff]
      %2835 = vrot.lane.b32.xlu0 %v2771, 24
      %v2836 = vpop.permute.xlu0 %2835
      %2837 = vrot.lane.b32.xlu0 %v2772, 24
      %v2838 = vpop.permute.xlu0 %2837
      %2839 = vrot.lane.b32.xlu0 %v2773, 24
      %v2840 = vpop.permute.xlu0 %2839
      %2841 = vrot.lane.b32.xlu0 %v2774, 24
      %v2842 = vpop.permute.xlu0 %2841
      %2843 = vrot.lane.b32.xlu0 %v2775, 24
      %v2844 = vpop.permute.xlu0 %2843
      %2845 = vrot.lane.b32.xlu0 %v2776, 24
      %v2846 = vpop.permute.xlu0 %2845
      %2847 = vrot.lane.b32.xlu0 %v2777, 24
      %v2848 = vpop.permute.xlu0 %2847
      %2849 = vrot.lane.b32.xlu0 %v2778, 24
      %v2850 = vpop.permute.xlu0 %2849
      %2851 = vrot.lane.b32.xlu0 %v2779, 24
      %v2852 = vpop.permute.xlu0 %2851
      %2853 = vrot.lane.b32.xlu0 %v2780, 24
      %v2854 = vpop.permute.xlu0 %2853
      %2855 = vrot.lane.b32.xlu0 %v2781, 24
      %v2856 = vpop.permute.xlu0 %2855
      %2857 = vrot.lane.b32.xlu0 %v2782, 24
      %v2858 = vpop.permute.xlu0 %2857
      %2859 = vrot.lane.b32.xlu0 %v2783, 24
      %v2860 = vpop.permute.xlu0 %2859
      %2861 = vrot.lane.b32.xlu0 %v2784, 24
      %v2862 = vpop.permute.xlu0 %2861
      %2863 = vrot.lane.b32.xlu0 %v2785, 24
      %v2864 = vpop.permute.xlu0 %2863
      %2865 = vrot.lane.b32.xlu0 %v2786, 24
      %v2866 = vpop.permute.xlu0 %2865
      %2867 = vrot.lane.b32.xlu0 %v2787, 24
      %v2868 = vpop.permute.xlu0 %2867
      %2869 = vrot.lane.b32.xlu0 %v2788, 24
      %v2870 = vpop.permute.xlu0 %2869
      %2871 = vrot.lane.b32.xlu0 %v2789, 24
      %v2872 = vpop.permute.xlu0 %2871
      %2873 = vrot.lane.b32.xlu0 %v2790, 24
      %v2874 = vpop.permute.xlu0 %2873
      %2875 = vrot.lane.b32.xlu0 %v2791, 24
      %v2876 = vpop.permute.xlu0 %2875
      %2877 = vrot.lane.b32.xlu0 %v2792, 24
      %v2878 = vpop.permute.xlu0 %2877
      %2879 = vrot.lane.b32.xlu0 %v2793, 24
      %v2880 = vpop.permute.xlu0 %2879
      %2881 = vrot.lane.b32.xlu0 %v2794, 24
      %v2882 = vpop.permute.xlu0 %2881
      %2883 = vrot.lane.b32.xlu0 %v2795, 24
      %v2884 = vpop.permute.xlu0 %2883
      %2885 = vrot.lane.b32.xlu0 %v2796, 24
      %v2886 = vpop.permute.xlu0 %2885
      %2887 = vrot.lane.b32.xlu0 %v2797, 24
      %v2888 = vpop.permute.xlu0 %2887
      %2889 = vrot.lane.b32.xlu0 %v2798, 24
      %v2890 = vpop.permute.xlu0 %2889
      %2891 = vrot.lane.b32.xlu0 %v2799, 24
      %v2892 = vpop.permute.xlu0 %2891
      %2893 = vrot.lane.b32.xlu0 %v2800, 24
      %v2894 = vpop.permute.xlu0 %2893
      %2895 = vrot.lane.b32.xlu0 %v2801, 24
      %v2896 = vpop.permute.xlu0 %2895
      %2897 = vrot.lane.b32.xlu0 %v2802, 24
      %v2898 = vpop.permute.xlu0 %2897
      %vm2931 = vcmask 261312
      %2932 = vst.msk [vmem:[#allocation4] sm:$0xff] %vm2931, %v2836
      %2933 = vst.msk [vmem:[#allocation4 + $0x8] sm:$0xff] %vm2931, %v2838
      %2934 = vst.msk [vmem:[#allocation4 + $0x10] sm:$0xff] %vm2931, %v2840
      %2935 = vst.msk [vmem:[#allocation4 + $0x18] sm:$0xff] %vm2931, %v2842
      %2936 = vst.msk [vmem:[#allocation4 + $0x20] sm:$0xff] %vm2931, %v2844
      %2937 = vst.msk [vmem:[#allocation4 + $0x28] sm:$0xff] %vm2931, %v2846
      %2938 = vst.msk [vmem:[#allocation4 + $0x30] sm:$0xff] %vm2931, %v2848
      %2939 = vst.msk [vmem:[#allocation4 + $0x38] sm:$0xff] %vm2931, %v2850
      %2940 = vst.msk [vmem:[#allocation4 + $0x40] sm:$0xff] %vm2931, %v2852
      %2941 = vst.msk [vmem:[#allocation4 + $0x48] sm:$0xff] %vm2931, %v2854
      %2942 = vst.msk [vmem:[#allocation4 + $0x50] sm:$0xff] %vm2931, %v2856
      %2943 = vst.msk [vmem:[#allocation4 + $0x58] sm:$0xff] %vm2931, %v2858
      %2944 = vst.msk [vmem:[#allocation4 + $0x60] sm:$0xff] %vm2931, %v2860
      %2945 = vst.msk [vmem:[#allocation4 + $0x68] sm:$0xff] %vm2931, %v2862
      %2946 = vst.msk [vmem:[#allocation4 + $0x70] sm:$0xff] %vm2931, %v2864
      %2947 = vst.msk [vmem:[#allocation4 + $0x78] sm:$0xff] %vm2931, %v2866
      %2948 = vst.msk [vmem:[#allocation4 + $0x80] sm:$0xff] %vm2931, %v2868
      %2949 = vst.msk [vmem:[#allocation4 + $0x88] sm:$0xff] %vm2931, %v2870
      %2950 = vst.msk [vmem:[#allocation4 + $0x90] sm:$0xff] %vm2931, %v2872
      %2951 = vst.msk [vmem:[#allocation4 + $0x98] sm:$0xff] %vm2931, %v2874
      %2952 = vst.msk [vmem:[#allocation4 + $0xa0] sm:$0xff] %vm2931, %v2876
      %2953 = vst.msk [vmem:[#allocation4 + $0xa8] sm:$0xff] %vm2931, %v2878
      %2954 = vst.msk [vmem:[#allocation4 + $0xb0] sm:$0xff] %vm2931, %v2880
      %2955 = vst.msk [vmem:[#allocation4 + $0xb8] sm:$0xff] %vm2931, %v2882
      %2956 = vst.msk [vmem:[#allocation4 + $0xc0] sm:$0xff] %vm2931, %v2884
      %2957 = vst.msk [vmem:[#allocation4 + $0xc8] sm:$0xff] %vm2931, %v2886
      %2958 = vst.msk [vmem:[#allocation4 + $0xd0] sm:$0xff] %vm2931, %v2888
      %2959 = vst.msk [vmem:[#allocation4 + $0xd8] sm:$0xff] %vm2931, %v2890
      %2960 = vst.msk [vmem:[#allocation4 + $0xe0] sm:$0xff] %vm2931, %v2892
      %2961 = vst.msk [vmem:[#allocation4 + $0xe8] sm:$0xff] %vm2931, %v2894
      %2962 = vst.msk [vmem:[#allocation4 + $0xf0] sm:$0xff] %vm2931, %v2896
      %2963 = vst.msk [vmem:[#allocation4 + $0xf8] sm:$0xff] %vm2931, %v2898
      %v2964 = vld [vmem:[%s2288 + $0x8] sm:$0xff]
      %v2965 = vld [vmem:[%s2288 + $0x10] sm:$0xff]
      %v2966 = vld [vmem:[%s2288 + $0x28] sm:$0xff]
      %v2967 = vld [vmem:[%s2288 + $0x30] sm:$0xff]
      %v2968 = vld [vmem:[%s2288 + $0x48] sm:$0xff]
      %v2969 = vld [vmem:[%s2288 + $0x50] sm:$0xff]
      %v2970 = vld [vmem:[%s2288 + $0x68] sm:$0xff]
      %v2971 = vld [vmem:[%s2288 + $0x70] sm:$0xff]
      %v2972 = vld [vmem:[%s2288 + $0x88] sm:$0xff]
      %v2973 = vld [vmem:[%s2288 + $0x90] sm:$0xff]
      %v2974 = vld [vmem:[%s2288 + $0xa8] sm:$0xff]
      %v2975 = vld [vmem:[%s2288 + $0xb0] sm:$0xff]
      %v2976 = vld [vmem:[%s2288 + $0xc8] sm:$0xff]
      %v2977 = vld [vmem:[%s2288 + $0xd0] sm:$0xff]
      %v2978 = vld [vmem:[%s2288 + $0xe8] sm:$0xff]
      %v2979 = vld [vmem:[%s2288 + $0xf0] sm:$0xff]
      %v2980 = vld [vmem:[%s2288 + $0x108] sm:$0xff]
      %v2981 = vld [vmem:[%s2288 + $0x110] sm:$0xff]
      %v2982 = vld [vmem:[%s2288 + $0x128] sm:$0xff]
      %v2983 = vld [vmem:[%s2288 + $0x130] sm:$0xff]
      %v2984 = vld [vmem:[%s2288 + $0x148] sm:$0xff]
      %v2985 = vld [vmem:[%s2288 + $0x150] sm:$0xff]
      %v2986 = vld [vmem:[%s2288 + $0x168] sm:$0xff]
      %v2987 = vld [vmem:[%s2288 + $0x170] sm:$0xff]
      %v2988 = vld [vmem:[%s2288 + $0x188] sm:$0xff]
      %v2989 = vld [vmem:[%s2288 + $0x190] sm:$0xff]
      %v2990 = vld [vmem:[%s2288 + $0x1a8] sm:$0xff]
      %v2991 = vld [vmem:[%s2288 + $0x1b0] sm:$0xff]
      %v2992 = vld [vmem:[%s2288 + $0x1c8] sm:$0xff]
      %v2993 = vld [vmem:[%s2288 + $0x1d0] sm:$0xff]
      %v2994 = vld [vmem:[%s2288 + $0x1e8] sm:$0xff]
      %v2995 = vld [vmem:[%s2288 + $0x1f0] sm:$0xff]
      %3028 = vrot.lane.b32.xlu0 %v2964, 32
      %v3029 = vpop.permute.xlu0 %3028
      %3030 = vrot.lane.b32.xlu0 %v2965, 32
      %v3031 = vpop.permute.xlu0 %3030
      %3032 = vrot.lane.b32.xlu0 %v2966, 32
      %v3033 = vpop.permute.xlu0 %3032
      %3034 = vrot.lane.b32.xlu0 %v2967, 32
      %v3035 = vpop.permute.xlu0 %3034
      %3036 = vrot.lane.b32.xlu0 %v2968, 32
      %v3037 = vpop.permute.xlu0 %3036
      %3038 = vrot.lane.b32.xlu0 %v2969, 32
      %v3039 = vpop.permute.xlu0 %3038
      %3040 = vrot.lane.b32.xlu0 %v2970, 32
      %v3041 = vpop.permute.xlu0 %3040
      %3042 = vrot.lane.b32.xlu0 %v2971, 32
      %v3043 = vpop.permute.xlu0 %3042
      %3044 = vrot.lane.b32.xlu0 %v2972, 32
      %v3045 = vpop.permute.xlu0 %3044
      %3046 = vrot.lane.b32.xlu0 %v2973, 32
      %v3047 = vpop.permute.xlu0 %3046
      %3048 = vrot.lane.b32.xlu0 %v2974, 32
      %v3049 = vpop.permute.xlu0 %3048
      %3050 = vrot.lane.b32.xlu0 %v2975, 32
      %v3051 = vpop.permute.xlu0 %3050
      %3052 = vrot.lane.b32.xlu0 %v2976, 32
      %v3053 = vpop.permute.xlu0 %3052
      %3054 = vrot.lane.b32.xlu0 %v2977, 32
      %v3055 = vpop.permute.xlu0 %3054
      %3056 = vrot.lane.b32.xlu0 %v2978, 32
      %v3057 = vpop.permute.xlu0 %3056
      %3058 = vrot.lane.b32.xlu0 %v2979, 32
      %v3059 = vpop.permute.xlu0 %3058
      %3060 = vrot.lane.b32.xlu0 %v2980, 32
      %v3061 = vpop.permute.xlu0 %3060
      %3062 = vrot.lane.b32.xlu0 %v2981, 32
      %v3063 = vpop.permute.xlu0 %3062
      %3064 = vrot.lane.b32.xlu0 %v2982, 32
      %v3065 = vpop.permute.xlu0 %3064
      %3066 = vrot.lane.b32.xlu0 %v2983, 32
      %v3067 = vpop.permute.xlu0 %3066
      %3068 = vrot.lane.b32.xlu0 %v2984, 32
      %v3069 = vpop.permute.xlu0 %3068
      %3070 = vrot.lane.b32.xlu0 %v2985, 32
      %v3071 = vpop.permute.xlu0 %3070
      %3072 = vrot.lane.b32.xlu0 %v2986, 32
      %v3073 = vpop.permute.xlu0 %3072
      %3074 = vrot.lane.b32.xlu0 %v2987, 32
      %v3075 = vpop.permute.xlu0 %3074
      %3076 = vrot.lane.b32.xlu0 %v2988, 32
      %v3077 = vpop.permute.xlu0 %3076
      %3078 = vrot.lane.b32.xlu0 %v2989, 32
      %v3079 = vpop.permute.xlu0 %3078
      %3080 = vrot.lane.b32.xlu0 %v2990, 32
      %v3081 = vpop.permute.xlu0 %3080
      %3082 = vrot.lane.b32.xlu0 %v2991, 32
      %v3083 = vpop.permute.xlu0 %3082
      %3084 = vrot.lane.b32.xlu0 %v2992, 32
      %v3085 = vpop.permute.xlu0 %3084
      %3086 = vrot.lane.b32.xlu0 %v2993, 32
      %v3087 = vpop.permute.xlu0 %3086
      %3088 = vrot.lane.b32.xlu0 %v2994, 32
      %v3089 = vpop.permute.xlu0 %3088
      %3090 = vrot.lane.b32.xlu0 %v2995, 32
      %v3091 = vpop.permute.xlu0 %3090
      %vm3124 = vcmask 326912
      %3125 = vst.msk [vmem:[#allocation4] sm:$0xff] %vm3124, %v3029
      %3126 = vst.msk [vmem:[#allocation4 + $0x8] sm:$0xff] %vm3124, %v3031
      %3127 = vst.msk [vmem:[#allocation4 + $0x10] sm:$0xff] %vm3124, %v3033
      %3128 = vst.msk [vmem:[#allocation4 + $0x18] sm:$0xff] %vm3124, %v3035
      %3129 = vst.msk [vmem:[#allocation4 + $0x20] sm:$0xff] %vm3124, %v3037
      %3130 = vst.msk [vmem:[#allocation4 + $0x28] sm:$0xff] %vm3124, %v3039
      %3131 = vst.msk [vmem:[#allocation4 + $0x30] sm:$0xff] %vm3124, %v3041
      %3132 = vst.msk [vmem:[#allocation4 + $0x38] sm:$0xff] %vm3124, %v3043
      %3133 = vst.msk [vmem:[#allocation4 + $0x40] sm:$0xff] %vm3124, %v3045
      %3134 = vst.msk [vmem:[#allocation4 + $0x48] sm:$0xff] %vm3124, %v3047
      %3135 = vst.msk [vmem:[#allocation4 + $0x50] sm:$0xff] %vm3124, %v3049
      %3136 = vst.msk [vmem:[#allocation4 + $0x58] sm:$0xff] %vm3124, %v3051
      %3137 = vst.msk [vmem:[#allocation4 + $0x60] sm:$0xff] %vm3124, %v3053
      %3138 = vst.msk [vmem:[#allocation4 + $0x68] sm:$0xff] %vm3124, %v3055
      %3139 = vst.msk [vmem:[#allocation4 + $0x70] sm:$0xff] %vm3124, %v3057
      %3140 = vst.msk [vmem:[#allocation4 + $0x78] sm:$0xff] %vm3124, %v3059
      %3141 = vst.msk [vmem:[#allocation4 + $0x80] sm:$0xff] %vm3124, %v3061
      %3142 = vst.msk [vmem:[#allocation4 + $0x88] sm:$0xff] %vm3124, %v3063
      %3143 = vst.msk [vmem:[#allocation4 + $0x90] sm:$0xff] %vm3124, %v3065
      %3144 = vst.msk [vmem:[#allocation4 + $0x98] sm:$0xff] %vm3124, %v3067
      %3145 = vst.msk [vmem:[#allocation4 + $0xa0] sm:$0xff] %vm3124, %v3069
      %3146 = vst.msk [vmem:[#allocation4 + $0xa8] sm:$0xff] %vm3124, %v3071
      %3147 = vst.msk [vmem:[#allocation4 + $0xb0] sm:$0xff] %vm3124, %v3073
      %3148 = vst.msk [vmem:[#allocation4 + $0xb8] sm:$0xff] %vm3124, %v3075
      %3149 = vst.msk [vmem:[#allocation4 + $0xc0] sm:$0xff] %vm3124, %v3077
      %3150 = vst.msk [vmem:[#allocation4 + $0xc8] sm:$0xff] %vm3124, %v3079
      %3151 = vst.msk [vmem:[#allocation4 + $0xd0] sm:$0xff] %vm3124, %v3081
      %3152 = vst.msk [vmem:[#allocation4 + $0xd8] sm:$0xff] %vm3124, %v3083
      %3153 = vst.msk [vmem:[#allocation4 + $0xe0] sm:$0xff] %vm3124, %v3085
      %3154 = vst.msk [vmem:[#allocation4 + $0xe8] sm:$0xff] %vm3124, %v3087
      %3155 = vst.msk [vmem:[#allocation4 + $0xf0] sm:$0xff] %vm3124, %v3089
      %3156 = vst.msk [vmem:[#allocation4 + $0xf8] sm:$0xff] %vm3124, %v3091
      %v3157 = vld [vmem:[%s2288 + $0x9] sm:$0xff]
      %v3158 = vld [vmem:[%s2288 + $0x11] sm:$0xff]
      %v3159 = vld [vmem:[%s2288 + $0x29] sm:$0xff]
      %v3160 = vld [vmem:[%s2288 + $0x31] sm:$0xff]
      %v3161 = vld [vmem:[%s2288 + $0x49] sm:$0xff]
      %v3162 = vld [vmem:[%s2288 + $0x51] sm:$0xff]
      %v3163 = vld [vmem:[%s2288 + $0x69] sm:$0xff]
      %v3164 = vld [vmem:[%s2288 + $0x71] sm:$0xff]
      %v3165 = vld [vmem:[%s2288 + $0x89] sm:$0xff]
      %v3166 = vld [vmem:[%s2288 + $0x91] sm:$0xff]
      %v3167 = vld [vmem:[%s2288 + $0xa9] sm:$0xff]
      %v3168 = vld [vmem:[%s2288 + $0xb1] sm:$0xff]
      %v3169 = vld [vmem:[%s2288 + $0xc9] sm:$0xff]
      %v3170 = vld [vmem:[%s2288 + $0xd1] sm:$0xff]
      %v3171 = vld [vmem:[%s2288 + $0xe9] sm:$0xff]
      %v3172 = vld [vmem:[%s2288 + $0xf1] sm:$0xff]
      %v3173 = vld [vmem:[%s2288 + $0x109] sm:$0xff]
      %v3174 = vld [vmem:[%s2288 + $0x111] sm:$0xff]
      %v3175 = vld [vmem:[%s2288 + $0x129] sm:$0xff]
      %v3176 = vld [vmem:[%s2288 + $0x131] sm:$0xff]
      %v3177 = vld [vmem:[%s2288 + $0x149] sm:$0xff]
      %v3178 = vld [vmem:[%s2288 + $0x151] sm:$0xff]
      %v3179 = vld [vmem:[%s2288 + $0x169] sm:$0xff]
      %v3180 = vld [vmem:[%s2288 + $0x171] sm:$0xff]
      %v3181 = vld [vmem:[%s2288 + $0x189] sm:$0xff]
      %v3182 = vld [vmem:[%s2288 + $0x191] sm:$0xff]
      %v3183 = vld [vmem:[%s2288 + $0x1a9] sm:$0xff]
      %v3184 = vld [vmem:[%s2288 + $0x1b1] sm:$0xff]
      %v3185 = vld [vmem:[%s2288 + $0x1c9] sm:$0xff]
      %v3186 = vld [vmem:[%s2288 + $0x1d1] sm:$0xff]
      %v3187 = vld [vmem:[%s2288 + $0x1e9] sm:$0xff]
      %v3188 = vld [vmem:[%s2288 + $0x1f1] sm:$0xff]
      %3221 = vrot.lane.b32.xlu0 %v3157, 40
      %v3222 = vpop.permute.xlu0 %3221
      %3223 = vrot.lane.b32.xlu0 %v3158, 40
      %v3224 = vpop.permute.xlu0 %3223
      %3225 = vrot.lane.b32.xlu0 %v3159, 40
      %v3226 = vpop.permute.xlu0 %3225
      %3227 = vrot.lane.b32.xlu0 %v3160, 40
      %v3228 = vpop.permute.xlu0 %3227
      %3229 = vrot.lane.b32.xlu0 %v3161, 40
      %v3230 = vpop.permute.xlu0 %3229
      %3231 = vrot.lane.b32.xlu0 %v3162, 40
      %v3232 = vpop.permute.xlu0 %3231
      %3233 = vrot.lane.b32.xlu0 %v3163, 40
      %v3234 = vpop.permute.xlu0 %3233
      %3235 = vrot.lane.b32.xlu0 %v3164, 40
      %v3236 = vpop.permute.xlu0 %3235
      %3237 = vrot.lane.b32.xlu0 %v3165, 40
      %v3238 = vpop.permute.xlu0 %3237
      %3239 = vrot.lane.b32.xlu0 %v3166, 40
      %v3240 = vpop.permute.xlu0 %3239
      %3241 = vrot.lane.b32.xlu0 %v3167, 40
      %v3242 = vpop.permute.xlu0 %3241
      %3243 = vrot.lane.b32.xlu0 %v3168, 40
      %v3244 = vpop.permute.xlu0 %3243
      %3245 = vrot.lane.b32.xlu0 %v3169, 40
      %v3246 = vpop.permute.xlu0 %3245
      %3247 = vrot.lane.b32.xlu0 %v3170, 40
      %v3248 = vpop.permute.xlu0 %3247
      %3249 = vrot.lane.b32.xlu0 %v3171, 40
      %v3250 = vpop.permute.xlu0 %3249
      %3251 = vrot.lane.b32.xlu0 %v3172, 40
      %v3252 = vpop.permute.xlu0 %3251
      %3253 = vrot.lane.b32.xlu0 %v3173, 40
      %v3254 = vpop.permute.xlu0 %3253
      %3255 = vrot.lane.b32.xlu0 %v3174, 40
      %v3256 = vpop.permute.xlu0 %3255
      %3257 = vrot.lane.b32.xlu0 %v3175, 40
      %v3258 = vpop.permute.xlu0 %3257
      %3259 = vrot.lane.b32.xlu0 %v3176, 40
      %v3260 = vpop.permute.xlu0 %3259
      %3261 = vrot.lane.b32.xlu0 %v3177, 40
      %v3262 = vpop.permute.xlu0 %3261
      %3263 = vrot.lane.b32.xlu0 %v3178, 40
      %v3264 = vpop.permute.xlu0 %3263
      %3265 = vrot.lane.b32.xlu0 %v3179, 40
      %v3266 = vpop.permute.xlu0 %3265
      %3267 = vrot.lane.b32.xlu0 %v3180, 40
      %v3268 = vpop.permute.xlu0 %3267
      %3269 = vrot.lane.b32.xlu0 %v3181, 40
      %v3270 = vpop.permute.xlu0 %3269
      %3271 = vrot.lane.b32.xlu0 %v3182, 40
      %v3272 = vpop.permute.xlu0 %3271
      %3273 = vrot.lane.b32.xlu0 %v3183, 40
      %v3274 = vpop.permute.xlu0 %3273
      %3275 = vrot.lane.b32.xlu0 %v3184, 40
      %v3276 = vpop.permute.xlu0 %3275
      %3277 = vrot.lane.b32.xlu0 %v3185, 40
      %v3278 = vpop.permute.xlu0 %3277
      %3279 = vrot.lane.b32.xlu0 %v3186, 40
      %v3280 = vpop.permute.xlu0 %3279
      %3281 = vrot.lane.b32.xlu0 %v3187, 40
      %v3282 = vpop.permute.xlu0 %3281
      %3283 = vrot.lane.b32.xlu0 %v3188, 40
      %v3284 = vpop.permute.xlu0 %3283
      %vm3317 = vcmask 392512
      %3318 = vst.msk [vmem:[#allocation4] sm:$0xff] %vm3317, %v3222
      %3319 = vst.msk [vmem:[#allocation4 + $0x8] sm:$0xff] %vm3317, %v3224
      %3320 = vst.msk [vmem:[#allocation4 + $0x10] sm:$0xff] %vm3317, %v3226
      %3321 = vst.msk [vmem:[#allocation4 + $0x18] sm:$0xff] %vm3317, %v3228
      %3322 = vst.msk [vmem:[#allocation4 + $0x20] sm:$0xff] %vm3317, %v3230
      %3323 = vst.msk [vmem:[#allocation4 + $0x28] sm:$0xff] %vm3317, %v3232
      %3324 = vst.msk [vmem:[#allocation4 + $0x30] sm:$0xff] %vm3317, %v3234
      %3325 = vst.msk [vmem:[#allocation4 + $0x38] sm:$0xff] %vm3317, %v3236
      %3326 = vst.msk [vmem:[#allocation4 + $0x40] sm:$0xff] %vm3317, %v3238
      %3327 = vst.msk [vmem:[#allocation4 + $0x48] sm:$0xff] %vm3317, %v3240
      %3328 = vst.msk [vmem:[#allocation4 + $0x50] sm:$0xff] %vm3317, %v3242
      %3329 = vst.msk [vmem:[#allocation4 + $0x58] sm:$0xff] %vm3317, %v3244
      %3330 = vst.msk [vmem:[#allocation4 + $0x60] sm:$0xff] %vm3317, %v3246
      %3331 = vst.msk [vmem:[#allocation4 + $0x68] sm:$0xff] %vm3317, %v3248
      %3332 = vst.msk [vmem:[#allocation4 + $0x70] sm:$0xff] %vm3317, %v3250
      %3333 = vst.msk [vmem:[#allocation4 + $0x78] sm:$0xff] %vm3317, %v3252
      %3334 = vst.msk [vmem:[#allocation4 + $0x80] sm:$0xff] %vm3317, %v3254
      %3335 = vst.msk [vmem:[#allocation4 + $0x88] sm:$0xff] %vm3317, %v3256
      %3336 = vst.msk [vmem:[#allocation4 + $0x90] sm:$0xff] %vm3317, %v3258
      %3337 = vst.msk [vmem:[#allocation4 + $0x98] sm:$0xff] %vm3317, %v3260
      %3338 = vst.msk [vmem:[#allocation4 + $0xa0] sm:$0xff] %vm3317, %v3262
      %3339 = vst.msk [vmem:[#allocation4 + $0xa8] sm:$0xff] %vm3317, %v3264
      %3340 = vst.msk [vmem:[#allocation4 + $0xb0] sm:$0xff] %vm3317, %v3266
      %3341 = vst.msk [vmem:[#allocation4 + $0xb8] sm:$0xff] %vm3317, %v3268
      %3342 = vst.msk [vmem:[#allocation4 + $0xc0] sm:$0xff] %vm3317, %v3270
      %3343 = vst.msk [vmem:[#allocation4 + $0xc8] sm:$0xff] %vm3317, %v3272
      %3344 = vst.msk [vmem:[#allocation4 + $0xd0] sm:$0xff] %vm3317, %v3274
      %3345 = vst.msk [vmem:[#allocation4 + $0xd8] sm:$0xff] %vm3317, %v3276
      %3346 = vst.msk [vmem:[#allocation4 + $0xe0] sm:$0xff] %vm3317, %v3278
      %3347 = vst.msk [vmem:[#allocation4 + $0xe8] sm:$0xff] %vm3317, %v3280
      %3348 = vst.msk [vmem:[#allocation4 + $0xf0] sm:$0xff] %vm3317, %v3282
      %3349 = vst.msk [vmem:[#allocation4 + $0xf8] sm:$0xff] %vm3317, %v3284
      %s3350 = scalar_lea.vmem [#allocation3], 64
      %v3351 = vld [vmem:[%s3350 + $0x7] sm:$0xff]
      %v3352 = vld [vmem:[%s3350 + $0xf] sm:$0xff]
      %v3353 = vld [vmem:[%s3350 + $0x27] sm:$0xff]
      %v3354 = vld [vmem:[%s3350 + $0x2f] sm:$0xff]
      %v3355 = vld [vmem:[%s3350 + $0x47] sm:$0xff]
      %v3356 = vld [vmem:[%s3350 + $0x4f] sm:$0xff]
      %v3357 = vld [vmem:[%s3350 + $0x67] sm:$0xff]
      %v3358 = vld [vmem:[%s3350 + $0x6f] sm:$0xff]
      %v3359 = vld [vmem:[%s3350 + $0x87] sm:$0xff]
      %v3360 = vld [vmem:[%s3350 + $0x8f] sm:$0xff]
      %v3361 = vld [vmem:[%s3350 + $0xa7] sm:$0xff]
      %v3362 = vld [vmem:[%s3350 + $0xaf] sm:$0xff]
      %v3363 = vld [vmem:[%s3350 + $0xc7] sm:$0xff]
      %v3364 = vld [vmem:[%s3350 + $0xcf] sm:$0xff]
      %v3365 = vld [vmem:[%s3350 + $0xe7] sm:$0xff]
      %v3366 = vld [vmem:[%s3350 + $0xef] sm:$0xff]
      %v3367 = vld [vmem:[%s3350 + $0x107] sm:$0xff]
      %v3368 = vld [vmem:[%s3350 + $0x10f] sm:$0xff]
      %v3369 = vld [vmem:[%s3350 + $0x127] sm:$0xff]
      %v3370 = vld [vmem:[%s3350 + $0x12f] sm:$0xff]
      %v3371 = vld [vmem:[%s3350 + $0x147] sm:$0xff]
      %v3372 = vld [vmem:[%s3350 + $0x14f] sm:$0xff]
      %v3373 = vld [vmem:[%s3350 + $0x167] sm:$0xff]
      %v3374 = vld [vmem:[%s3350 + $0x16f] sm:$0xff]
      %v3375 = vld [vmem:[%s3350 + $0x187] sm:$0xff]
      %v3376 = vld [vmem:[%s3350 + $0x18f] sm:$0xff]
      %v3377 = vld [vmem:[%s3350 + $0x1a7] sm:$0xff]
      %v3378 = vld [vmem:[%s3350 + $0x1af] sm:$0xff]
      %v3379 = vld [vmem:[%s3350 + $0x1c7] sm:$0xff]
      %v3380 = vld [vmem:[%s3350 + $0x1cf] sm:$0xff]
      %v3381 = vld [vmem:[%s3350 + $0x1e7] sm:$0xff]
      %v3382 = vld [vmem:[%s3350 + $0x1ef] sm:$0xff]
      %3415 = vrot.lane.b32.xlu0 %v3351, 48
      %v3416 = vpop.permute.xlu0 %3415
      %3417 = vrot.lane.b32.xlu0 %v3352, 48
      %v3418 = vpop.permute.xlu0 %3417
      %3419 = vrot.lane.b32.xlu0 %v3353, 48
      %v3420 = vpop.permute.xlu0 %3419
      %3421 = vrot.lane.b32.xlu0 %v3354, 48
      %v3422 = vpop.permute.xlu0 %3421
      %3423 = vrot.lane.b32.xlu0 %v3355, 48
      %v3424 = vpop.permute.xlu0 %3423
      %3425 = vrot.lane.b32.xlu0 %v3356, 48
      %v3426 = vpop.permute.xlu0 %3425
      %3427 = vrot.lane.b32.xlu0 %v3357, 48
      %v3428 = vpop.permute.xlu0 %3427
      %3429 = vrot.lane.b32.xlu0 %v3358, 48
      %v3430 = vpop.permute.xlu0 %3429
      %3431 = vrot.lane.b32.xlu0 %v3359, 48
      %v3432 = vpop.permute.xlu0 %3431
      %3433 = vrot.lane.b32.xlu0 %v3360, 48
      %v3434 = vpop.permute.xlu0 %3433
      %3435 = vrot.lane.b32.xlu0 %v3361, 48
      %v3436 = vpop.permute.xlu0 %3435
      %3437 = vrot.lane.b32.xlu0 %v3362, 48
      %v3438 = vpop.permute.xlu0 %3437
      %3439 = vrot.lane.b32.xlu0 %v3363, 48
      %v3440 = vpop.permute.xlu0 %3439
      %3441 = vrot.lane.b32.xlu0 %v3364, 48
      %v3442 = vpop.permute.xlu0 %3441
      %3443 = vrot.lane.b32.xlu0 %v3365, 48
      %v3444 = vpop.permute.xlu0 %3443
      %3445 = vrot.lane.b32.xlu0 %v3366, 48
      %v3446 = vpop.permute.xlu0 %3445
      %3447 = vrot.lane.b32.xlu0 %v3367, 48
      %v3448 = vpop.permute.xlu0 %3447
      %3449 = vrot.lane.b32.xlu0 %v3368, 48
      %v3450 = vpop.permute.xlu0 %3449
      %3451 = vrot.lane.b32.xlu0 %v3369, 48
      %v3452 = vpop.permute.xlu0 %3451
      %3453 = vrot.lane.b32.xlu0 %v3370, 48
      %v3454 = vpop.permute.xlu0 %3453
      %3455 = vrot.lane.b32.xlu0 %v3371, 48
      %v3456 = vpop.permute.xlu0 %3455
      %3457 = vrot.lane.b32.xlu0 %v3372, 48
      %v3458 = vpop.permute.xlu0 %3457
      %3459 = vrot.lane.b32.xlu0 %v3373, 48
      %v3460 = vpop.permute.xlu0 %3459
      %3461 = vrot.lane.b32.xlu0 %v3374, 48
      %v3462 = vpop.permute.xlu0 %3461
      %3463 = vrot.lane.b32.xlu0 %v3375, 48
      %v3464 = vpop.permute.xlu0 %3463
      %3465 = vrot.lane.b32.xlu0 %v3376, 48
      %v3466 = vpop.permute.xlu0 %3465
      %3467 = vrot.lane.b32.xlu0 %v3377, 48
      %v3468 = vpop.permute.xlu0 %3467
      %3469 = vrot.lane.b32.xlu0 %v3378, 48
      %v3470 = vpop.permute.xlu0 %3469
      %3471 = vrot.lane.b32.xlu0 %v3379, 48
      %v3472 = vpop.permute.xlu0 %3471
      %3473 = vrot.lane.b32.xlu0 %v3380, 48
      %v3474 = vpop.permute.xlu0 %3473
      %3475 = vrot.lane.b32.xlu0 %v3381, 48
      %v3476 = vpop.permute.xlu0 %3475
      %3477 = vrot.lane.b32.xlu0 %v3382, 48
      %v3478 = vpop.permute.xlu0 %3477
      %vm3511 = vcmask 458112
      %3512 = vst.msk [vmem:[#allocation4] sm:$0xff] %vm3511, %v3416
      %3513 = vst.msk [vmem:[#allocation4 + $0x8] sm:$0xff] %vm3511, %v3418
      %3514 = vst.msk [vmem:[#allocation4 + $0x10] sm:$0xff] %vm3511, %v3420
      %3515 = vst.msk [vmem:[#allocation4 + $0x18] sm:$0xff] %vm3511, %v3422
      %3516 = vst.msk [vmem:[#allocation4 + $0x20] sm:$0xff] %vm3511, %v3424
      %3517 = vst.msk [vmem:[#allocation4 + $0x28] sm:$0xff] %vm3511, %v3426
      %3518 = vst.msk [vmem:[#allocation4 + $0x30] sm:$0xff] %vm3511, %v3428
      %3519 = vst.msk [vmem:[#allocation4 + $0x38] sm:$0xff] %vm3511, %v3430
      %3520 = vst.msk [vmem:[#allocation4 + $0x40] sm:$0xff] %vm3511, %v3432
      %3521 = vst.msk [vmem:[#allocation4 + $0x48] sm:$0xff] %vm3511, %v3434
      %3522 = vst.msk [vmem:[#allocation4 + $0x50] sm:$0xff] %vm3511, %v3436
      %3523 = vst.msk [vmem:[#allocation4 + $0x58] sm:$0xff] %vm3511, %v3438
      %3524 = vst.msk [vmem:[#allocation4 + $0x60] sm:$0xff] %vm3511, %v3440
      %3525 = vst.msk [vmem:[#allocation4 + $0x68] sm:$0xff] %vm3511, %v3442
      %3526 = vst.msk [vmem:[#allocation4 + $0x70] sm:$0xff] %vm3511, %v3444
      %3527 = vst.msk [vmem:[#allocation4 + $0x78] sm:$0xff] %vm3511, %v3446
      %3528 = vst.msk [vmem:[#allocation4 + $0x80] sm:$0xff] %vm3511, %v3448
      %3529 = vst.msk [vmem:[#allocation4 + $0x88] sm:$0xff] %vm3511, %v3450
      %3530 = vst.msk [vmem:[#allocation4 + $0x90] sm:$0xff] %vm3511, %v3452
      %3531 = vst.msk [vmem:[#allocation4 + $0x98] sm:$0xff] %vm3511, %v3454
      %3532 = vst.msk [vmem:[#allocation4 + $0xa0] sm:$0xff] %vm3511, %v3456
      %3533 = vst.msk [vmem:[#allocation4 + $0xa8] sm:$0xff] %vm3511, %v3458
      %3534 = vst.msk [vmem:[#allocation4 + $0xb0] sm:$0xff] %vm3511, %v3460
      %3535 = vst.msk [vmem:[#allocation4 + $0xb8] sm:$0xff] %vm3511, %v3462
      %3536 = vst.msk [vmem:[#allocation4 + $0xc0] sm:$0xff] %vm3511, %v3464
      %3537 = vst.msk [vmem:[#allocation4 + $0xc8] sm:$0xff] %vm3511, %v3466
      %3538 = vst.msk [vmem:[#allocation4 + $0xd0] sm:$0xff] %vm3511, %v3468
      %3539 = vst.msk [vmem:[#allocation4 + $0xd8] sm:$0xff] %vm3511, %v3470
      %3540 = vst.msk [vmem:[#allocation4 + $0xe0] sm:$0xff] %vm3511, %v3472
      %3541 = vst.msk [vmem:[#allocation4 + $0xe8] sm:$0xff] %vm3511, %v3474
      %3542 = vst.msk [vmem:[#allocation4 + $0xf0] sm:$0xff] %vm3511, %v3476
      %3543 = vst.msk [vmem:[#allocation4 + $0xf8] sm:$0xff] %vm3511, %v3478
      %v3544 = vld [vmem:[%s3350 + $0x8] sm:$0xff]
      %v3545 = vld [vmem:[%s3350 + $0x10] sm:$0xff]
      %v3546 = vld [vmem:[%s3350 + $0x28] sm:$0xff]
      %v3547 = vld [vmem:[%s3350 + $0x30] sm:$0xff]
      %v3548 = vld [vmem:[%s3350 + $0x48] sm:$0xff]
      %v3549 = vld [vmem:[%s3350 + $0x50] sm:$0xff]
      %v3550 = vld [vmem:[%s3350 + $0x68] sm:$0xff]
      %v3551 = vld [vmem:[%s3350 + $0x70] sm:$0xff]
      %v3552 = vld [vmem:[%s3350 + $0x88] sm:$0xff]
      %v3553 = vld [vmem:[%s3350 + $0x90] sm:$0xff]
      %v3554 = vld [vmem:[%s3350 + $0xa8] sm:$0xff]
      %v3555 = vld [vmem:[%s3350 + $0xb0] sm:$0xff]
      %v3556 = vld [vmem:[%s3350 + $0xc8] sm:$0xff]
      %v3557 = vld [vmem:[%s3350 + $0xd0] sm:$0xff]
      %v3558 = vld [vmem:[%s3350 + $0xe8] sm:$0xff]
      %v3559 = vld [vmem:[%s3350 + $0xf0] sm:$0xff]
      %v3560 = vld [vmem:[%s3350 + $0x108] sm:$0xff]
      %v3561 = vld [vmem:[%s3350 + $0x110] sm:$0xff]
      %v3562 = vld [vmem:[%s3350 + $0x128] sm:$0xff]
      %v3563 = vld [vmem:[%s3350 + $0x130] sm:$0xff]
      %v3564 = vld [vmem:[%s3350 + $0x148] sm:$0xff]
      %v3565 = vld [vmem:[%s3350 + $0x150] sm:$0xff]
      %v3566 = vld [vmem:[%s3350 + $0x168] sm:$0xff]
      %v3567 = vld [vmem:[%s3350 + $0x170] sm:$0xff]
      %v3568 = vld [vmem:[%s3350 + $0x188] sm:$0xff]
      %v3569 = vld [vmem:[%s3350 + $0x190] sm:$0xff]
      %v3570 = vld [vmem:[%s3350 + $0x1a8] sm:$0xff]
      %v3571 = vld [vmem:[%s3350 + $0x1b0] sm:$0xff]
      %v3572 = vld [vmem:[%s3350 + $0x1c8] sm:$0xff]
      %v3573 = vld [vmem:[%s3350 + $0x1d0] sm:$0xff]
      %v3574 = vld [vmem:[%s3350 + $0x1e8] sm:$0xff]
      %v3575 = vld [vmem:[%s3350 + $0x1f0] sm:$0xff]
      %3608 = vrot.lane.b32.xlu0 %v3544, 56
      %v3609 = vpop.permute.xlu0 %3608
      %3610 = vrot.lane.b32.xlu0 %v3545, 56
      %v3611 = vpop.permute.xlu0 %3610
      %3612 = vrot.lane.b32.xlu0 %v3546, 56
      %v3613 = vpop.permute.xlu0 %3612
      %3614 = vrot.lane.b32.xlu0 %v3547, 56
      %v3615 = vpop.permute.xlu0 %3614
      %3616 = vrot.lane.b32.xlu0 %v3548, 56
      %v3617 = vpop.permute.xlu0 %3616
      %3618 = vrot.lane.b32.xlu0 %v3549, 56
      %v3619 = vpop.permute.xlu0 %3618
      %3620 = vrot.lane.b32.xlu0 %v3550, 56
      %v3621 = vpop.permute.xlu0 %3620
      %3622 = vrot.lane.b32.xlu0 %v3551, 56
      %v3623 = vpop.permute.xlu0 %3622
      %3624 = vrot.lane.b32.xlu0 %v3552, 56
      %v3625 = vpop.permute.xlu0 %3624
      %3626 = vrot.lane.b32.xlu0 %v3553, 56
      %v3627 = vpop.permute.xlu0 %3626
      %3628 = vrot.lane.b32.xlu0 %v3554, 56
      %v3629 = vpop.permute.xlu0 %3628
      %3630 = vrot.lane.b32.xlu0 %v3555, 56
      %v3631 = vpop.permute.xlu0 %3630
      %3632 = vrot.lane.b32.xlu0 %v3556, 56
      %v3633 = vpop.permute.xlu0 %3632
      %3634 = vrot.lane.b32.xlu0 %v3557, 56
      %v3635 = vpop.permute.xlu0 %3634
      %3636 = vrot.lane.b32.xlu0 %v3558, 56
      %v3637 = vpop.permute.xlu0 %3636
      %3638 = vrot.lane.b32.xlu0 %v3559, 56
      %v3639 = vpop.permute.xlu0 %3638
      %3640 = vrot.lane.b32.xlu0 %v3560, 56
      %v3641 = vpop.permute.xlu0 %3640
      %3642 = vrot.lane.b32.xlu0 %v3561, 56
      %v3643 = vpop.permute.xlu0 %3642
      %3644 = vrot.lane.b32.xlu0 %v3562, 56
      %v3645 = vpop.permute.xlu0 %3644
      %3646 = vrot.lane.b32.xlu0 %v3563, 56
      %v3647 = vpop.permute.xlu0 %3646
      %3648 = vrot.lane.b32.xlu0 %v3564, 56
      %v3649 = vpop.permute.xlu0 %3648
      %3650 = vrot.lane.b32.xlu0 %v3565, 56
      %v3651 = vpop.permute.xlu0 %3650
      %3652 = vrot.lane.b32.xlu0 %v3566, 56
      %v3653 = vpop.permute.xlu0 %3652
      %3654 = vrot.lane.b32.xlu0 %v3567, 56
      %v3655 = vpop.permute.xlu0 %3654
      %3656 = vrot.lane.b32.xlu0 %v3568, 56
      %v3657 = vpop.permute.xlu0 %3656
      %3658 = vrot.lane.b32.xlu0 %v3569, 56
      %v3659 = vpop.permute.xlu0 %3658
      %3660 = vrot.lane.b32.xlu0 %v3570, 56
      %v3661 = vpop.permute.xlu0 %3660
      %3662 = vrot.lane.b32.xlu0 %v3571, 56
      %v3663 = vpop.permute.xlu0 %3662
      %3664 = vrot.lane.b32.xlu0 %v3572, 56
      %v3665 = vpop.permute.xlu0 %3664
      %3666 = vrot.lane.b32.xlu0 %v3573, 56
      %v3667 = vpop.permute.xlu0 %3666
      %3668 = vrot.lane.b32.xlu0 %v3574, 56
      %v3669 = vpop.permute.xlu0 %3668
      %3670 = vrot.lane.b32.xlu0 %v3575, 56
      %v3671 = vpop.permute.xlu0 %3670
      %vm3704 = vcmask 523712
      %3705 = vst.msk [vmem:[#allocation4] sm:$0xff] %vm3704, %v3609
      %3706 = vst.msk [vmem:[#allocation4 + $0x8] sm:$0xff] %vm3704, %v3611
      %3707 = vst.msk [vmem:[#allocation4 + $0x10] sm:$0xff] %vm3704, %v3613
      %3708 = vst.msk [vmem:[#allocation4 + $0x18] sm:$0xff] %vm3704, %v3615
      %3709 = vst.msk [vmem:[#allocation4 + $0x20] sm:$0xff] %vm3704, %v3617
      %3710 = vst.msk [vmem:[#allocation4 + $0x28] sm:$0xff] %vm3704, %v3619
      %3711 = vst.msk [vmem:[#allocation4 + $0x30] sm:$0xff] %vm3704, %v3621
      %3712 = vst.msk [vmem:[#allocation4 + $0x38] sm:$0xff] %vm3704, %v3623
      %3713 = vst.msk [vmem:[#allocation4 + $0x40] sm:$0xff] %vm3704, %v3625
      %3714 = vst.msk [vmem:[#allocation4 + $0x48] sm:$0xff] %vm3704, %v3627
      %3715 = vst.msk [vmem:[#allocation4 + $0x50] sm:$0xff] %vm3704, %v3629
      %3716 = vst.msk [vmem:[#allocation4 + $0x58] sm:$0xff] %vm3704, %v3631
      %3717 = vst.msk [vmem:[#allocation4 + $0x60] sm:$0xff] %vm3704, %v3633
      %3718 = vst.msk [vmem:[#allocation4 + $0x68] sm:$0xff] %vm3704, %v3635
      %3719 = vst.msk [vmem:[#allocation4 + $0x70] sm:$0xff] %vm3704, %v3637
      %3720 = vst.msk [vmem:[#allocation4 + $0x78] sm:$0xff] %vm3704, %v3639
      %3721 = vst.msk [vmem:[#allocation4 + $0x80] sm:$0xff] %vm3704, %v3641
      %3722 = vst.msk [vmem:[#allocation4 + $0x88] sm:$0xff] %vm3704, %v3643
      %3723 = vst.msk [vmem:[#allocation4 + $0x90] sm:$0xff] %vm3704, %v3645
      %3724 = vst.msk [vmem:[#allocation4 + $0x98] sm:$0xff] %vm3704, %v3647
      %3725 = vst.msk [vmem:[#allocation4 + $0xa0] sm:$0xff] %vm3704, %v3649
      %3726 = vst.msk [vmem:[#allocation4 + $0xa8] sm:$0xff] %vm3704, %v3651
      %3727 = vst.msk [vmem:[#allocation4 + $0xb0] sm:$0xff] %vm3704, %v3653
      %3728 = vst.msk [vmem:[#allocation4 + $0xb8] sm:$0xff] %vm3704, %v3655
      %3729 = vst.msk [vmem:[#allocation4 + $0xc0] sm:$0xff] %vm3704, %v3657
      %3730 = vst.msk [vmem:[#allocation4 + $0xc8] sm:$0xff] %vm3704, %v3659
      %3731 = vst.msk [vmem:[#allocation4 + $0xd0] sm:$0xff] %vm3704, %v3661
      %3732 = vst.msk [vmem:[#allocation4 + $0xd8] sm:$0xff] %vm3704, %v3663
      %3733 = vst.msk [vmem:[#allocation4 + $0xe0] sm:$0xff] %vm3704, %v3665
      %3734 = vst.msk [vmem:[#allocation4 + $0xe8] sm:$0xff] %vm3704, %v3667
      %3735 = vst.msk [vmem:[#allocation4 + $0xf0] sm:$0xff] %vm3704, %v3669
      %3736 = vst.msk [vmem:[#allocation4 + $0xf8] sm:$0xff] %vm3704, %v3671
      %v3737 = vld [vmem:[%s3350 + $0x9] sm:$0xff]
      %v3738 = vld [vmem:[%s3350 + $0x11] sm:$0xff]
      %v3739 = vld [vmem:[%s3350 + $0x29] sm:$0xff]
      %v3740 = vld [vmem:[%s3350 + $0x31] sm:$0xff]
      %v3741 = vld [vmem:[%s3350 + $0x49] sm:$0xff]
      %v3742 = vld [vmem:[%s3350 + $0x51] sm:$0xff]
      %v3743 = vld [vmem:[%s3350 + $0x69] sm:$0xff]
      %v3744 = vld [vmem:[%s3350 + $0x71] sm:$0xff]
      %v3745 = vld [vmem:[%s3350 + $0x89] sm:$0xff]
      %v3746 = vld [vmem:[%s3350 + $0x91] sm:$0xff]
      %v3747 = vld [vmem:[%s3350 + $0xa9] sm:$0xff]
      %v3748 = vld [vmem:[%s3350 + $0xb1] sm:$0xff]
      %v3749 = vld [vmem:[%s3350 + $0xc9] sm:$0xff]
      %v3750 = vld [vmem:[%s3350 + $0xd1] sm:$0xff]
      %v3751 = vld [vmem:[%s3350 + $0xe9] sm:$0xff]
      %v3752 = vld [vmem:[%s3350 + $0xf1] sm:$0xff]
      %v3753 = vld [vmem:[%s3350 + $0x109] sm:$0xff]
      %v3754 = vld [vmem:[%s3350 + $0x111] sm:$0xff]
      %v3755 = vld [vmem:[%s3350 + $0x129] sm:$0xff]
      %v3756 = vld [vmem:[%s3350 + $0x131] sm:$0xff]
      %v3757 = vld [vmem:[%s3350 + $0x149] sm:$0xff]
      %v3758 = vld [vmem:[%s3350 + $0x151] sm:$0xff]
      %v3759 = vld [vmem:[%s3350 + $0x169] sm:$0xff]
      %v3760 = vld [vmem:[%s3350 + $0x171] sm:$0xff]
      %v3761 = vld [vmem:[%s3350 + $0x189] sm:$0xff]
      %v3762 = vld [vmem:[%s3350 + $0x191] sm:$0xff]
      %v3763 = vld [vmem:[%s3350 + $0x1a9] sm:$0xff]
      %v3764 = vld [vmem:[%s3350 + $0x1b1] sm:$0xff]
      %v3765 = vld [vmem:[%s3350 + $0x1c9] sm:$0xff]
      %v3766 = vld [vmem:[%s3350 + $0x1d1] sm:$0xff]
      %v3767 = vld [vmem:[%s3350 + $0x1e9] sm:$0xff]
      %v3768 = vld [vmem:[%s3350 + $0x1f1] sm:$0xff]
      %3801 = vrot.lane.b32.xlu0 %v3737, 64
      %v3802 = vpop.permute.xlu0 %3801
      %3803 = vrot.lane.b32.xlu0 %v3738, 64
      %v3804 = vpop.permute.xlu0 %3803
      %3805 = vrot.lane.b32.xlu0 %v3739, 64
      %v3806 = vpop.permute.xlu0 %3805
      %3807 = vrot.lane.b32.xlu0 %v3740, 64
      %v3808 = vpop.permute.xlu0 %3807
      %3809 = vrot.lane.b32.xlu0 %v3741, 64
      %v3810 = vpop.permute.xlu0 %3809
      %3811 = vrot.lane.b32.xlu0 %v3742, 64
      %v3812 = vpop.permute.xlu0 %3811
      %3813 = vrot.lane.b32.xlu0 %v3743, 64
      %v3814 = vpop.permute.xlu0 %3813
      %3815 = vrot.lane.b32.xlu0 %v3744, 64
      %v3816 = vpop.permute.xlu0 %3815
      %3817 = vrot.lane.b32.xlu0 %v3745, 64
      %v3818 = vpop.permute.xlu0 %3817
      %3819 = vrot.lane.b32.xlu0 %v3746, 64
      %v3820 = vpop.permute.xlu0 %3819
      %3821 = vrot.lane.b32.xlu0 %v3747, 64
      %v3822 = vpop.permute.xlu0 %3821
      %3823 = vrot.lane.b32.xlu0 %v3748, 64
      %v3824 = vpop.permute.xlu0 %3823
      %3825 = vrot.lane.b32.xlu0 %v3749, 64
      %v3826 = vpop.permute.xlu0 %3825
      %3827 = vrot.lane.b32.xlu0 %v3750, 64
      %v3828 = vpop.permute.xlu0 %3827
      %3829 = vrot.lane.b32.xlu0 %v3751, 64
      %v3830 = vpop.permute.xlu0 %3829
      %3831 = vrot.lane.b32.xlu0 %v3752, 64
      %v3832 = vpop.permute.xlu0 %3831
      %3833 = vrot.lane.b32.xlu0 %v3753, 64
      %v3834 = vpop.permute.xlu0 %3833
      %3835 = vrot.lane.b32.xlu0 %v3754, 64
      %v3836 = vpop.permute.xlu0 %3835
      %3837 = vrot.lane.b32.xlu0 %v3755, 64
      %v3838 = vpop.permute.xlu0 %3837
      %3839 = vrot.lane.b32.xlu0 %v3756, 64
      %v3840 = vpop.permute.xlu0 %3839
      %3841 = vrot.lane.b32.xlu0 %v3757, 64
      %v3842 = vpop.permute.xlu0 %3841
      %3843 = vrot.lane.b32.xlu0 %v3758, 64
      %v3844 = vpop.permute.xlu0 %3843
      %3845 = vrot.lane.b32.xlu0 %v3759, 64
      %v3846 = vpop.permute.xlu0 %3845
      %3847 = vrot.lane.b32.xlu0 %v3760, 64
      %v3848 = vpop.permute.xlu0 %3847
      %3849 = vrot.lane.b32.xlu0 %v3761, 64
      %v3850 = vpop.permute.xlu0 %3849
      %3851 = vrot.lane.b32.xlu0 %v3762, 64
      %v3852 = vpop.permute.xlu0 %3851
      %3853 = vrot.lane.b32.xlu0 %v3763, 64
      %v3854 = vpop.permute.xlu0 %3853
      %3855 = vrot.lane.b32.xlu0 %v3764, 64
      %v3856 = vpop.permute.xlu0 %3855
      %3857 = vrot.lane.b32.xlu0 %v3765, 64
      %v3858 = vpop.permute.xlu0 %3857
      %3859 = vrot.lane.b32.xlu0 %v3766, 64
      %v3860 = vpop.permute.xlu0 %3859
      %3861 = vrot.lane.b32.xlu0 %v3767, 64
      %v3862 = vpop.permute.xlu0 %3861
      %3863 = vrot.lane.b32.xlu0 %v3768, 64
      %v3864 = vpop.permute.xlu0 %3863
      %vm3897 = vcmask 589312
      %3898 = vst.msk [vmem:[#allocation4] sm:$0xff] %vm3897, %v3802
      %3899 = vst.msk [vmem:[#allocation4 + $0x8] sm:$0xff] %vm3897, %v3804
      %3900 = vst.msk [vmem:[#allocation4 + $0x10] sm:$0xff] %vm3897, %v3806
      %3901 = vst.msk [vmem:[#allocation4 + $0x18] sm:$0xff] %vm3897, %v3808
      %3902 = vst.msk [vmem:[#allocation4 + $0x20] sm:$0xff] %vm3897, %v3810
      %3903 = vst.msk [vmem:[#allocation4 + $0x28] sm:$0xff] %vm3897, %v3812
      %3904 = vst.msk [vmem:[#allocation4 + $0x30] sm:$0xff] %vm3897, %v3814
      %3905 = vst.msk [vmem:[#allocation4 + $0x38] sm:$0xff] %vm3897, %v3816
      %3906 = vst.msk [vmem:[#allocation4 + $0x40] sm:$0xff] %vm3897, %v3818
      %3907 = vst.msk [vmem:[#allocation4 + $0x48] sm:$0xff] %vm3897, %v3820
      %3908 = vst.msk [vmem:[#allocation4 + $0x50] sm:$0xff] %vm3897, %v3822
      %3909 = vst.msk [vmem:[#allocation4 + $0x58] sm:$0xff] %vm3897, %v3824
      %3910 = vst.msk [vmem:[#allocation4 + $0x60] sm:$0xff] %vm3897, %v3826
      %3911 = vst.msk [vmem:[#allocation4 + $0x68] sm:$0xff] %vm3897, %v3828
      %3912 = vst.msk [vmem:[#allocation4 + $0x70] sm:$0xff] %vm3897, %v3830
      %3913 = vst.msk [vmem:[#allocation4 + $0x78] sm:$0xff] %vm3897, %v3832
      %3914 = vst.msk [vmem:[#allocation4 + $0x80] sm:$0xff] %vm3897, %v3834
      %3915 = vst.msk [vmem:[#allocation4 + $0x88] sm:$0xff] %vm3897, %v3836
      %3916 = vst.msk [vmem:[#allocation4 + $0x90] sm:$0xff] %vm3897, %v3838
      %3917 = vst.msk [vmem:[#allocation4 + $0x98] sm:$0xff] %vm3897, %v3840
      %3918 = vst.msk [vmem:[#allocation4 + $0xa0] sm:$0xff] %vm3897, %v3842
      %3919 = vst.msk [vmem:[#allocation4 + $0xa8] sm:$0xff] %vm3897, %v3844
      %3920 = vst.msk [vmem:[#allocation4 + $0xb0] sm:$0xff] %vm3897, %v3846
      %3921 = vst.msk [vmem:[#allocation4 + $0xb8] sm:$0xff] %vm3897, %v3848
      %3922 = vst.msk [vmem:[#allocation4 + $0xc0] sm:$0xff] %vm3897, %v3850
      %3923 = vst.msk [vmem:[#allocation4 + $0xc8] sm:$0xff] %vm3897, %v3852
      %3924 = vst.msk [vmem:[#allocation4 + $0xd0] sm:$0xff] %vm3897, %v3854
      %3925 = vst.msk [vmem:[#allocation4 + $0xd8] sm:$0xff] %vm3897, %v3856
      %3926 = vst.msk [vmem:[#allocation4 + $0xe0] sm:$0xff] %vm3897, %v3858
      %3927 = vst.msk [vmem:[#allocation4 + $0xe8] sm:$0xff] %vm3897, %v3860
      %3928 = vst.msk [vmem:[#allocation4 + $0xf0] sm:$0xff] %vm3897, %v3862
      %3929 = vst.msk [vmem:[#allocation4 + $0xf8] sm:$0xff] %vm3897, %v3864
      %v3930 = vld [vmem:[#allocation4] sm:$0xff]
      %v3931 = vld [vmem:[#allocation4 + $0x8] sm:$0xff]
      %v3932 = vld [vmem:[#allocation4 + $0x10] sm:$0xff]
      %v3933 = vld [vmem:[#allocation4 + $0x18] sm:$0xff]
      %v3934 = vld [vmem:[#allocation4 + $0x20] sm:$0xff]
      %v3935 = vld [vmem:[#allocation4 + $0x28] sm:$0xff]
      %v3936 = vld [vmem:[#allocation4 + $0x30] sm:$0xff]
      %v3937 = vld [vmem:[#allocation4 + $0x38] sm:$0xff]
      %v3938 = vld [vmem:[#allocation4 + $0x40] sm:$0xff]
      %v3939 = vld [vmem:[#allocation4 + $0x48] sm:$0xff]
      %v3940 = vld [vmem:[#allocation4 + $0x50] sm:$0xff]
      %v3941 = vld [vmem:[#allocation4 + $0x58] sm:$0xff]
      %v3942 = vld [vmem:[#allocation4 + $0x60] sm:$0xff]
      %v3943 = vld [vmem:[#allocation4 + $0x68] sm:$0xff]
      %v3944 = vld [vmem:[#allocation4 + $0x70] sm:$0xff]
      %v3945 = vld [vmem:[#allocation4 + $0x78] sm:$0xff]
      %v3946 = vld [vmem:[#allocation4 + $0x80] sm:$0xff]
      %v3947 = vld [vmem:[#allocation4 + $0x88] sm:$0xff]
      %v3948 = vld [vmem:[#allocation4 + $0x90] sm:$0xff]
      %v3949 = vld [vmem:[#allocation4 + $0x98] sm:$0xff]
      %v3950 = vld [vmem:[#allocation4 + $0xa0] sm:$0xff]
      %v3951 = vld [vmem:[#allocation4 + $0xa8] sm:$0xff]
      %v3952 = vld [vmem:[#allocation4 + $0xb0] sm:$0xff]
      %v3953 = vld [vmem:[#allocation4 + $0xb8] sm:$0xff]
      %v3954 = vld [vmem:[#allocation4 + $0xc0] sm:$0xff]
      %v3955 = vld [vmem:[#allocation4 + $0xc8] sm:$0xff]
      %v3956 = vld [vmem:[#allocation4 + $0xd0] sm:$0xff]
      %v3957 = vld [vmem:[#allocation4 + $0xd8] sm:$0xff]
      %v3958 = vld [vmem:[#allocation4 + $0xe0] sm:$0xff]
      %v3959 = vld [vmem:[#allocation4 + $0xe8] sm:$0xff]
      %v3960 = vld [vmem:[#allocation4 + $0xf0] sm:$0xff]
      %v3961 = vld [vmem:[#allocation4 + $0xf8] sm:$0xff]
      %v3962 = vld [vmem:[%s3] sm:$0xff]
      %v3963 = vld [vmem:[%s3 + $0x8] sm:$0xff]
      %v3964 = vld [vmem:[%s3 + $0x10] sm:$0xff]
      %v3965 = vld [vmem:[%s3 + $0x18] sm:$0xff]
      %v3966 = vld [vmem:[%s3 + $0x20] sm:$0xff]
      %v3967 = vld [vmem:[%s3 + $0x28] sm:$0xff]
      %v3968 = vld [vmem:[%s3 + $0x30] sm:$0xff]
      %v3969 = vld [vmem:[%s3 + $0x38] sm:$0xff]
      %v3970 = vld [vmem:[%s3 + $0x40] sm:$0xff]
      %v3971 = vld [vmem:[%s4] sm:$0x1]
      %v3973 = vlaneseq
      %v3974 = vshrl.u32 %v3973, 7
      %v3975 = vsub.s32 0, %v3974
      %v3976 = vrot.slane %v3971, %v3975
      %vm3978 = vcmask 588800
      %v3980 = vsel %vm3978, %v3930, 0
      %v3983 = vsel %vm3978, %v3931, 0
      %v3986 = vsel %vm3978, %v3932, 0
      %v3989 = vsel %vm3978, %v3933, 0
      %v3992 = vsel %vm3978, %v3934, 0
      %v3995 = vsel %vm3978, %v3935, 0
      %v3998 = vsel %vm3978, %v3936, 0
      %v4001 = vsel %vm3978, %v3937, 0
      %v4004 = vsel %vm3978, %v3938, 0
      %v4007 = vsel %vm3978, %v3939, 0
      %v4010 = vsel %vm3978, %v3940, 0
      %v4013 = vsel %vm3978, %v3941, 0
      %v4016 = vsel %vm3978, %v3942, 0
      %v4019 = vsel %vm3978, %v3943, 0
      %v4022 = vsel %vm3978, %v3944, 0
      %v4025 = vsel %vm3978, %v3945, 0
      %v4028 = vsel %vm3978, %v3946, 0
      %v4031 = vsel %vm3978, %v3947, 0
      %v4034 = vsel %vm3978, %v3948, 0
      %v4037 = vsel %vm3978, %v3949, 0
      %v4040 = vsel %vm3978, %v3950, 0
      %v4043 = vsel %vm3978, %v3951, 0
      %v4046 = vsel %vm3978, %v3952, 0
      %v4049 = vsel %vm3978, %v3953, 0
      %v4052 = vsel %vm3978, %v3954, 0
      %v4055 = vsel %vm3978, %v3955, 0
      %v4058 = vsel %vm3978, %v3956, 0
      %v4061 = vsel %vm3978, %v3957, 0
      %v4064 = vsel %vm3978, %v3958, 0
      %v4067 = vsel %vm3978, %v3959, 0
      %v4070 = vsel %vm3978, %v3960, 0
      %v4073 = vsel %vm3978, %v3961, 0
      %4075 = vmatprep.subr.mxu0 0.0
      %4076 = vmatpush1.msra.mxu0 0.0
      %4077 = vmatprep.subr.mxu0 0.0
      %4078 = vmatpush1.msra.mxu0 0.0
      %4079 = vmatprep.subr.mxu0 0.0
      %4080 = vmatpush1.msra.mxu0 0.0
      %4081 = vmatprep.subr.mxu0 0.0
      %4082 = vmatpush1.msra.mxu0 0.0
      %4083 = vmatprep.subr.mxu0 0.0
      %4084 = vmatpush1.msra.mxu0 0.0
      %4085 = vmatprep.subr.mxu0 0.0
      %4086 = vmatpush1.msra.mxu0 0.0
      %4087 = vmatprep.subr.mxu0 0.0
      %4088 = vmatpush1.msra.mxu0 0.0
      %4089 = vmatprep.subr.mxu0 0.0
      %4090 = vmatpush1.msra.mxu0 %v3970
      %4091 = vmatprep.subr.mxu0 0.0
      %4092 = vmatpush1.msra.mxu0 %v3969
      %4093 = vmatprep.subr.mxu0 0.0
      %4094 = vmatpush1.msra.mxu0 %v3968
      %4095 = vmatprep.subr.mxu0 0.0
      %4096 = vmatpush1.msra.mxu0 %v3967
      %4097 = vmatprep.subr.mxu0 0.0
      %4098 = vmatpush1.msra.mxu0 %v3966
      %4099 = vmatprep.subr.mxu0 0.0
      %4100 = vmatpush1.msra.mxu0 %v3965
      %4101 = vmatprep.subr.mxu0 0.0
      %4102 = vmatpush1.msra.mxu0 %v3964
      %4103 = vmatprep.subr.mxu0 0.0
      %4104 = vmatpush1.msra.mxu0 %v3963
      %4105 = vmatprep.subr.mxu0 0.0
      %4106 = vmatpush1.msra.mxu0 %v3962
      %4107 = vmatprep.subr.mxu0 0.0
      %4108 = vmatpush2.msra.mxu0 0.0
      %4109 = vmatprep.subr.mxu0 0.0
      %4110 = vmatpush2.msra.mxu0 0.0
      %4111 = vmatprep.subr.mxu0 0.0
      %4112 = vmatpush2.msra.mxu0 0.0
      %4113 = vmatprep.subr.mxu0 0.0
      %4114 = vmatpush2.msra.mxu0 0.0
      %4115 = vmatprep.subr.mxu0 0.0
      %4116 = vmatpush2.msra.mxu0 0.0
      %4117 = vmatprep.subr.mxu0 0.0
      %4118 = vmatpush2.msra.mxu0 0.0
      %4119 = vmatprep.subr.mxu0 0.0
      %4120 = vmatpush2.msra.mxu0 0.0
      %4121 = vmatprep.subr.mxu0 0.0
      %4122 = vmatpush2.msra.mxu0 0.0
      %4123 = vmatprep.subr.mxu0 0.0
      %4124 = vmatpush2.msra.mxu0 0.0
      %4125 = vmatprep.subr.mxu0 0.0
      %4126 = vmatpush2.msra.mxu0 0.0
      %4127 = vmatprep.subr.mxu0 0.0
      %4128 = vmatpush2.msra.mxu0 0.0
      %4129 = vmatprep.subr.mxu0 0.0
      %4130 = vmatpush2.msra.mxu0 0.0
      %4131 = vmatprep.subr.mxu0 0.0
      %4132 = vmatpush2.msra.mxu0 0.0
      %4133 = vmatprep.subr.mxu0 0.0
      %4134 = vmatpush2.msra.mxu0 0.0
      %4135 = vmatprep.subr.mxu0 0.0
      %4136 = vmatpush2.msra.mxu0 0.0
      %4137 = vmatprep.subr.mxu0 0.0
      %4138 = vmatpush2.msra.mxu0 0.0
      %4139 = vmatprep.mubr.f32.mxu0 0.0
      %4140 = vmatmul.mubr.f32.gmra.mxu0 %v3980
      %v4141 = vpop.f32.mrf.mxu0
      %v4142 = vadd.f32 %v3976, %v4141
      %v4143 = vpop.f32.mrf.mxu0
      %4144 = vmatprep.mubr.f32.mxu0 0.0
      %4145 = vmatmul.mubr.f32.gmra.mxu0 %v3983
      %v4146 = vpop.f32.mrf.mxu0
      %v4147 = vadd.f32 %v3976, %v4146
      %v4148 = vpop.f32.mrf.mxu0
      %4149 = vmatprep.mubr.f32.mxu0 0.0
      %4150 = vmatmul.mubr.f32.gmra.mxu0 %v3986
      %v4151 = vpop.f32.mrf.mxu0
      %v4152 = vadd.f32 %v3976, %v4151
      %v4153 = vpop.f32.mrf.mxu0
      %4154 = vmatprep.mubr.f32.mxu0 0.0
      %4155 = vmatmul.mubr.f32.gmra.mxu0 %v3989
      %v4156 = vpop.f32.mrf.mxu0
      %v4157 = vadd.f32 %v3976, %v4156
      %v4158 = vpop.f32.mrf.mxu0
      %4159 = vmatprep.mubr.f32.mxu0 0.0
      %4160 = vmatmul.mubr.f32.gmra.mxu0 %v3992
      %v4161 = vpop.f32.mrf.mxu0
      %v4162 = vadd.f32 %v3976, %v4161
      %v4163 = vpop.f32.mrf.mxu0
      %4164 = vmatprep.mubr.f32.mxu0 0.0
      %4165 = vmatmul.mubr.f32.gmra.mxu0 %v3995
      %v4166 = vpop.f32.mrf.mxu0
      %v4167 = vadd.f32 %v3976, %v4166
      %v4168 = vpop.f32.mrf.mxu0
      %4169 = vmatprep.mubr.f32.mxu0 0.0
      %4170 = vmatmul.mubr.f32.gmra.mxu0 %v3998
      %v4171 = vpop.f32.mrf.mxu0
      %v4172 = vadd.f32 %v3976, %v4171
      %v4173 = vpop.f32.mrf.mxu0
      %4174 = vmatprep.mubr.f32.mxu0 0.0
      %4175 = vmatmul.mubr.f32.gmra.mxu0 %v4001
      %v4176 = vpop.f32.mrf.mxu0
      %v4177 = vadd.f32 %v3976, %v4176
      %v4178 = vpop.f32.mrf.mxu0
      %4179 = vmatprep.mubr.f32.mxu0 0.0
      %4180 = vmatmul.mubr.f32.gmra.mxu0 %v4004
      %v4181 = vpop.f32.mrf.mxu0
      %v4182 = vadd.f32 %v3976, %v4181
      %v4183 = vpop.f32.mrf.mxu0
      %4184 = vmatprep.mubr.f32.mxu0 0.0
      %4185 = vmatmul.mubr.f32.gmra.mxu0 %v4007
      %v4186 = vpop.f32.mrf.mxu0
      %v4187 = vadd.f32 %v3976, %v4186
      %v4188 = vpop.f32.mrf.mxu0
      %4189 = vmatprep.mubr.f32.mxu0 0.0
      %4190 = vmatmul.mubr.f32.gmra.mxu0 %v4010
      %v4191 = vpop.f32.mrf.mxu0
      %v4192 = vadd.f32 %v3976, %v4191
      %v4193 = vpop.f32.mrf.mxu0
      %4194 = vmatprep.mubr.f32.mxu0 0.0
      %4195 = vmatmul.mubr.f32.gmra.mxu0 %v4013
      %v4196 = vpop.f32.mrf.mxu0
      %v4197 = vadd.f32 %v3976, %v4196
      %v4198 = vpop.f32.mrf.mxu0
      %4199 = vmatprep.mubr.f32.mxu0 0.0
      %4200 = vmatmul.mubr.f32.gmra.mxu0 %v4016
      %v4201 = vpop.f32.mrf.mxu0
      %v4202 = vadd.f32 %v3976, %v4201
      %v4203 = vpop.f32.mrf.mxu0
      %4204 = vmatprep.mubr.f32.mxu0 0.0
      %4205 = vmatmul.mubr.f32.gmra.mxu0 %v4019
      %v4206 = vpop.f32.mrf.mxu0
      %v4207 = vadd.f32 %v3976, %v4206
      %v4208 = vpop.f32.mrf.mxu0
      %4209 = vmatprep.mubr.f32.mxu0 0.0
      %4210 = vmatmul.mubr.f32.gmra.mxu0 %v4022
      %v4211 = vpop.f32.mrf.mxu0
      %v4212 = vadd.f32 %v3976, %v4211
      %v4213 = vpop.f32.mrf.mxu0
      %4214 = vmatprep.mubr.f32.mxu0 0.0
      %4215 = vmatmul.mubr.f32.gmra.mxu0 %v4025
      %v4216 = vpop.f32.mrf.mxu0
      %v4217 = vadd.f32 %v3976, %v4216
      %v4218 = vpop.f32.mrf.mxu0
      %4219 = vmatprep.mubr.f32.mxu0 0.0
      %4220 = vmatmul.mubr.f32.gmra.mxu0 %v4028
      %v4221 = vpop.f32.mrf.mxu0
      %v4222 = vadd.f32 %v3976, %v4221
      %v4223 = vpop.f32.mrf.mxu0
      %4224 = vmatprep.mubr.f32.mxu0 0.0
      %4225 = vmatmul.mubr.f32.gmra.mxu0 %v4031
      %v4226 = vpop.f32.mrf.mxu0
      %v4227 = vadd.f32 %v3976, %v4226
      %v4228 = vpop.f32.mrf.mxu0
      %4229 = vmatprep.mubr.f32.mxu0 0.0
      %4230 = vmatmul.mubr.f32.gmra.mxu0 %v4034
      %v4231 = vpop.f32.mrf.mxu0
      %v4232 = vadd.f32 %v3976, %v4231
      %v4233 = vpop.f32.mrf.mxu0
      %4234 = vmatprep.mubr.f32.mxu0 0.0
      %4235 = vmatmul.mubr.f32.gmra.mxu0 %v4037
      %v4236 = vpop.f32.mrf.mxu0
      %v4237 = vadd.f32 %v3976, %v4236
      %v4238 = vpop.f32.mrf.mxu0
      %4239 = vmatprep.mubr.f32.mxu0 0.0
      %4240 = vmatmul.mubr.f32.gmra.mxu0 %v4040
      %v4241 = vpop.f32.mrf.mxu0
      %v4242 = vadd.f32 %v3976, %v4241
      %v4243 = vpop.f32.mrf.mxu0
      %4244 = vmatprep.mubr.f32.mxu0 0.0
      %4245 = vmatmul.mubr.f32.gmra.mxu0 %v4043
      %v4246 = vpop.f32.mrf.mxu0
      %v4247 = vadd.f32 %v3976, %v4246
      %v4248 = vpop.f32.mrf.mxu0
      %4249 = vmatprep.mubr.f32.mxu0 0.0
      %4250 = vmatmul.mubr.f32.gmra.mxu0 %v4046
      %v4251 = vpop.f32.mrf.mxu0
      %v4252 = vadd.f32 %v3976, %v4251
      %v4253 = vpop.f32.mrf.mxu0
      %4254 = vmatprep.mubr.f32.mxu0 0.0
      %4255 = vmatmul.mubr.f32.gmra.mxu0 %v4049
      %v4256 = vpop.f32.mrf.mxu0
      %v4257 = vadd.f32 %v3976, %v4256
      %v4258 = vpop.f32.mrf.mxu0
      %4259 = vmatprep.mubr.f32.mxu0 0.0
      %4260 = vmatmul.mubr.f32.gmra.mxu0 %v4052
      %v4261 = vpop.f32.mrf.mxu0
      %v4262 = vadd.f32 %v3976, %v4261
      %v4263 = vpop.f32.mrf.mxu0
      %4264 = vmatprep.mubr.f32.mxu0 0.0
      %4265 = vmatmul.mubr.f32.gmra.mxu0 %v4055
      %v4266 = vpop.f32.mrf.mxu0
      %v4267 = vadd.f32 %v3976, %v4266
      %v4268 = vpop.f32.mrf.mxu0
      %4269 = vmatprep.mubr.f32.mxu0 0.0
      %4270 = vmatmul.mubr.f32.gmra.mxu0 %v4058
      %v4271 = vpop.f32.mrf.mxu0
      %v4272 = vadd.f32 %v3976, %v4271
      %v4273 = vpop.f32.mrf.mxu0
      %4274 = vmatprep.mubr.f32.mxu0 0.0
      %4275 = vmatmul.mubr.f32.gmra.mxu0 %v4061
      %v4276 = vpop.f32.mrf.mxu0
      %v4277 = vadd.f32 %v3976, %v4276
      %v4278 = vpop.f32.mrf.mxu0
      %4279 = vmatprep.mubr.f32.mxu0 0.0
      %4280 = vmatmul.mubr.f32.gmra.mxu0 %v4064
      %v4281 = vpop.f32.mrf.mxu0
      %v4282 = vadd.f32 %v3976, %v4281
      %v4283 = vpop.f32.mrf.mxu0
      %4284 = vmatprep.mubr.f32.mxu0 0.0
      %4285 = vmatmul.mubr.f32.gmra.mxu0 %v4067
      %v4286 = vpop.f32.mrf.mxu0
      %v4287 = vadd.f32 %v3976, %v4286
      %v4288 = vpop.f32.mrf.mxu0
      %4289 = vmatprep.mubr.f32.mxu0 0.0
      %4290 = vmatmul.mubr.f32.gmra.mxu0 %v4070
      %v4291 = vpop.f32.mrf.mxu0
      %v4292 = vadd.f32 %v3976, %v4291
      %v4293 = vpop.f32.mrf.mxu0
      %4294 = vmatprep.mubr.f32.mxu0 0.0
      %4295 = vmatmul.mubr.f32.gmra.mxu0 %v4073
      %v4296 = vpop.f32.mrf.mxu0
      %v4297 = vadd.f32 %v3976, %v4296
      %v4298 = vpop.f32.mrf.mxu0
      %4299 = vdwg.mxu0
      %4300 = vst.msk [vmem:[%s224] sm:$0xff] %vm2215, %v4142
      %4301 = vst.msk [vmem:[%s224 + $0x8] sm:$0xff] %vm2215, %v4147
      %4302 = vst.msk [vmem:[%s224 + $0x10] sm:$0xff] %vm2215, %v4152
      %4303 = vst.msk [vmem:[%s224 + $0x18] sm:$0xff] %vm2215, %v4157
      %4304 = vst.msk [vmem:[%s224 + $0x20] sm:$0xff] %vm2215, %v4162
      %4305 = vst.msk [vmem:[%s224 + $0x28] sm:$0xff] %vm2215, %v4167
      %4306 = vst.msk [vmem:[%s224 + $0x30] sm:$0xff] %vm2215, %v4172
      %4307 = vst.msk [vmem:[%s224 + $0x38] sm:$0xff] %vm2215, %v4177
      %4308 = vst.msk [vmem:[%s224 + $0x40] sm:$0xff] %vm2215, %v4182
      %4309 = vst.msk [vmem:[%s224 + $0x48] sm:$0xff] %vm2215, %v4187
      %4310 = vst.msk [vmem:[%s224 + $0x50] sm:$0xff] %vm2215, %v4192
      %4311 = vst.msk [vmem:[%s224 + $0x58] sm:$0xff] %vm2215, %v4197
      %4312 = vst.msk [vmem:[%s224 + $0x60] sm:$0xff] %vm2215, %v4202
      %4313 = vst.msk [vmem:[%s224 + $0x68] sm:$0xff] %vm2215, %v4207
      %4314 = vst.msk [vmem:[%s224 + $0x70] sm:$0xff] %vm2215, %v4212
      %4315 = vst.msk [vmem:[%s224 + $0x78] sm:$0xff] %vm2215, %v4217
      %4316 = vst.msk [vmem:[%s224 + $0x80] sm:$0xff] %vm2215, %v4222
      %4317 = vst.msk [vmem:[%s224 + $0x88] sm:$0xff] %vm2215, %v4227
      %4318 = vst.msk [vmem:[%s224 + $0x90] sm:$0xff] %vm2215, %v4232
      %4319 = vst.msk [vmem:[%s224 + $0x98] sm:$0xff] %vm2215, %v4237
      %4320 = vst.msk [vmem:[%s224 + $0xa0] sm:$0xff] %vm2215, %v4242
      %4321 = vst.msk [vmem:[%s224 + $0xa8] sm:$0xff] %vm2215, %v4247
      %4322 = vst.msk [vmem:[%s224 + $0xb0] sm:$0xff] %vm2215, %v4252
      %4323 = vst.msk [vmem:[%s224 + $0xb8] sm:$0xff] %vm2215, %v4257
      %4324 = vst.msk [vmem:[%s224 + $0xc0] sm:$0xff] %vm2215, %v4262
      %4325 = vst.msk [vmem:[%s224 + $0xc8] sm:$0xff] %vm2215, %v4267
      %4326 = vst.msk [vmem:[%s224 + $0xd0] sm:$0xff] %vm2215, %v4272
      %4327 = vst.msk [vmem:[%s224 + $0xd8] sm:$0xff] %vm2215, %v4277
      %4328 = vst.msk [vmem:[%s224 + $0xe0] sm:$0xff] %vm2215, %v4282
      %4329 = vst.msk [vmem:[%s224 + $0xe8] sm:$0xff] %vm2215, %v4287
      %4330 = vst.msk [vmem:[%s224 + $0xf0] sm:$0xff] %vm2215, %v4292
      %4331 = vst.msk [vmem:[%s224 + $0xf8] sm:$0xff] %vm2215, %v4297
      %p4332 = scmp.lt.s32.totalorder %s16, 1
      %s4333 = scalar_select %p4332, %s16, 1
      %s4334 = smul.addr %s4333, 32
      %s4335 = smul.addr %s4334, 8
      %s4336 = scalar_lea.vmem %s5, %s4335
      // Predicated region
      $region41: #{decoder_block_forward.3} parent=39 // pred_check
        %p4337 = pneg %p144
      $region42: #{decoder_block_forward.3} parent=39 // pred_check_branch
        %4339 = sbr.rel (%p4337) target = $region44
      $region43: #{decoder_block_forward.3} parent=39 // pred_region
        _
      $region44: #{decoder_block_forward.3} parent=39 // pred_fallthru
        _
    $region40: #{decoder_block_forward.3} parent=5 // pred_fallthru
      _
    %p4340 = scmp.le.s32.totalorder 2, %s11
    // Predicated region
    $region45: #{decoder_block_forward.3} parent=5 // pred_check
      %p4341 = pneg %p4340
    $region46: #{decoder_block_forward.3} parent=5 // pred_check_branch
      %4343 = sbr.rel (%p4341) target = $region48
    $region47: #{decoder_block_forward.3} parent=5 // pred_region
      %s4344 = ssub.s32 %s11, 2
      // Predicated region
      $region49: #{decoder_block_forward.3} parent=47 // pred_check
        %p4345 = pneg %p150
      $region50: #{decoder_block_forward.3} parent=47 // pred_check_branch
        %4347 = sbr.rel (%p4345) target = $region52
      $region51: #{decoder_block_forward.3} parent=47 // pred_region
        %p4348 = scmp.lt.s32.totalorder %s17, 1
        %s4349 = scalar_select %p4348, %s17, 1
        %s4350 = smul.addr %s4349, 32
        %s4351 = smul.addr %s4350, 8
        %s4352 = scalar_lea.vmem %s5, %s4351
      $region52: #{decoder_block_forward.3} parent=47 // pred_fallthru
        _
    $region48: #{decoder_block_forward.3} parent=5 // pred_fallthru
      _
  $region6: #{decoder_block_forward.3} parent=0 // loop_footer
    %s15 = sadd.s32 1, %s11
  $region7: #{decoder_block_forward.3} parent=0 // loop_footer_branch
    %10 = sbr.rel target = $region3
  $region8: #{decoder_block_forward.3} parent=0 // loop_exit
    _

</llo_original>
